<compile_context>
chip_gen: v7x
topology: tpu7x:2x2x1
jax: 0.10.0
libtpu: 0.0.40
codegen_flags: <defaults>
</compile_context>

<pallas_src>
import jax
import jax.numpy as jnp
from jax.experimental import pallas as pl
from jax.experimental.pallas import tpu as pltpu


def _bidir_lstm_chunk_kernel(gp_ref, whh_ref, y_ref, hN_ref, cN_ref,
                             h_scr, c_scr):
    """Recurrent part of one bidirectional LSTM layer.

    Grid: (direction, time_chunk).  Per grid point:
      gp_ref : (4*T_blk, B, H)  precomputed x@W_ih^T + b for this chunk,
                                rows ordered t*4 + gate (gate order i,f,g,o).
      whh_ref: (4, H, H)        per-gate W_hh^T for this direction.
      y_ref  : (T_blk, B, H)    per-direction hidden outputs for this chunk.
      hN_ref, cN_ref : (B, H)   final states (written only on the last chunk).
      h_scr, c_scr   : (B, H)   recurrent state, resident across chunks.
    """
    d = pl.program_id(0)                 # 0 = forward, 1 = backward
    c = pl.program_id(1)                 # time-chunk index (always ascending)
    n_chunks = pl.num_programs(1)
    T_blk = y_ref.shape[0]

    @pl.when(c == 0)
    def _():
        h_scr[...] = jnp.zeros_like(h_scr)
        c_scr[...] = jnp.zeros_like(c_scr)

    # Hoist loop-invariant weight loads out of the time loop.
    w_i = whh_ref[0]
    w_f = whh_ref[1]
    w_g = whh_ref[2]
    w_o = whh_ref[3]

    def step_fn(step, carry):
        h_prev, c_prev = carry
        # Forward walks the chunk front->back, backward walks it back->front.
        tt = d * (T_blk - 1) + (1 - 2 * d) * step
        gp_t = gp_ref[pl.ds(tt * 4, 4)]          # (4, B, H): i, f, g, o pre-acts
        i_g = jax.nn.sigmoid(
            gp_t[0] + jnp.dot(h_prev, w_i, preferred_element_type=jnp.float32))
        f_g = jax.nn.sigmoid(
            gp_t[1] + jnp.dot(h_prev, w_f, preferred_element_type=jnp.float32))
        g_g = jnp.tanh(
            gp_t[2] + jnp.dot(h_prev, w_g, preferred_element_type=jnp.float32))
        o_g = jax.nn.sigmoid(
            gp_t[3] + jnp.dot(h_prev, w_o, preferred_element_type=jnp.float32))
        c_new = f_g * c_prev + i_g * g_g
        h_new = o_g * jnp.tanh(c_new)
        y_ref[tt] = h_new.astype(y_ref.dtype)
        return h_new, c_new

    h_fin, c_fin = jax.lax.fori_loop(
        0, T_blk, step_fn, (h_scr[...], c_scr[...]), unroll=True)

    h_scr[...] = h_fin
    c_scr[...] = c_fin

    @pl.when(c == n_chunks - 1)
    def _():
        hN_ref[...] = h_fin.astype(hN_ref.dtype)
        cN_ref[...] = c_fin.astype(cN_ref.dtype)


def _pick_time_chunk(T, max_chunk=32):
    """Largest divisor of T that is <= max_chunk (keeps the time grid exact).

    TODO(synk): for prime T > max_chunk this degrades to per-step chunks;
                proper fix is padding + masked state updates.
    """
    best = 1
    for cand in range(2, min(T, max_chunk) + 1):
        if T % cand == 0:
            best = cand
    return best


def bidir_lstm_layer(x_tm, fwd_params, bwd_params, *, time_chunk=None):
    """One bidirectional LSTM layer; both directions in a single pallas_call.

    x_tm : (T, B, Din) time-major input.
    fwd_params / bwd_params : (w_ih (4H, Din), w_hh (4H, H), b (4H,))  with
                              b = bias_ih + bias_hh, PyTorch gate order i,f,g,o.
    Returns y (T, B, 2H), (h_fwd, h_bwd), (c_fwd, c_bwd) each (B, H).
    """
    T, B, Din = x_tm.shape
    H = fwd_params[1].shape[1]
    T_blk = time_chunk if time_chunk is not None else _pick_time_chunk(T)
    n_chunks = T // T_blk
    assert T_blk * n_chunks == T

    # Stack per-direction parameters; gate index on its own (non-lane) axis.
    w_ih_all = jnp.stack([fwd_params[0], bwd_params[0]]).reshape(2, 4, H, Din)
    w_hh_all = jnp.stack([fwd_params[1], bwd_params[1]]).reshape(2, 4, H, H)
    w_hh_all = jnp.swapaxes(w_hh_all, -1, -2)        # [d, g] = W_hh_g^T, (H, H)
    b_all = jnp.stack([fwd_params[2], bwd_params[2]]).reshape(2, 4, H)

    # Hoisted input projection: one big (T*B, Din) x (Din, 2*4*H) matmul for
    # both directions, done by XLA on the MXU (instead of T tiny matmuls
    # inside the recurrence).
    gp = jnp.einsum('tbd,zghd->ztgbh', x_tm, w_ih_all,
                    precision=jax.lax.Precision.HIGHEST)
    gp = gp + b_all[:, None, :, None, :]             # (2, T, 4, B, H)
    gp = gp.reshape(2, 4 * T, B, H)                  # rows = t*4 + gate

    def gp_index_map(d, c):
        # Chunk order is reversed for the backward direction.
        return (d, d * (n_chunks - 1) + (1 - 2 * d) * c, 0, 0)

    def y_index_map(d, c):
        return (d, d * (n_chunks - 1) + (1 - 2 * d) * c, 0, 0)

    y_all, hN, cN = pl.pallas_call(
        _bidir_lstm_chunk_kernel,
        out_shape=(
            jax.ShapeDtypeStruct((2, T, B, H), x_tm.dtype),
            jax.ShapeDtypeStruct((2, B, H), x_tm.dtype),
            jax.ShapeDtypeStruct((2, B, H), x_tm.dtype),
        ),
        grid=(2, n_chunks),
        in_specs=[
            pl.BlockSpec((None, 4 * T_blk, B, H), gp_index_map),
            pl.BlockSpec((None, 4, H, H), lambda d, c: (d, 0, 0, 0)),
        ],
        out_specs=(
            pl.BlockSpec((None, T_blk, B, H), y_index_map),
            pl.BlockSpec((None, B, H), lambda d, c: (d, 0, 0)),
            pl.BlockSpec((None, B, H), lambda d, c: (d, 0, 0)),
        ),
        scratch_shapes=[
            pltpu.VMEM((B, H), jnp.float32),
            pltpu.VMEM((B, H), jnp.float32),
        ],
        compiler_params=pltpu.CompilerParams(
            dimension_semantics=("parallel", "arbitrary")),
    )(gp, w_hh_all)

    y = jnp.concatenate([y_all[0], y_all[1]], axis=-1)   # (T, B, 2H)
    return y, (hN[0], hN[1]), (cN[0], cN[1])


def init_encoder_params(key, word_vec_dim, hidden_size, n_layers):
    """Deterministic init matching the nn.LSTM parameter shapes."""
    H = hidden_size // 2
    params = []
    k = 1.0 / jnp.sqrt(jnp.float32(H))
    for layer in range(n_layers):
        d_in = word_vec_dim if layer == 0 else 2 * H
        layer_dirs = []
        for _direction in range(2):
            key, k1, k2, k3, k4 = jax.random.split(key, 5)
            w_ih = jax.random.uniform(k1, (4 * H, d_in), jnp.float32, -k, k)
            w_hh = jax.random.uniform(k2, (4 * H, H), jnp.float32, -k, k)
            b_ih = jax.random.uniform(k3, (4 * H,), jnp.float32, -k, k)
            b_hh = jax.random.uniform(k4, (4 * H,), jnp.float32, -k, k)
            layer_dirs.append((w_ih, w_hh, b_ih + b_hh))
        params.append(tuple(layer_dirs))
    return params


def encoder_forward(emb, params, *, time_chunk=None):
    """emb: (B, T, word_vec_dim) batch_first, like the PyTorch module.

    Returns (y, (h_n, c_n)) with
      y   : (B, T, hidden_size)
      h_n : (n_layers * 2, B, hidden_size // 2)
      c_n : (n_layers * 2, B, hidden_size // 2)
    """
    x = jnp.transpose(emb, (1, 0, 2))          # time-major (T, B, D)
    h_list, c_list = [], []
    layer_in = x
    for fwd_p, bwd_p in params:
        y, (h_f, h_b), (c_f, c_b) = bidir_lstm_layer(
            layer_in, fwd_p, bwd_p, time_chunk=time_chunk)
        h_list += [h_f, h_b]
        c_list += [c_f, c_b]
        layer_in = y                            # (T, B, 2H)
    y_out = jnp.transpose(layer_in, (1, 0, 2))  # (B, T, 2H)
    return y_out, (jnp.stack(h_list, 0), jnp.stack(c_list, 0))


# ---------------- pure-JAX reference (for correctness check) ----------------

def _ref_dir(x_tm, w_ih, w_hh, b, reverse):
    T, B, _ = x_tm.shape
    H = w_hh.shape[1]
    xs = x_tm[::-1] if reverse else x_tm

    def step(carry, x_t):
        h, c = carry
        gates = (jnp.dot(x_t, w_ih.T, precision=jax.lax.Precision.HIGHEST)
                 + jnp.dot(h, w_hh.T, precision=jax.lax.Precision.HIGHEST) + b)
        i, f, g, o = jnp.split(gates, 4, axis=-1)
        i = jax.nn.sigmoid(i)
        f = jax.nn.sigmoid(f)
        g = jnp.tanh(g)
        o = jax.nn.sigmoid(o)
        c = f * c + i * g
        h = o * jnp.tanh(c)
        return (h, c), h

    init = (jnp.zeros((B, H), jnp.float32), jnp.zeros((B, H), jnp.float32))
    (hN, cN), ys = jax.lax.scan(step, init, xs)
    if reverse:
        ys = ys[::-1]
    return ys, hN, cN


def encoder_forward_ref(emb, params):
    x = jnp.transpose(emb, (1, 0, 2))
    h_list, c_list = [], []
    layer_in = x
    for layer_dirs in params:
        dir_outs = []
        for d, (w_ih, w_hh, b) in enumerate(layer_dirs):
            y_d, h_d, c_d = _ref_dir(layer_in, w_ih, w_hh, b, reverse=(d == 1))
            dir_outs.append(y_d)
            h_list.append(h_d)
            c_list.append(c_d)
        layer_in = jnp.concatenate(dir_outs, axis=-1)
    return (jnp.transpose(layer_in, (1, 0, 2)),
            (jnp.stack(h_list, 0), jnp.stack(c_list, 0)))


if __name__ == "__main__":
    # Small shapes consistent with the module's forward.
    B, T = 2, 8
    word_vec_dim = 16
    hidden_size = 32          # per-direction hidden = 16
    n_layers = 4

    key = jax.random.PRNGKey(0)
    k_emb, k_par = jax.random.split(key)
    emb = jax.random.normal(k_emb, (B, T, word_vec_dim), jnp.float32)
    params = init_encoder_params(k_par, word_vec_dim, hidden_size, n_layers)

    fwd = jax.jit(encoder_forward)
    y, (h_n, c_n) = fwd(emb, params)
    y = jax.block_until_ready(y)
    h_n = jax.block_until_ready(h_n)
    c_n = jax.block_until_ready(c_n)

    assert y.shape == (B, T, hidden_size)
    assert h_n.shape == (n_layers * 2, B, hidden_size // 2)
    assert c_n.shape == (n_layers * 2, B, hidden_size // 2)

    # Cross-check against a pure-JAX lax.scan reference.
    y_r, (h_r, c_r) = encoder_forward_ref(emb, params)
    assert jnp.allclose(y, y_r, atol=1e-4, rtol=1e-4)
    assert jnp.allclose(h_n, h_r, atol=1e-4, rtol=1e-4)
    assert jnp.allclose(c_n, c_r, atol=1e-4, rtol=1e-4)

    print("KERNEL_OK")
</pallas_src>

<mosaic_0001>
module attributes {stable_mosaic.version = 11 : i64} {
  func.func @_bidir_lstm_chunk_kernel(%arg0: i32, %arg1: i32, %arg2: memref<1x32x2x16xf32, #tpu.memory_space<vmem>>, %arg3: memref<1x4x16x16xf32, #tpu.memory_space<vmem>>, %arg4: memref<1x8x2x16xf32, #tpu.memory_space<vmem>>, %arg5: memref<1x2x16xf32, #tpu.memory_space<vmem>>, %arg6: memref<1x2x16xf32, #tpu.memory_space<vmem>>, %arg7: memref<2x16xf32, #tpu.memory_space<vmem>>, %arg8: memref<2x16xf32, #tpu.memory_space<vmem>>) attributes {dimension_semantics = [#tpu.dimension_semantics<parallel>, #tpu.dimension_semantics<arbitrary>], iteration_bounds = array<i64: 2, 1>, scalar_prefetch = 0 : i64, scratch_operands = 2 : i64, tpu.core_type = #tpu.core_type<tc>, window_params = [{transform_indices = @transform_0, window_bounds = array<i64: 1, 32, 2, 16>}, {transform_indices = @transform_1, window_bounds = array<i64: 1, 4, 16, 16>}, {transform_indices = @transform_2, window_bounds = array<i64: 1, 8, 2, 16>}, {transform_indices = @transform_3, window_bounds = array<i64: 1, 2, 16>}, {transform_indices = @transform_4, window_bounds = array<i64: 1, 2, 16>}]} {
    %c0_i32 = arith.constant 0 : i32
    %0 = arith.cmpi eq, %arg1, %c0_i32 : i32
    %1 = arith.extui %0 : i1 to i32
    %c0_i32_0 = arith.constant 0 : i32
    %2 = arith.cmpi ne, %1, %c0_i32_0 : i32
    scf.if %2 {
      %cst_159 = arith.constant 0.000000e+00 : f32
      %418 = vector.broadcast %cst_159 : f32 to vector<2x16xf32>
      %c0_160 = arith.constant 0 : index
      %c0_161 = arith.constant 0 : index
      %419 = vector.load %arg7[%c0_160, %c0_161] : memref<2x16xf32, #tpu.memory_space<vmem>>, vector<2x16xf32>
      tpu.vector_store %arg7[%c0_160, %c0_161], %418 {strides = array<i32>} : memref<2x16xf32, #tpu.memory_space<vmem>>, vector<2x16xf32>,
      %cst_162 = arith.constant 0.000000e+00 : f32
      %420 = vector.broadcast %cst_162 : f32 to vector<2x16xf32>
      %c0_163 = arith.constant 0 : index
      %c0_164 = arith.constant 0 : index
      %421 = vector.load %arg8[%c0_163, %c0_164] : memref<2x16xf32, #tpu.memory_space<vmem>>, vector<2x16xf32>
      tpu.vector_store %arg8[%c0_163, %c0_164], %420 {strides = array<i32>} : memref<2x16xf32, #tpu.memory_space<vmem>>, vector<2x16xf32>,
    } else {
    }
    %c0 = arith.constant 0 : index
    %c0_1 = arith.constant 0 : index
    %c0_2 = arith.constant 0 : index
    %c0_3 = arith.constant 0 : index
    %3 = vector.load %arg3[%c0, %c0_1, %c0_2, %c0_3] : memref<1x4x16x16xf32, #tpu.memory_space<vmem>>, vector<1x1x16x16xf32>
    %4 = vector.shape_cast %3 : vector<1x1x16x16xf32> to vector<16x16xf32>
    %c0_4 = arith.constant 0 : index
    %c1 = arith.constant 1 : index
    %c0_5 = arith.constant 0 : index
    %c0_6 = arith.constant 0 : index
    %5 = vector.load %arg3[%c0_4, %c1, %c0_5, %c0_6] : memref<1x4x16x16xf32, #tpu.memory_space<vmem>>, vector<1x1x16x16xf32>
    %6 = vector.shape_cast %5 : vector<1x1x16x16xf32> to vector<16x16xf32>
    %c0_7 = arith.constant 0 : index
    %c2 = arith.constant 2 : index
    %c0_8 = arith.constant 0 : index
    %c0_9 = arith.constant 0 : index
    %7 = vector.load %arg3[%c0_7, %c2, %c0_8, %c0_9] : memref<1x4x16x16xf32, #tpu.memory_space<vmem>>, vector<1x1x16x16xf32>
    %8 = vector.shape_cast %7 : vector<1x1x16x16xf32> to vector<16x16xf32>
    %c0_10 = arith.constant 0 : index
    %c3 = arith.constant 3 : index
    %c0_11 = arith.constant 0 : index
    %c0_12 = arith.constant 0 : index
    %9 = vector.load %arg3[%c0_10, %c3, %c0_11, %c0_12] : memref<1x4x16x16xf32, #tpu.memory_space<vmem>>, vector<1x1x16x16xf32>
    %10 = vector.shape_cast %9 : vector<1x1x16x16xf32> to vector<16x16xf32>
    %c0_13 = arith.constant 0 : index
    %c0_14 = arith.constant 0 : index
    %11 = vector.load %arg7[%c0_13, %c0_14] : memref<2x16xf32, #tpu.memory_space<vmem>>, vector<2x16xf32>
    %c0_15 = arith.constant 0 : index
    %c0_16 = arith.constant 0 : index
    %12 = vector.load %arg8[%c0_15, %c0_16] : memref<2x16xf32, #tpu.memory_space<vmem>>, vector<2x16xf32>
    %c0_i32_17 = arith.constant 0 : i32
    %c7_i32 = arith.constant 7 : i32
    %13 = arith.muli %arg0, %c7_i32 : i32
    %c2_i32 = arith.constant 2 : i32
    %14 = arith.muli %c2_i32, %arg0 : i32
    %c1_i32 = arith.constant 1 : i32
    %15 = arith.subi %c1_i32, %14 : i32
    %16 = arith.muli %15, %c0_i32_17 : i32
    %17 = arith.addi %13, %16 : i32
    %c4_i32 = arith.constant 4 : i32
    %18 = arith.muli %17, %c4_i32 : i32
    %c0_18 = arith.constant 0 : index
    %19 = arith.index_cast %18 : i32 to index
    %c0_19 = arith.constant 0 : index
    %c0_20 = arith.constant 0 : index
    %20 = vector.load %arg2[%c0_18, %19, %c0_19, %c0_20] : memref<1x32x2x16xf32, #tpu.memory_space<vmem>>, vector<1x4x2x16xf32>
    %21 = vector.shape_cast %20 : vector<1x4x2x16xf32> to vector<4x2x16xf32>
    %22 = vector.extract_strided_slice %21 {offsets = [0, 0, 0], sizes = [1, 2, 16], strides = [1, 1, 1]} : vector<4x2x16xf32> to vector<1x2x16xf32>
    %23 = vector.shape_cast %22 : vector<1x2x16xf32> to vector<2x16xf32>
    %cst = arith.constant dense<0.000000e+00> : vector<2x16xf32>
    %24 = tpu.matmul %11, %4, %cst {dimension_numbers = #tpu.dot_dimension_numbers<[1], [0], [0], [1], [0, 0, 1, 1], [], []>} : vector<2x16xf32>, vector<16x16xf32>, vector<2x16xf32> -> vector<2x16xf32>
    %25 = arith.addf %23, %24 : vector<2x16xf32>
    %26 = arith.negf %25 : vector<2x16xf32>
    %27 = math.exp %26 : vector<2x16xf32>
    %cst_21 = arith.constant 1.000000e+00 : f32
    %28 = vector.broadcast %cst_21 : f32 to vector<2x16xf32>
    %29 = arith.addf %28, %27 : vector<2x16xf32>
    %30 = arith.divf %28, %29 : vector<2x16xf32>
    %31 = vector.extract_strided_slice %21 {offsets = [1, 0, 0], sizes = [1, 2, 16], strides = [1, 1, 1]} : vector<4x2x16xf32> to vector<1x2x16xf32>
    %32 = vector.shape_cast %31 : vector<1x2x16xf32> to vector<2x16xf32>
    %cst_22 = arith.constant dense<0.000000e+00> : vector<2x16xf32>
    %33 = tpu.matmul %11, %6, %cst_22 {dimension_numbers = #tpu.dot_dimension_numbers<[1], [0], [0], [1], [0, 0, 1, 1], [], []>} : vector<2x16xf32>, vector<16x16xf32>, vector<2x16xf32> -> vector<2x16xf32>
    %34 = arith.addf %32, %33 : vector<2x16xf32>
    %35 = arith.negf %34 : vector<2x16xf32>
    %36 = math.exp %35 : vector<2x16xf32>
    %cst_23 = arith.constant 1.000000e+00 : f32
    %37 = vector.broadcast %cst_23 : f32 to vector<2x16xf32>
    %38 = arith.addf %37, %36 : vector<2x16xf32>
    %39 = arith.divf %37, %38 : vector<2x16xf32>
    %40 = vector.extract_strided_slice %21 {offsets = [2, 0, 0], sizes = [1, 2, 16], strides = [1, 1, 1]} : vector<4x2x16xf32> to vector<1x2x16xf32>
    %41 = vector.shape_cast %40 : vector<1x2x16xf32> to vector<2x16xf32>
    %cst_24 = arith.constant dense<0.000000e+00> : vector<2x16xf32>
    %42 = tpu.matmul %11, %8, %cst_24 {dimension_numbers = #tpu.dot_dimension_numbers<[1], [0], [0], [1], [0, 0, 1, 1], [], []>} : vector<2x16xf32>, vector<16x16xf32>, vector<2x16xf32> -> vector<2x16xf32>
    %43 = arith.addf %41, %42 : vector<2x16xf32>
    %44 = math.tanh %43 : vector<2x16xf32>
    %45 = vector.extract_strided_slice %21 {offsets = [3, 0, 0], sizes = [1, 2, 16], strides = [1, 1, 1]} : vector<4x2x16xf32> to vector<1x2x16xf32>
    %46 = vector.shape_cast %45 : vector<1x2x16xf32> to vector<2x16xf32>
    %cst_25 = arith.constant dense<0.000000e+00> : vector<2x16xf32>
    %47 = tpu.matmul %11, %10, %cst_25 {dimension_numbers = #tpu.dot_dimension_numbers<[1], [0], [0], [1], [0, 0, 1, 1], [], []>} : vector<2x16xf32>, vector<16x16xf32>, vector<2x16xf32> -> vector<2x16xf32>
    %48 = arith.addf %46, %47 : vector<2x16xf32>
    %49 = arith.negf %48 : vector<2x16xf32>
    %50 = math.exp %49 : vector<2x16xf32>
    %cst_26 = arith.constant 1.000000e+00 : f32
    %51 = vector.broadcast %cst_26 : f32 to vector<2x16xf32>
    %52 = arith.addf %51, %50 : vector<2x16xf32>
    %53 = arith.divf %51, %52 : vector<2x16xf32>
    %54 = arith.mulf %39, %12 : vector<2x16xf32>
    %55 = arith.mulf %30, %44 : vector<2x16xf32>
    %56 = arith.addf %54, %55 : vector<2x16xf32>
    %57 = math.tanh %56 : vector<2x16xf32>
    %58 = arith.mulf %53, %57 : vector<2x16xf32>
    %c0_27 = arith.constant 0 : index
    %59 = arith.index_cast %17 : i32 to index
    %c0_28 = arith.constant 0 : index
    %c0_29 = arith.constant 0 : index
    %60 = vector.load %arg4[%c0_27, %59, %c0_28, %c0_29] : memref<1x8x2x16xf32, #tpu.memory_space<vmem>>, vector<1x1x2x16xf32>
    %61 = vector.shape_cast %60 : vector<1x1x2x16xf32> to vector<2x16xf32>
    %62 = vector.shape_cast %58 : vector<2x16xf32> to vector<1x1x2x16xf32>
    tpu.vector_store %arg4[%c0_27, %59, %c0_28, %c0_29], %62 {strides = array<i32>} : memref<1x8x2x16xf32, #tpu.memory_space<vmem>>, vector<1x1x2x16xf32>,
    %c1_i32_30 = arith.constant 1 : i32
    %c7_i32_31 = arith.constant 7 : i32
    %63 = arith.muli %arg0, %c7_i32_31 : i32
    %c2_i32_32 = arith.constant 2 : i32
    %64 = arith.muli %c2_i32_32, %arg0 : i32
    %c1_i32_33 = arith.constant 1 : i32
    %65 = arith.subi %c1_i32_33, %64 : i32
    %66 = arith.muli %65, %c1_i32_30 : i32
    %67 = arith.addi %63, %66 : i32
    %c4_i32_34 = arith.constant 4 : i32
    %68 = arith.muli %67, %c4_i32_34 : i32
    %c0_35 = arith.constant 0 : index
    %69 = arith.index_cast %68 : i32 to index
    %c0_36 = arith.constant 0 : index
    %c0_37 = arith.constant 0 : index
    %70 = vector.load %arg2[%c0_35, %69, %c0_36, %c0_37] : memref<1x32x2x16xf32, #tpu.memory_space<vmem>>, vector<1x4x2x16xf32>
    %71 = vector.shape_cast %70 : vector<1x4x2x16xf32> to vector<4x2x16xf32>
    %72 = vector.extract_strided_slice %71 {offsets = [0, 0, 0], sizes = [1, 2, 16], strides = [1, 1, 1]} : vector<4x2x16xf32> to vector<1x2x16xf32>
    %73 = vector.shape_cast %72 : vector<1x2x16xf32> to vector<2x16xf32>
    %cst_38 = arith.constant dense<0.000000e+00> : vector<2x16xf32>
    %74 = tpu.matmul %58, %4, %cst_38 {dimension_numbers = #tpu.dot_dimension_numbers<[1], [0], [0], [1], [0, 0, 1, 1], [], []>} : vector<2x16xf32>, vector<16x16xf32>, vector<2x16xf32> -> vector<2x16xf32>
    %75 = arith.addf %73, %74 : vector<2x16xf32>
    %76 = arith.negf %75 : vector<2x16xf32>
    %77 = math.exp %76 : vector<2x16xf32>
    %cst_39 = arith.constant 1.000000e+00 : f32
    %78 = vector.broadcast %cst_39 : f32 to vector<2x16xf32>
    %79 = arith.addf %78, %77 : vector<2x16xf32>
    %80 = arith.divf %78, %79 : vector<2x16xf32>
    %81 = vector.extract_strided_slice %71 {offsets = [1, 0, 0], sizes = [1, 2, 16], strides = [1, 1, 1]} : vector<4x2x16xf32> to vector<1x2x16xf32>
    %82 = vector.shape_cast %81 : vector<1x2x16xf32> to vector<2x16xf32>
    %cst_40 = arith.constant dense<0.000000e+00> : vector<2x16xf32>
    %83 = tpu.matmul %58, %6, %cst_40 {dimension_numbers = #tpu.dot_dimension_numbers<[1], [0], [0], [1], [0, 0, 1, 1], [], []>} : vector<2x16xf32>, vector<16x16xf32>, vector<2x16xf32> -> vector<2x16xf32>
    %84 = arith.addf %82, %83 : vector<2x16xf32>
    %85 = arith.negf %84 : vector<2x16xf32>
    %86 = math.exp %85 : vector<2x16xf32>
    %cst_41 = arith.constant 1.000000e+00 : f32
    %87 = vector.broadcast %cst_41 : f32 to vector<2x16xf32>
    %88 = arith.addf %87, %86 : vector<2x16xf32>
    %89 = arith.divf %87, %88 : vector<2x16xf32>
    %90 = vector.extract_strided_slice %71 {offsets = [2, 0, 0], sizes = [1, 2, 16], strides = [1, 1, 1]} : vector<4x2x16xf32> to vector<1x2x16xf32>
    %91 = vector.shape_cast %90 : vector<1x2x16xf32> to vector<2x16xf32>
    %cst_42 = arith.constant dense<0.000000e+00> : vector<2x16xf32>
    %92 = tpu.matmul %58, %8, %cst_42 {dimension_numbers = #tpu.dot_dimension_numbers<[1], [0], [0], [1], [0, 0, 1, 1], [], []>} : vector<2x16xf32>, vector<16x16xf32>, vector<2x16xf32> -> vector<2x16xf32>
    %93 = arith.addf %91, %92 : vector<2x16xf32>
    %94 = math.tanh %93 : vector<2x16xf32>
    %95 = vector.extract_strided_slice %71 {offsets = [3, 0, 0], sizes = [1, 2, 16], strides = [1, 1, 1]} : vector<4x2x16xf32> to vector<1x2x16xf32>
    %96 = vector.shape_cast %95 : vector<1x2x16xf32> to vector<2x16xf32>
    %cst_43 = arith.constant dense<0.000000e+00> : vector<2x16xf32>
    %97 = tpu.matmul %58, %10, %cst_43 {dimension_numbers = #tpu.dot_dimension_numbers<[1], [0], [0], [1], [0, 0, 1, 1], [], []>} : vector<2x16xf32>, vector<16x16xf32>, vector<2x16xf32> -> vector<2x16xf32>
    %98 = arith.addf %96, %97 : vector<2x16xf32>
    %99 = arith.negf %98 : vector<2x16xf32>
    %100 = math.exp %99 : vector<2x16xf32>
    %cst_44 = arith.constant 1.000000e+00 : f32
    %101 = vector.broadcast %cst_44 : f32 to vector<2x16xf32>
    %102 = arith.addf %101, %100 : vector<2x16xf32>
    %103 = arith.divf %101, %102 : vector<2x16xf32>
    %104 = arith.mulf %89, %56 : vector<2x16xf32>
    %105 = arith.mulf %80, %94 : vector<2x16xf32>
    %106 = arith.addf %104, %105 : vector<2x16xf32>
    %107 = math.tanh %106 : vector<2x16xf32>
    %108 = arith.mulf %103, %107 : vector<2x16xf32>
    %c0_45 = arith.constant 0 : index
    %109 = arith.index_cast %67 : i32 to index
    %c0_46 = arith.constant 0 : index
    %c0_47 = arith.constant 0 : index
    %110 = vector.load %arg4[%c0_45, %109, %c0_46, %c0_47] : memref<1x8x2x16xf32, #tpu.memory_space<vmem>>, vector<1x1x2x16xf32>
    %111 = vector.shape_cast %110 : vector<1x1x2x16xf32> to vector<2x16xf32>
    %112 = vector.shape_cast %108 : vector<2x16xf32> to vector<1x1x2x16xf32>
    tpu.vector_store %arg4[%c0_45, %109, %c0_46, %c0_47], %112 {strides = array<i32>} : memref<1x8x2x16xf32, #tpu.memory_space<vmem>>, vector<1x1x2x16xf32>,
    %c2_i32_48 = arith.constant 2 : i32
    %c7_i32_49 = arith.constant 7 : i32
    %113 = arith.muli %arg0, %c7_i32_49 : i32
    %c2_i32_50 = arith.constant 2 : i32
    %114 = arith.muli %c2_i32_50, %arg0 : i32
    %c1_i32_51 = arith.constant 1 : i32
    %115 = arith.subi %c1_i32_51, %114 : i32
    %116 = arith.muli %115, %c2_i32_48 : i32
    %117 = arith.addi %113, %116 : i32
    %c4_i32_52 = arith.constant 4 : i32
    %118 = arith.muli %117, %c4_i32_52 : i32
    %c0_53 = arith.constant 0 : index
    %119 = arith.index_cast %118 : i32 to index
    %c0_54 = arith.constant 0 : index
    %c0_55 = arith.constant 0 : index
    %120 = vector.load %arg2[%c0_53, %119, %c0_54, %c0_55] : memref<1x32x2x16xf32, #tpu.memory_space<vmem>>, vector<1x4x2x16xf32>
    %121 = vector.shape_cast %120 : vector<1x4x2x16xf32> to vector<4x2x16xf32>
    %122 = vector.extract_strided_slice %121 {offsets = [0, 0, 0], sizes = [1, 2, 16], strides = [1, 1, 1]} : vector<4x2x16xf32> to vector<1x2x16xf32>
    %123 = vector.shape_cast %122 : vector<1x2x16xf32> to vector<2x16xf32>
    %cst_56 = arith.constant dense<0.000000e+00> : vector<2x16xf32>
    %124 = tpu.matmul %108, %4, %cst_56 {dimension_numbers = #tpu.dot_dimension_numbers<[1], [0], [0], [1], [0, 0, 1, 1], [], []>} : vector<2x16xf32>, vector<16x16xf32>, vector<2x16xf32> -> vector<2x16xf32>
    %125 = arith.addf %123, %124 : vector<2x16xf32>
    %126 = arith.negf %125 : vector<2x16xf32>
    %127 = math.exp %126 : vector<2x16xf32>
    %cst_57 = arith.constant 1.000000e+00 : f32
    %128 = vector.broadcast %cst_57 : f32 to vector<2x16xf32>
    %129 = arith.addf %128, %127 : vector<2x16xf32>
    %130 = arith.divf %128, %129 : vector<2x16xf32>
    %131 = vector.extract_strided_slice %121 {offsets = [1, 0, 0], sizes = [1, 2, 16], strides = [1, 1, 1]} : vector<4x2x16xf32> to vector<1x2x16xf32>
    %132 = vector.shape_cast %131 : vector<1x2x16xf32> to vector<2x16xf32>
    %cst_58 = arith.constant dense<0.000000e+00> : vector<2x16xf32>
    %133 = tpu.matmul %108, %6, %cst_58 {dimension_numbers = #tpu.dot_dimension_numbers<[1], [0], [0], [1], [0, 0, 1, 1], [], []>} : vector<2x16xf32>, vector<16x16xf32>, vector<2x16xf32> -> vector<2x16xf32>
    %134 = arith.addf %132, %133 : vector<2x16xf32>
    %135 = arith.negf %134 : vector<2x16xf32>
    %136 = math.exp %135 : vector<2x16xf32>
    %cst_59 = arith.constant 1.000000e+00 : f32
    %137 = vector.broadcast %cst_59 : f32 to vector<2x16xf32>
    %138 = arith.addf %137, %136 : vector<2x16xf32>
    %139 = arith.divf %137, %138 : vector<2x16xf32>
    %140 = vector.extract_strided_slice %121 {offsets = [2, 0, 0], sizes = [1, 2, 16], strides = [1, 1, 1]} : vector<4x2x16xf32> to vector<1x2x16xf32>
    %141 = vector.shape_cast %140 : vector<1x2x16xf32> to vector<2x16xf32>
    %cst_60 = arith.constant dense<0.000000e+00> : vector<2x16xf32>
    %142 = tpu.matmul %108, %8, %cst_60 {dimension_numbers = #tpu.dot_dimension_numbers<[1], [0], [0], [1], [0, 0, 1, 1], [], []>} : vector<2x16xf32>, vector<16x16xf32>, vector<2x16xf32> -> vector<2x16xf32>
    %143 = arith.addf %141, %142 : vector<2x16xf32>
    %144 = math.tanh %143 : vector<2x16xf32>
    %145 = vector.extract_strided_slice %121 {offsets = [3, 0, 0], sizes = [1, 2, 16], strides = [1, 1, 1]} : vector<4x2x16xf32> to vector<1x2x16xf32>
    %146 = vector.shape_cast %145 : vector<1x2x16xf32> to vector<2x16xf32>
    %cst_61 = arith.constant dense<0.000000e+00> : vector<2x16xf32>
    %147 = tpu.matmul %108, %10, %cst_61 {dimension_numbers = #tpu.dot_dimension_numbers<[1], [0], [0], [1], [0, 0, 1, 1], [], []>} : vector<2x16xf32>, vector<16x16xf32>, vector<2x16xf32> -> vector<2x16xf32>
    %148 = arith.addf %146, %147 : vector<2x16xf32>
    %149 = arith.negf %148 : vector<2x16xf32>
    %150 = math.exp %149 : vector<2x16xf32>
    %cst_62 = arith.constant 1.000000e+00 : f32
    %151 = vector.broadcast %cst_62 : f32 to vector<2x16xf32>
    %152 = arith.addf %151, %150 : vector<2x16xf32>
    %153 = arith.divf %151, %152 : vector<2x16xf32>
    %154 = arith.mulf %139, %106 : vector<2x16xf32>
    %155 = arith.mulf %130, %144 : vector<2x16xf32>
    %156 = arith.addf %154, %155 : vector<2x16xf32>
    %157 = math.tanh %156 : vector<2x16xf32>
    %158 = arith.mulf %153, %157 : vector<2x16xf32>
    %c0_63 = arith.constant 0 : index
    %159 = arith.index_cast %117 : i32 to index
    %c0_64 = arith.constant 0 : index
    %c0_65 = arith.constant 0 : index
    %160 = vector.load %arg4[%c0_63, %159, %c0_64, %c0_65] : memref<1x8x2x16xf32, #tpu.memory_space<vmem>>, vector<1x1x2x16xf32>
    %161 = vector.shape_cast %160 : vector<1x1x2x16xf32> to vector<2x16xf32>
    %162 = vector.shape_cast %158 : vector<2x16xf32> to vector<1x1x2x16xf32>
    tpu.vector_store %arg4[%c0_63, %159, %c0_64, %c0_65], %162 {strides = array<i32>} : memref<1x8x2x16xf32, #tpu.memory_space<vmem>>, vector<1x1x2x16xf32>,
    %c3_i32 = arith.constant 3 : i32
    %c7_i32_66 = arith.constant 7 : i32
    %163 = arith.muli %arg0, %c7_i32_66 : i32
    %c2_i32_67 = arith.constant 2 : i32
    %164 = arith.muli %c2_i32_67, %arg0 : i32
    %c1_i32_68 = arith.constant 1 : i32
    %165 = arith.subi %c1_i32_68, %164 : i32
    %166 = arith.muli %165, %c3_i32 : i32
    %167 = arith.addi %163, %166 : i32
    %c4_i32_69 = arith.constant 4 : i32
    %168 = arith.muli %167, %c4_i32_69 : i32
    %c0_70 = arith.constant 0 : index
    %169 = arith.index_cast %168 : i32 to index
    %c0_71 = arith.constant 0 : index
    %c0_72 = arith.constant 0 : index
    %170 = vector.load %arg2[%c0_70, %169, %c0_71, %c0_72] : memref<1x32x2x16xf32, #tpu.memory_space<vmem>>, vector<1x4x2x16xf32>
    %171 = vector.shape_cast %170 : vector<1x4x2x16xf32> to vector<4x2x16xf32>
    %172 = vector.extract_strided_slice %171 {offsets = [0, 0, 0], sizes = [1, 2, 16], strides = [1, 1, 1]} : vector<4x2x16xf32> to vector<1x2x16xf32>
    %173 = vector.shape_cast %172 : vector<1x2x16xf32> to vector<2x16xf32>
    %cst_73 = arith.constant dense<0.000000e+00> : vector<2x16xf32>
    %174 = tpu.matmul %158, %4, %cst_73 {dimension_numbers = #tpu.dot_dimension_numbers<[1], [0], [0], [1], [0, 0, 1, 1], [], []>} : vector<2x16xf32>, vector<16x16xf32>, vector<2x16xf32> -> vector<2x16xf32>
    %175 = arith.addf %173, %174 : vector<2x16xf32>
    %176 = arith.negf %175 : vector<2x16xf32>
    %177 = math.exp %176 : vector<2x16xf32>
    %cst_74 = arith.constant 1.000000e+00 : f32
    %178 = vector.broadcast %cst_74 : f32 to vector<2x16xf32>
    %179 = arith.addf %178, %177 : vector<2x16xf32>
    %180 = arith.divf %178, %179 : vector<2x16xf32>
    %181 = vector.extract_strided_slice %171 {offsets = [1, 0, 0], sizes = [1, 2, 16], strides = [1, 1, 1]} : vector<4x2x16xf32> to vector<1x2x16xf32>
    %182 = vector.shape_cast %181 : vector<1x2x16xf32> to vector<2x16xf32>
    %cst_75 = arith.constant dense<0.000000e+00> : vector<2x16xf32>
    %183 = tpu.matmul %158, %6, %cst_75 {dimension_numbers = #tpu.dot_dimension_numbers<[1], [0], [0], [1], [0, 0, 1, 1], [], []>} : vector<2x16xf32>, vector<16x16xf32>, vector<2x16xf32> -> vector<2x16xf32>
    %184 = arith.addf %182, %183 : vector<2x16xf32>
    %185 = arith.negf %184 : vector<2x16xf32>
    %186 = math.exp %185 : vector<2x16xf32>
    %cst_76 = arith.constant 1.000000e+00 : f32
    %187 = vector.broadcast %cst_76 : f32 to vector<2x16xf32>
    %188 = arith.addf %187, %186 : vector<2x16xf32>
    %189 = arith.divf %187, %188 : vector<2x16xf32>
    %190 = vector.extract_strided_slice %171 {offsets = [2, 0, 0], sizes = [1, 2, 16], strides = [1, 1, 1]} : vector<4x2x16xf32> to vector<1x2x16xf32>
    %191 = vector.shape_cast %190 : vector<1x2x16xf32> to vector<2x16xf32>
    %cst_77 = arith.constant dense<0.000000e+00> : vector<2x16xf32>
    %192 = tpu.matmul %158, %8, %cst_77 {dimension_numbers = #tpu.dot_dimension_numbers<[1], [0], [0], [1], [0, 0, 1, 1], [], []>} : vector<2x16xf32>, vector<16x16xf32>, vector<2x16xf32> -> vector<2x16xf32>
    %193 = arith.addf %191, %192 : vector<2x16xf32>
    %194 = math.tanh %193 : vector<2x16xf32>
    %195 = vector.extract_strided_slice %171 {offsets = [3, 0, 0], sizes = [1, 2, 16], strides = [1, 1, 1]} : vector<4x2x16xf32> to vector<1x2x16xf32>
    %196 = vector.shape_cast %195 : vector<1x2x16xf32> to vector<2x16xf32>
    %cst_78 = arith.constant dense<0.000000e+00> : vector<2x16xf32>
    %197 = tpu.matmul %158, %10, %cst_78 {dimension_numbers = #tpu.dot_dimension_numbers<[1], [0], [0], [1], [0, 0, 1, 1], [], []>} : vector<2x16xf32>, vector<16x16xf32>, vector<2x16xf32> -> vector<2x16xf32>
    %198 = arith.addf %196, %197 : vector<2x16xf32>
    %199 = arith.negf %198 : vector<2x16xf32>
    %200 = math.exp %199 : vector<2x16xf32>
    %cst_79 = arith.constant 1.000000e+00 : f32
    %201 = vector.broadcast %cst_79 : f32 to vector<2x16xf32>
    %202 = arith.addf %201, %200 : vector<2x16xf32>
    %203 = arith.divf %201, %202 : vector<2x16xf32>
    %204 = arith.mulf %189, %156 : vector<2x16xf32>
    %205 = arith.mulf %180, %194 : vector<2x16xf32>
    %206 = arith.addf %204, %205 : vector<2x16xf32>
    %207 = math.tanh %206 : vector<2x16xf32>
    %208 = arith.mulf %203, %207 : vector<2x16xf32>
    %c0_80 = arith.constant 0 : index
    %209 = arith.index_cast %167 : i32 to index
    %c0_81 = arith.constant 0 : index
    %c0_82 = arith.constant 0 : index
    %210 = vector.load %arg4[%c0_80, %209, %c0_81, %c0_82] : memref<1x8x2x16xf32, #tpu.memory_space<vmem>>, vector<1x1x2x16xf32>
    %211 = vector.shape_cast %210 : vector<1x1x2x16xf32> to vector<2x16xf32>
    %212 = vector.shape_cast %208 : vector<2x16xf32> to vector<1x1x2x16xf32>
    tpu.vector_store %arg4[%c0_80, %209, %c0_81, %c0_82], %212 {strides = array<i32>} : memref<1x8x2x16xf32, #tpu.memory_space<vmem>>, vector<1x1x2x16xf32>,
    %c4_i32_83 = arith.constant 4 : i32
    %c7_i32_84 = arith.constant 7 : i32
    %213 = arith.muli %arg0, %c7_i32_84 : i32
    %c2_i32_85 = arith.constant 2 : i32
    %214 = arith.muli %c2_i32_85, %arg0 : i32
    %c1_i32_86 = arith.constant 1 : i32
    %215 = arith.subi %c1_i32_86, %214 : i32
    %216 = arith.muli %215, %c4_i32_83 : i32
    %217 = arith.addi %213, %216 : i32
    %c4_i32_87 = arith.constant 4 : i32
    %218 = arith.muli %217, %c4_i32_87 : i32
    %c0_88 = arith.constant 0 : index
    %219 = arith.index_cast %218 : i32 to index
    %c0_89 = arith.constant 0 : index
    %c0_90 = arith.constant 0 : index
    %220 = vector.load %arg2[%c0_88, %219, %c0_89, %c0_90] : memref<1x32x2x16xf32, #tpu.memory_space<vmem>>, vector<1x4x2x16xf32>
    %221 = vector.shape_cast %220 : vector<1x4x2x16xf32> to vector<4x2x16xf32>
    %222 = vector.extract_strided_slice %221 {offsets = [0, 0, 0], sizes = [1, 2, 16], strides = [1, 1, 1]} : vector<4x2x16xf32> to vector<1x2x16xf32>
    %223 = vector.shape_cast %222 : vector<1x2x16xf32> to vector<2x16xf32>
    %cst_91 = arith.constant dense<0.000000e+00> : vector<2x16xf32>
    %224 = tpu.matmul %208, %4, %cst_91 {dimension_numbers = #tpu.dot_dimension_numbers<[1], [0], [0], [1], [0, 0, 1, 1], [], []>} : vector<2x16xf32>, vector<16x16xf32>, vector<2x16xf32> -> vector<2x16xf32>
    %225 = arith.addf %223, %224 : vector<2x16xf32>
    %226 = arith.negf %225 : vector<2x16xf32>
    %227 = math.exp %226 : vector<2x16xf32>
    %cst_92 = arith.constant 1.000000e+00 : f32
    %228 = vector.broadcast %cst_92 : f32 to vector<2x16xf32>
    %229 = arith.addf %228, %227 : vector<2x16xf32>
    %230 = arith.divf %228, %229 : vector<2x16xf32>
    %231 = vector.extract_strided_slice %221 {offsets = [1, 0, 0], sizes = [1, 2, 16], strides = [1, 1, 1]} : vector<4x2x16xf32> to vector<1x2x16xf32>
    %232 = vector.shape_cast %231 : vector<1x2x16xf32> to vector<2x16xf32>
    %cst_93 = arith.constant dense<0.000000e+00> : vector<2x16xf32>
    %233 = tpu.matmul %208, %6, %cst_93 {dimension_numbers = #tpu.dot_dimension_numbers<[1], [0], [0], [1], [0, 0, 1, 1], [], []>} : vector<2x16xf32>, vector<16x16xf32>, vector<2x16xf32> -> vector<2x16xf32>
    %234 = arith.addf %232, %233 : vector<2x16xf32>
    %235 = arith.negf %234 : vector<2x16xf32>
    %236 = math.exp %235 : vector<2x16xf32>
    %cst_94 = arith.constant 1.000000e+00 : f32
    %237 = vector.broadcast %cst_94 : f32 to vector<2x16xf32>
    %238 = arith.addf %237, %236 : vector<2x16xf32>
    %239 = arith.divf %237, %238 : vector<2x16xf32>
    %240 = vector.extract_strided_slice %221 {offsets = [2, 0, 0], sizes = [1, 2, 16], strides = [1, 1, 1]} : vector<4x2x16xf32> to vector<1x2x16xf32>
    %241 = vector.shape_cast %240 : vector<1x2x16xf32> to vector<2x16xf32>
    %cst_95 = arith.constant dense<0.000000e+00> : vector<2x16xf32>
    %242 = tpu.matmul %208, %8, %cst_95 {dimension_numbers = #tpu.dot_dimension_numbers<[1], [0], [0], [1], [0, 0, 1, 1], [], []>} : vector<2x16xf32>, vector<16x16xf32>, vector<2x16xf32> -> vector<2x16xf32>
    %243 = arith.addf %241, %242 : vector<2x16xf32>
    %244 = math.tanh %243 : vector<2x16xf32>
    %245 = vector.extract_strided_slice %221 {offsets = [3, 0, 0], sizes = [1, 2, 16], strides = [1, 1, 1]} : vector<4x2x16xf32> to vector<1x2x16xf32>
    %246 = vector.shape_cast %245 : vector<1x2x16xf32> to vector<2x16xf32>
    %cst_96 = arith.constant dense<0.000000e+00> : vector<2x16xf32>
    %247 = tpu.matmul %208, %10, %cst_96 {dimension_numbers = #tpu.dot_dimension_numbers<[1], [0], [0], [1], [0, 0, 1, 1], [], []>} : vector<2x16xf32>, vector<16x16xf32>, vector<2x16xf32> -> vector<2x16xf32>
    %248 = arith.addf %246, %247 : vector<2x16xf32>
    %249 = arith.negf %248 : vector<2x16xf32>
    %250 = math.exp %249 : vector<2x16xf32>
    %cst_97 = arith.constant 1.000000e+00 : f32
    %251 = vector.broadcast %cst_97 : f32 to vector<2x16xf32>
    %252 = arith.addf %251, %250 : vector<2x16xf32>
    %253 = arith.divf %251, %252 : vector<2x16xf32>
    %254 = arith.mulf %239, %206 : vector<2x16xf32>
    %255 = arith.mulf %230, %244 : vector<2x16xf32>
    %256 = arith.addf %254, %255 : vector<2x16xf32>
    %257 = math.tanh %256 : vector<2x16xf32>
    %258 = arith.mulf %253, %257 : vector<2x16xf32>
    %c0_98 = arith.constant 0 : index
    %259 = arith.index_cast %217 : i32 to index
    %c0_99 = arith.constant 0 : index
    %c0_100 = arith.constant 0 : index
    %260 = vector.load %arg4[%c0_98, %259, %c0_99, %c0_100] : memref<1x8x2x16xf32, #tpu.memory_space<vmem>>, vector<1x1x2x16xf32>
    %261 = vector.shape_cast %260 : vector<1x1x2x16xf32> to vector<2x16xf32>
    %262 = vector.shape_cast %258 : vector<2x16xf32> to vector<1x1x2x16xf32>
    tpu.vector_store %arg4[%c0_98, %259, %c0_99, %c0_100], %262 {strides = array<i32>} : memref<1x8x2x16xf32, #tpu.memory_space<vmem>>, vector<1x1x2x16xf32>,
    %c5_i32 = arith.constant 5 : i32
    %c7_i32_101 = arith.constant 7 : i32
    %263 = arith.muli %arg0, %c7_i32_101 : i32
    %c2_i32_102 = arith.constant 2 : i32
    %264 = arith.muli %c2_i32_102, %arg0 : i32
    %c1_i32_103 = arith.constant 1 : i32
    %265 = arith.subi %c1_i32_103, %264 : i32
    %266 = arith.muli %265, %c5_i32 : i32
    %267 = arith.addi %263, %266 : i32
    %c4_i32_104 = arith.constant 4 : i32
    %268 = arith.muli %267, %c4_i32_104 : i32
    %c0_105 = arith.constant 0 : index
    %269 = arith.index_cast %268 : i32 to index
    %c0_106 = arith.constant 0 : index
    %c0_107 = arith.constant 0 : index
    %270 = vector.load %arg2[%c0_105, %269, %c0_106, %c0_107] : memref<1x32x2x16xf32, #tpu.memory_space<vmem>>, vector<1x4x2x16xf32>
    %271 = vector.shape_cast %270 : vector<1x4x2x16xf32> to vector<4x2x16xf32>
    %272 = vector.extract_strided_slice %271 {offsets = [0, 0, 0], sizes = [1, 2, 16], strides = [1, 1, 1]} : vector<4x2x16xf32> to vector<1x2x16xf32>
    %273 = vector.shape_cast %272 : vector<1x2x16xf32> to vector<2x16xf32>
    %cst_108 = arith.constant dense<0.000000e+00> : vector<2x16xf32>
    %274 = tpu.matmul %258, %4, %cst_108 {dimension_numbers = #tpu.dot_dimension_numbers<[1], [0], [0], [1], [0, 0, 1, 1], [], []>} : vector<2x16xf32>, vector<16x16xf32>, vector<2x16xf32> -> vector<2x16xf32>
    %275 = arith.addf %273, %274 : vector<2x16xf32>
    %276 = arith.negf %275 : vector<2x16xf32>
    %277 = math.exp %276 : vector<2x16xf32>
    %cst_109 = arith.constant 1.000000e+00 : f32
    %278 = vector.broadcast %cst_109 : f32 to vector<2x16xf32>
    %279 = arith.addf %278, %277 : vector<2x16xf32>
    %280 = arith.divf %278, %279 : vector<2x16xf32>
    %281 = vector.extract_strided_slice %271 {offsets = [1, 0, 0], sizes = [1, 2, 16], strides = [1, 1, 1]} : vector<4x2x16xf32> to vector<1x2x16xf32>
    %282 = vector.shape_cast %281 : vector<1x2x16xf32> to vector<2x16xf32>
    %cst_110 = arith.constant dense<0.000000e+00> : vector<2x16xf32>
    %283 = tpu.matmul %258, %6, %cst_110 {dimension_numbers = #tpu.dot_dimension_numbers<[1], [0], [0], [1], [0, 0, 1, 1], [], []>} : vector<2x16xf32>, vector<16x16xf32>, vector<2x16xf32> -> vector<2x16xf32>
    %284 = arith.addf %282, %283 : vector<2x16xf32>
    %285 = arith.negf %284 : vector<2x16xf32>
    %286 = math.exp %285 : vector<2x16xf32>
    %cst_111 = arith.constant 1.000000e+00 : f32
    %287 = vector.broadcast %cst_111 : f32 to vector<2x16xf32>
    %288 = arith.addf %287, %286 : vector<2x16xf32>
    %289 = arith.divf %287, %288 : vector<2x16xf32>
    %290 = vector.extract_strided_slice %271 {offsets = [2, 0, 0], sizes = [1, 2, 16], strides = [1, 1, 1]} : vector<4x2x16xf32> to vector<1x2x16xf32>
    %291 = vector.shape_cast %290 : vector<1x2x16xf32> to vector<2x16xf32>
    %cst_112 = arith.constant dense<0.000000e+00> : vector<2x16xf32>
    %292 = tpu.matmul %258, %8, %cst_112 {dimension_numbers = #tpu.dot_dimension_numbers<[1], [0], [0], [1], [0, 0, 1, 1], [], []>} : vector<2x16xf32>, vector<16x16xf32>, vector<2x16xf32> -> vector<2x16xf32>
    %293 = arith.addf %291, %292 : vector<2x16xf32>
    %294 = math.tanh %293 : vector<2x16xf32>
    %295 = vector.extract_strided_slice %271 {offsets = [3, 0, 0], sizes = [1, 2, 16], strides = [1, 1, 1]} : vector<4x2x16xf32> to vector<1x2x16xf32>
    %296 = vector.shape_cast %295 : vector<1x2x16xf32> to vector<2x16xf32>
    %cst_113 = arith.constant dense<0.000000e+00> : vector<2x16xf32>
    %297 = tpu.matmul %258, %10, %cst_113 {dimension_numbers = #tpu.dot_dimension_numbers<[1], [0], [0], [1], [0, 0, 1, 1], [], []>} : vector<2x16xf32>, vector<16x16xf32>, vector<2x16xf32> -> vector<2x16xf32>
    %298 = arith.addf %296, %297 : vector<2x16xf32>
    %299 = arith.negf %298 : vector<2x16xf32>
    %300 = math.exp %299 : vector<2x16xf32>
    %cst_114 = arith.constant 1.000000e+00 : f32
    %301 = vector.broadcast %cst_114 : f32 to vector<2x16xf32>
    %302 = arith.addf %301, %300 : vector<2x16xf32>
    %303 = arith.divf %301, %302 : vector<2x16xf32>
    %304 = arith.mulf %289, %256 : vector<2x16xf32>
    %305 = arith.mulf %280, %294 : vector<2x16xf32>
    %306 = arith.addf %304, %305 : vector<2x16xf32>
    %307 = math.tanh %306 : vector<2x16xf32>
    %308 = arith.mulf %303, %307 : vector<2x16xf32>
    %c0_115 = arith.constant 0 : index
    %309 = arith.index_cast %267 : i32 to index
    %c0_116 = arith.constant 0 : index
    %c0_117 = arith.constant 0 : index
    %310 = vector.load %arg4[%c0_115, %309, %c0_116, %c0_117] : memref<1x8x2x16xf32, #tpu.memory_space<vmem>>, vector<1x1x2x16xf32>
    %311 = vector.shape_cast %310 : vector<1x1x2x16xf32> to vector<2x16xf32>
    %312 = vector.shape_cast %308 : vector<2x16xf32> to vector<1x1x2x16xf32>
    tpu.vector_store %arg4[%c0_115, %309, %c0_116, %c0_117], %312 {strides = array<i32>} : memref<1x8x2x16xf32, #tpu.memory_space<vmem>>, vector<1x1x2x16xf32>,
    %c6_i32 = arith.constant 6 : i32
    %c7_i32_118 = arith.constant 7 : i32
    %313 = arith.muli %arg0, %c7_i32_118 : i32
    %c2_i32_119 = arith.constant 2 : i32
    %314 = arith.muli %c2_i32_119, %arg0 : i32
    %c1_i32_120 = arith.constant 1 : i32
    %315 = arith.subi %c1_i32_120, %314 : i32
    %316 = arith.muli %315, %c6_i32 : i32
    %317 = arith.addi %313, %316 : i32
    %c4_i32_121 = arith.constant 4 : i32
    %318 = arith.muli %317, %c4_i32_121 : i32
    %c0_122 = arith.constant 0 : index
    %319 = arith.index_cast %318 : i32 to index
    %c0_123 = arith.constant 0 : index
    %c0_124 = arith.constant 0 : index
    %320 = vector.load %arg2[%c0_122, %319, %c0_123, %c0_124] : memref<1x32x2x16xf32, #tpu.memory_space<vmem>>, vector<1x4x2x16xf32>
    %321 = vector.shape_cast %320 : vector<1x4x2x16xf32> to vector<4x2x16xf32>
    %322 = vector.extract_strided_slice %321 {offsets = [0, 0, 0], sizes = [1, 2, 16], strides = [1, 1, 1]} : vector<4x2x16xf32> to vector<1x2x16xf32>
    %323 = vector.shape_cast %322 : vector<1x2x16xf32> to vector<2x16xf32>
    %cst_125 = arith.constant dense<0.000000e+00> : vector<2x16xf32>
    %324 = tpu.matmul %308, %4, %cst_125 {dimension_numbers = #tpu.dot_dimension_numbers<[1], [0], [0], [1], [0, 0, 1, 1], [], []>} : vector<2x16xf32>, vector<16x16xf32>, vector<2x16xf32> -> vector<2x16xf32>
    %325 = arith.addf %323, %324 : vector<2x16xf32>
    %326 = arith.negf %325 : vector<2x16xf32>
    %327 = math.exp %326 : vector<2x16xf32>
    %cst_126 = arith.constant 1.000000e+00 : f32
    %328 = vector.broadcast %cst_126 : f32 to vector<2x16xf32>
    %329 = arith.addf %328, %327 : vector<2x16xf32>
    %330 = arith.divf %328, %329 : vector<2x16xf32>
    %331 = vector.extract_strided_slice %321 {offsets = [1, 0, 0], sizes = [1, 2, 16], strides = [1, 1, 1]} : vector<4x2x16xf32> to vector<1x2x16xf32>
    %332 = vector.shape_cast %331 : vector<1x2x16xf32> to vector<2x16xf32>
    %cst_127 = arith.constant dense<0.000000e+00> : vector<2x16xf32>
    %333 = tpu.matmul %308, %6, %cst_127 {dimension_numbers = #tpu.dot_dimension_numbers<[1], [0], [0], [1], [0, 0, 1, 1], [], []>} : vector<2x16xf32>, vector<16x16xf32>, vector<2x16xf32> -> vector<2x16xf32>
    %334 = arith.addf %332, %333 : vector<2x16xf32>
    %335 = arith.negf %334 : vector<2x16xf32>
    %336 = math.exp %335 : vector<2x16xf32>
    %cst_128 = arith.constant 1.000000e+00 : f32
    %337 = vector.broadcast %cst_128 : f32 to vector<2x16xf32>
    %338 = arith.addf %337, %336 : vector<2x16xf32>
    %339 = arith.divf %337, %338 : vector<2x16xf32>
    %340 = vector.extract_strided_slice %321 {offsets = [2, 0, 0], sizes = [1, 2, 16], strides = [1, 1, 1]} : vector<4x2x16xf32> to vector<1x2x16xf32>
    %341 = vector.shape_cast %340 : vector<1x2x16xf32> to vector<2x16xf32>
    %cst_129 = arith.constant dense<0.000000e+00> : vector<2x16xf32>
    %342 = tpu.matmul %308, %8, %cst_129 {dimension_numbers = #tpu.dot_dimension_numbers<[1], [0], [0], [1], [0, 0, 1, 1], [], []>} : vector<2x16xf32>, vector<16x16xf32>, vector<2x16xf32> -> vector<2x16xf32>
    %343 = arith.addf %341, %342 : vector<2x16xf32>
    %344 = math.tanh %343 : vector<2x16xf32>
    %345 = vector.extract_strided_slice %321 {offsets = [3, 0, 0], sizes = [1, 2, 16], strides = [1, 1, 1]} : vector<4x2x16xf32> to vector<1x2x16xf32>
    %346 = vector.shape_cast %345 : vector<1x2x16xf32> to vector<2x16xf32>
    %cst_130 = arith.constant dense<0.000000e+00> : vector<2x16xf32>
    %347 = tpu.matmul %308, %10, %cst_130 {dimension_numbers = #tpu.dot_dimension_numbers<[1], [0], [0], [1], [0, 0, 1, 1], [], []>} : vector<2x16xf32>, vector<16x16xf32>, vector<2x16xf32> -> vector<2x16xf32>
    %348 = arith.addf %346, %347 : vector<2x16xf32>
    %349 = arith.negf %348 : vector<2x16xf32>
    %350 = math.exp %349 : vector<2x16xf32>
    %cst_131 = arith.constant 1.000000e+00 : f32
    %351 = vector.broadcast %cst_131 : f32 to vector<2x16xf32>
    %352 = arith.addf %351, %350 : vector<2x16xf32>
    %353 = arith.divf %351, %352 : vector<2x16xf32>
    %354 = arith.mulf %339, %306 : vector<2x16xf32>
    %355 = arith.mulf %330, %344 : vector<2x16xf32>
    %356 = arith.addf %354, %355 : vector<2x16xf32>
    %357 = math.tanh %356 : vector<2x16xf32>
    %358 = arith.mulf %353, %357 : vector<2x16xf32>
    %c0_132 = arith.constant 0 : index
    %359 = arith.index_cast %317 : i32 to index
    %c0_133 = arith.constant 0 : index
    %c0_134 = arith.constant 0 : index
    %360 = vector.load %arg4[%c0_132, %359, %c0_133, %c0_134] : memref<1x8x2x16xf32, #tpu.memory_space<vmem>>, vector<1x1x2x16xf32>
    %361 = vector.shape_cast %360 : vector<1x1x2x16xf32> to vector<2x16xf32>
    %362 = vector.shape_cast %358 : vector<2x16xf32> to vector<1x1x2x16xf32>
    tpu.vector_store %arg4[%c0_132, %359, %c0_133, %c0_134], %362 {strides = array<i32>} : memref<1x8x2x16xf32, #tpu.memory_space<vmem>>, vector<1x1x2x16xf32>,
    %c7_i32_135 = arith.constant 7 : i32
    %c7_i32_136 = arith.constant 7 : i32
    %363 = arith.muli %arg0, %c7_i32_136 : i32
    %c2_i32_137 = arith.constant 2 : i32
    %364 = arith.muli %c2_i32_137, %arg0 : i32
    %c1_i32_138 = arith.constant 1 : i32
    %365 = arith.subi %c1_i32_138, %364 : i32
    %366 = arith.muli %365, %c7_i32_135 : i32
    %367 = arith.addi %363, %366 : i32
    %c4_i32_139 = arith.constant 4 : i32
    %368 = arith.muli %367, %c4_i32_139 : i32
    %c0_140 = arith.constant 0 : index
    %369 = arith.index_cast %368 : i32 to index
    %c0_141 = arith.constant 0 : index
    %c0_142 = arith.constant 0 : index
    %370 = vector.load %arg2[%c0_140, %369, %c0_141, %c0_142] : memref<1x32x2x16xf32, #tpu.memory_space<vmem>>, vector<1x4x2x16xf32>
    %371 = vector.shape_cast %370 : vector<1x4x2x16xf32> to vector<4x2x16xf32>
    %372 = vector.extract_strided_slice %371 {offsets = [0, 0, 0], sizes = [1, 2, 16], strides = [1, 1, 1]} : vector<4x2x16xf32> to vector<1x2x16xf32>
    %373 = vector.shape_cast %372 : vector<1x2x16xf32> to vector<2x16xf32>
    %cst_143 = arith.constant dense<0.000000e+00> : vector<2x16xf32>
    %374 = tpu.matmul %358, %4, %cst_143 {dimension_numbers = #tpu.dot_dimension_numbers<[1], [0], [0], [1], [0, 0, 1, 1], [], []>} : vector<2x16xf32>, vector<16x16xf32>, vector<2x16xf32> -> vector<2x16xf32>
    %375 = arith.addf %373, %374 : vector<2x16xf32>
    %376 = arith.negf %375 : vector<2x16xf32>
    %377 = math.exp %376 : vector<2x16xf32>
    %cst_144 = arith.constant 1.000000e+00 : f32
    %378 = vector.broadcast %cst_144 : f32 to vector<2x16xf32>
    %379 = arith.addf %378, %377 : vector<2x16xf32>
    %380 = arith.divf %378, %379 : vector<2x16xf32>
    %381 = vector.extract_strided_slice %371 {offsets = [1, 0, 0], sizes = [1, 2, 16], strides = [1, 1, 1]} : vector<4x2x16xf32> to vector<1x2x16xf32>
    %382 = vector.shape_cast %381 : vector<1x2x16xf32> to vector<2x16xf32>
    %cst_145 = arith.constant dense<0.000000e+00> : vector<2x16xf32>
    %383 = tpu.matmul %358, %6, %cst_145 {dimension_numbers = #tpu.dot_dimension_numbers<[1], [0], [0], [1], [0, 0, 1, 1], [], []>} : vector<2x16xf32>, vector<16x16xf32>, vector<2x16xf32> -> vector<2x16xf32>
    %384 = arith.addf %382, %383 : vector<2x16xf32>
    %385 = arith.negf %384 : vector<2x16xf32>
    %386 = math.exp %385 : vector<2x16xf32>
    %cst_146 = arith.constant 1.000000e+00 : f32
    %387 = vector.broadcast %cst_146 : f32 to vector<2x16xf32>
    %388 = arith.addf %387, %386 : vector<2x16xf32>
    %389 = arith.divf %387, %388 : vector<2x16xf32>
    %390 = vector.extract_strided_slice %371 {offsets = [2, 0, 0], sizes = [1, 2, 16], strides = [1, 1, 1]} : vector<4x2x16xf32> to vector<1x2x16xf32>
    %391 = vector.shape_cast %390 : vector<1x2x16xf32> to vector<2x16xf32>
    %cst_147 = arith.constant dense<0.000000e+00> : vector<2x16xf32>
    %392 = tpu.matmul %358, %8, %cst_147 {dimension_numbers = #tpu.dot_dimension_numbers<[1], [0], [0], [1], [0, 0, 1, 1], [], []>} : vector<2x16xf32>, vector<16x16xf32>, vector<2x16xf32> -> vector<2x16xf32>
    %393 = arith.addf %391, %392 : vector<2x16xf32>
    %394 = math.tanh %393 : vector<2x16xf32>
    %395 = vector.extract_strided_slice %371 {offsets = [3, 0, 0], sizes = [1, 2, 16], strides = [1, 1, 1]} : vector<4x2x16xf32> to vector<1x2x16xf32>
    %396 = vector.shape_cast %395 : vector<1x2x16xf32> to vector<2x16xf32>
    %cst_148 = arith.constant dense<0.000000e+00> : vector<2x16xf32>
    %397 = tpu.matmul %358, %10, %cst_148 {dimension_numbers = #tpu.dot_dimension_numbers<[1], [0], [0], [1], [0, 0, 1, 1], [], []>} : vector<2x16xf32>, vector<16x16xf32>, vector<2x16xf32> -> vector<2x16xf32>
    %398 = arith.addf %396, %397 : vector<2x16xf32>
    %399 = arith.negf %398 : vector<2x16xf32>
    %400 = math.exp %399 : vector<2x16xf32>
    %cst_149 = arith.constant 1.000000e+00 : f32
    %401 = vector.broadcast %cst_149 : f32 to vector<2x16xf32>
    %402 = arith.addf %401, %400 : vector<2x16xf32>
    %403 = arith.divf %401, %402 : vector<2x16xf32>
    %404 = arith.mulf %389, %356 : vector<2x16xf32>
    %405 = arith.mulf %380, %394 : vector<2x16xf32>
    %406 = arith.addf %404, %405 : vector<2x16xf32>
    %407 = math.tanh %406 : vector<2x16xf32>
    %408 = arith.mulf %403, %407 : vector<2x16xf32>
    %c0_150 = arith.constant 0 : index
    %409 = arith.index_cast %367 : i32 to index
    %c0_151 = arith.constant 0 : index
    %c0_152 = arith.constant 0 : index
    %410 = vector.load %arg4[%c0_150, %409, %c0_151, %c0_152] : memref<1x8x2x16xf32, #tpu.memory_space<vmem>>, vector<1x1x2x16xf32>
    %411 = vector.shape_cast %410 : vector<1x1x2x16xf32> to vector<2x16xf32>
    %412 = vector.shape_cast %408 : vector<2x16xf32> to vector<1x1x2x16xf32>
    tpu.vector_store %arg4[%c0_150, %409, %c0_151, %c0_152], %412 {strides = array<i32>} : memref<1x8x2x16xf32, #tpu.memory_space<vmem>>, vector<1x1x2x16xf32>,
    %c8_i32 = arith.constant 8 : i32
    %c0_153 = arith.constant 0 : index
    %c0_154 = arith.constant 0 : index
    %413 = vector.load %arg7[%c0_153, %c0_154] : memref<2x16xf32, #tpu.memory_space<vmem>>, vector<2x16xf32>
    tpu.vector_store %arg7[%c0_153, %c0_154], %408 {strides = array<i32>} : memref<2x16xf32, #tpu.memory_space<vmem>>, vector<2x16xf32>,
    %c0_155 = arith.constant 0 : index
    %c0_156 = arith.constant 0 : index
    %414 = vector.load %arg8[%c0_155, %c0_156] : memref<2x16xf32, #tpu.memory_space<vmem>>, vector<2x16xf32>
    tpu.vector_store %arg8[%c0_155, %c0_156], %406 {strides = array<i32>} : memref<2x16xf32, #tpu.memory_space<vmem>>, vector<2x16xf32>,
    %c0_i32_157 = arith.constant 0 : i32
    %415 = arith.cmpi eq, %arg1, %c0_i32_157 : i32
    %416 = arith.extui %415 : i1 to i32
    %c0_i32_158 = arith.constant 0 : i32
    %417 = arith.cmpi ne, %416, %c0_i32_158 : i32
    scf.if %417 {
      %c0_159 = arith.constant 0 : index
      %c0_160 = arith.constant 0 : index
      %c0_161 = arith.constant 0 : index
      %418 = vector.load %arg5[%c0_159, %c0_160, %c0_161] : memref<1x2x16xf32, #tpu.memory_space<vmem>>, vector<1x2x16xf32>
      %419 = vector.shape_cast %418 : vector<1x2x16xf32> to vector<2x16xf32>
      %420 = vector.shape_cast %408 : vector<2x16xf32> to vector<1x2x16xf32>
      tpu.vector_store %arg5[%c0_159, %c0_160, %c0_161], %420 {strides = array<i32>} : memref<1x2x16xf32, #tpu.memory_space<vmem>>, vector<1x2x16xf32>,
      %c0_162 = arith.constant 0 : index
      %c0_163 = arith.constant 0 : index
      %c0_164 = arith.constant 0 : index
      %421 = vector.load %arg6[%c0_162, %c0_163, %c0_164] : memref<1x2x16xf32, #tpu.memory_space<vmem>>, vector<1x2x16xf32>
      %422 = vector.shape_cast %421 : vector<1x2x16xf32> to vector<2x16xf32>
      %423 = vector.shape_cast %406 : vector<2x16xf32> to vector<1x2x16xf32>
      tpu.vector_store %arg6[%c0_162, %c0_163, %c0_164], %423 {strides = array<i32>} : memref<1x2x16xf32, #tpu.memory_space<vmem>>, vector<1x2x16xf32>,
    } else {
    }
    return
  }
  func.func @transform_0(%arg0: i32, %arg1: i32) -> (i32, i32, i32, i32) {
    %c0_i32 = arith.constant 0 : i32
    %0 = arith.muli %arg0, %c0_i32 : i32
    %c2_i32 = arith.constant 2 : i32
    %1 = arith.muli %c2_i32, %arg0 : i32
    %c1_i32 = arith.constant 1 : i32
    %2 = arith.subi %c1_i32, %1 : i32
    %3 = arith.muli %2, %arg1 : i32
    %4 = arith.addi %0, %3 : i32
    %c0_i32_0 = arith.constant 0 : i32
    %c0_i32_1 = arith.constant 0 : i32
    %c0_i32_2 = arith.constant 0 : i32
    return %arg0, %4, %c0_i32_0, %c0_i32_1 : i32, i32, i32, i32
  }
  func.func @transform_1(%arg0: i32, %arg1: i32) -> (i32, i32, i32, i32) {
    %c0_i32 = arith.constant 0 : i32
    %c0_i32_0 = arith.constant 0 : i32
    %c0_i32_1 = arith.constant 0 : i32
    %c0_i32_2 = arith.constant 0 : i32
    return %arg0, %c0_i32, %c0_i32_0, %c0_i32_1 : i32, i32, i32, i32
  }
  func.func @transform_2(%arg0: i32, %arg1: i32) -> (i32, i32, i32, i32) {
    %c0_i32 = arith.constant 0 : i32
    %0 = arith.muli %arg0, %c0_i32 : i32
    %c2_i32 = arith.constant 2 : i32
    %1 = arith.muli %c2_i32, %arg0 : i32
    %c1_i32 = arith.constant 1 : i32
    %2 = arith.subi %c1_i32, %1 : i32
    %3 = arith.muli %2, %arg1 : i32
    %4 = arith.addi %0, %3 : i32
    %c0_i32_0 = arith.constant 0 : i32
    %c0_i32_1 = arith.constant 0 : i32
    %c0_i32_2 = arith.constant 0 : i32
    return %arg0, %4, %c0_i32_0, %c0_i32_1 : i32, i32, i32, i32
  }
  func.func @transform_3(%arg0: i32, %arg1: i32) -> (i32, i32, i32) {
    %c0_i32 = arith.constant 0 : i32
    %c0_i32_0 = arith.constant 0 : i32
    %c0_i32_1 = arith.constant 0 : i32
    return %arg0, %c0_i32, %c0_i32_0 : i32, i32, i32
  }
  func.func @transform_4(%arg0: i32, %arg1: i32) -> (i32, i32, i32) {
    %c0_i32 = arith.constant 0 : i32
    %c0_i32_0 = arith.constant 0 : i32
    %c0_i32_1 = arith.constant 0 : i32
    return %arg0, %c0_i32, %c0_i32_0 : i32, i32, i32
  }
}

</mosaic_0001>

<llo_original>
// kernel: encoder_forward.4
$region0: #{encoder_forward.4}
  #allocation0 [shape = 'u32[]', space=smem, size = 0x4, offset = 0x4, fixed_abs, tag = 'smem constant byte address 0x4 - core index']
  #allocation1 [shape = 'u32[144,128]{1,0:T(1,128)}', space=vmem, size = 0x12000, scoped, tag = 'internal scratch']
  #allocation2 [shape = 'f32[2,16]{1,0:T(2,128)}', space=vmem, size = 0x400, scoped, tag = 'scratch operand']
  #allocation3 [shape = 'f32[2,16]{1,0:T(2,128)}', space=vmem, size = 0x400, scoped, tag = 'scratch operand']
  %s0 = inlined_call_operand.vmem [shape: f32[2,32,2,16], index: 0, kind: input, shape index: {}]
  %s1 = inlined_call_operand.vmem [shape: f32[2,4,16,16], index: 1, kind: input, shape index: {}]
  %s2 = inlined_call_operand.vmem [shape: f32[2,8,2,16], index: 2, kind: output, shape index: {0}]
  %s3 = inlined_call_operand.vmem [shape: f32[2,2,16], index: 3, kind: output, shape index: {1}]
  %s4 = inlined_call_operand.vmem [shape: f32[2,2,16], index: 4, kind: output, shape index: {2}]
  %5 = xla_tuple %s2, %s3, %s4
  %s6 = sld [smem:[#allocation0]]
  $region65: #{encoder_forward.4} parent=0
    _
  %s8 = ssub.s32 1, %s6
  %s9 = scalar_select 0, %s8, %s6
  loop: start=0, step=1, limit=4
  $region2: #{encoder_forward.4} parent=0 // loop_pre_header
    _
  $region3: #{encoder_forward.4} parent=0 // loop_header
    %s11 = sphi 0, %s15
    %p12 = scmp.ge.s32.totalorder %s11, 4
    %s18 = sphi 0, %s30
    %s19 = sphi 0, %s26
    %s20 = sphi 0, %s18
    %s21 = sphi 0, %s19
    %s22 = sphi 0, %s20
    %s23 = sphi 0, %s21
    %s41 = sphi 0, %s43
    %s44 = sphi 0, %s41
    %s45 = sphi 0, %s44
    %s61 = sphi 0, %s45
    %s67 = sphi 0, %s69
    %s70 = sphi 0, %s67
    %s71 = sphi 0, %s70
    %s87 = sphi 0, %s71
    %s101 = sphi 0, %s103
    %s104 = sphi 0, %s101
    %s105 = sphi 0, %s104
    %s121 = sphi 0, %s105
    %s127 = sphi 0, %s129
    %s130 = sphi 0, %s127
    %s131 = sphi 0, %s130
    %s147 = sphi 0, %s131
    %s153 = sphi 0, %s155
    %s156 = sphi 0, %s153
    %s157 = sphi 0, %s156
    %s173 = sphi 0, %s157
  $region4: #{encoder_forward.4} parent=0 // loop_header_branch
    %14 = sbr.rel (%p12) target = $region8
  $region5: #{encoder_forward.4} parent=0 // loop_body
    %s16 = ssub.s32 %s11, 1
    %s17 = ssub.s32 %s11, 2
    %s24 = sadd.s32 1, %s19
    %p25 = scmp.ge.s32.totalorder %s24, 1
    %s26 = scalar_select %p25, 0, %s24
    %s27 = sadd.s32 1, %s18
    %s28 = scalar_select %p25, %s27, %s18
    %p29 = scmp.ge.s32.totalorder %s28, 2
    %s30 = scalar_select %p29, 0, %s28
    %s31 = smul.u32 %s18, 2
    %s32 = ssub.s32 1, %s31
    %s33 = smul.u32 %s32, %s19
    %s34 = smul.u32 %s30, 2
    %s35 = ssub.s32 1, %s34
    %s36 = smul.u32 %s35, %s26
    %s37 = ssub.s32 %s18, %s30
    %s38 = ssub.s32 %s33, %s36
    %s39 = sor.u32 %s37, %s38
    %p40 = scmp.eq.s32.totalorder %s39, 0
    %s42 = sadd.s32 %s41, 1
    %s43 = scalar_select %p40, %s41, %s42
    %p46 = pneg %p40
    %p47 = scmp.eq.s32.totalorder %s11, 1
    %p48 = por %p46, %p47
    %p49 = scmp.ne.s32.totalorder %s41, %s44
    %p50 = scmp.eq.s32.totalorder %s11, 0
    %p51 = por %p49, %p50
    %p52 = scmp.ne.s32.totalorder %s41, %s44
    %p53 = scmp.eq.s32.totalorder %s16, 1
    %p54 = por %p52, %p53
    %p55 = scmp.ne.s32.totalorder %s44, %s45
    %p56 = scmp.eq.s32.totalorder %s16, 0
    %p57 = por %p55, %p56
    %p58 = scmp.ne.s32.totalorder %s44, %s45
    %p59 = scmp.eq.s32.totalorder %s17, 1
    %p60 = por %p58, %p59
    %p62 = scmp.ne.s32.totalorder %s45, %s61
    %p63 = scmp.eq.s32.totalorder %s17, 0
    %p64 = por %p62, %p63
    %s65 = ssub.s32 %s18, %s30
    %p66 = scmp.eq.s32.totalorder %s65, 0
    %s68 = sadd.s32 %s67, 1
    %s69 = scalar_select %p66, %s67, %s68
    %p72 = pneg %p66
    %p73 = scmp.eq.s32.totalorder %s11, 1
    %p74 = por %p72, %p73
    %p75 = scmp.ne.s32.totalorder %s67, %s70
    %p76 = scmp.eq.s32.totalorder %s11, 0
    %p77 = por %p75, %p76
    %p78 = scmp.ne.s32.totalorder %s67, %s70
    %p79 = scmp.eq.s32.totalorder %s16, 1
    %p80 = por %p78, %p79
    %p81 = scmp.ne.s32.totalorder %s70, %s71
    %p82 = scmp.eq.s32.totalorder %s16, 0
    %p83 = por %p81, %p82
    %p84 = scmp.ne.s32.totalorder %s70, %s71
    %p85 = scmp.eq.s32.totalorder %s17, 1
    %p86 = por %p84, %p85
    %p88 = scmp.ne.s32.totalorder %s71, %s87
    %p89 = scmp.eq.s32.totalorder %s17, 0
    %p90 = por %p88, %p89
    %s91 = smul.u32 %s18, 2
    %s92 = ssub.s32 1, %s91
    %s93 = smul.u32 %s92, %s19
    %s94 = smul.u32 %s30, 2
    %s95 = ssub.s32 1, %s94
    %s96 = smul.u32 %s95, %s26
    %s97 = ssub.s32 %s18, %s30
    %s98 = ssub.s32 %s93, %s96
    %s99 = sor.u32 %s97, %s98
    %p100 = scmp.eq.s32.totalorder %s99, 0
    %s102 = sadd.s32 %s101, 1
    %s103 = scalar_select %p100, %s101, %s102
    %p106 = pneg %p100
    %p107 = scmp.eq.s32.totalorder %s11, 1
    %p108 = por %p106, %p107
    %p109 = scmp.ne.s32.totalorder %s101, %s104
    %p110 = scmp.eq.s32.totalorder %s11, 0
    %p111 = por %p109, %p110
    %p112 = scmp.ne.s32.totalorder %s101, %s104
    %p113 = scmp.eq.s32.totalorder %s16, 1
    %p114 = por %p112, %p113
    %p115 = scmp.ne.s32.totalorder %s104, %s105
    %p116 = scmp.eq.s32.totalorder %s16, 0
    %p117 = por %p115, %p116
    %p118 = scmp.ne.s32.totalorder %s104, %s105
    %p119 = scmp.eq.s32.totalorder %s17, 1
    %p120 = por %p118, %p119
    %p122 = scmp.ne.s32.totalorder %s105, %s121
    %p123 = scmp.eq.s32.totalorder %s17, 0
    %p124 = por %p122, %p123
    %s125 = ssub.s32 %s18, %s30
    %p126 = scmp.eq.s32.totalorder %s125, 0
    %s128 = sadd.s32 %s127, 1
    %s129 = scalar_select %p126, %s127, %s128
    %p132 = pneg %p126
    %p133 = scmp.eq.s32.totalorder %s11, 1
    %p134 = por %p132, %p133
    %p135 = scmp.ne.s32.totalorder %s127, %s130
    %p136 = scmp.eq.s32.totalorder %s11, 0
    %p137 = por %p135, %p136
    %p138 = scmp.ne.s32.totalorder %s127, %s130
    %p139 = scmp.eq.s32.totalorder %s16, 1
    %p140 = por %p138, %p139
    %p141 = scmp.ne.s32.totalorder %s130, %s131
    %p142 = scmp.eq.s32.totalorder %s16, 0
    %p143 = por %p141, %p142
    %p144 = scmp.ne.s32.totalorder %s130, %s131
    %p145 = scmp.eq.s32.totalorder %s17, 1
    %p146 = por %p144, %p145
    %p148 = scmp.ne.s32.totalorder %s131, %s147
    %p149 = scmp.eq.s32.totalorder %s17, 0
    %p150 = por %p148, %p149
    %s151 = ssub.s32 %s18, %s30
    %p152 = scmp.eq.s32.totalorder %s151, 0
    %s154 = sadd.s32 %s153, 1
    %s155 = scalar_select %p152, %s153, %s154
    %p158 = pneg %p152
    %p159 = scmp.eq.s32.totalorder %s11, 1
    %p160 = por %p158, %p159
    %p161 = scmp.ne.s32.totalorder %s153, %s156
    %p162 = scmp.eq.s32.totalorder %s11, 0
    %p163 = por %p161, %p162
    %p164 = scmp.ne.s32.totalorder %s153, %s156
    %p165 = scmp.eq.s32.totalorder %s16, 1
    %p166 = por %p164, %p165
    %p167 = scmp.ne.s32.totalorder %s156, %s157
    %p168 = scmp.eq.s32.totalorder %s16, 0
    %p169 = por %p167, %p168
    %p170 = scmp.ne.s32.totalorder %s156, %s157
    %p171 = scmp.eq.s32.totalorder %s17, 1
    %p172 = por %p170, %p171
    %p174 = scmp.ne.s32.totalorder %s157, %s173
    %p175 = scmp.eq.s32.totalorder %s17, 0
    %p176 = por %p174, %p175
    %p177 = scmp.le.s32.totalorder 1, %s11
    %p178 = scmp.lt.s32.totalorder %s11, 3
    %p179 = pnand %p177, %p178
    %p180 = pneg %p179
    // Predicated region
    $region9: #{encoder_forward.4} parent=5 // pred_check
      _
    $region10: #{encoder_forward.4} parent=5 // pred_check_branch
      %182 = sbr.rel (%p179) target = $region12
    $region11: #{encoder_forward.4} parent=5 // pred_region
      %s183 = ssub.s32 %s11, 1
    $region12: #{encoder_forward.4} parent=5 // pred_fallthru
      _
    %p184 = scmp.lt.s32.totalorder %s11, 2
    // Predicated region
    $region13: #{encoder_forward.4} parent=5 // pred_check
      %p185 = pneg %p184
    $region14: #{encoder_forward.4} parent=5 // pred_check_branch
      %187 = sbr.rel (%p185) target = $region16
    $region15: #{encoder_forward.4} parent=5 // pred_region
      // Predicated region
      $region17: #{encoder_forward.4} parent=15 // pred_check
        %p188 = pneg %p51
      $region18: #{encoder_forward.4} parent=15 // pred_check_branch
        %190 = sbr.rel (%p188) target = $region20
      $region19: #{encoder_forward.4} parent=15 // pred_region
        %s191 = smul.u32 %s18, 2
        %s192 = ssub.s32 1, %s191
        %s193 = smul.u32 %s192, %s19
        %s194 = smul.u32 32, %s193
        %p195 = scmp.lt.s32.totalorder %s18, 1
        %s196 = scalar_select %p195, %s18, 1
        %p197 = scmp.lt.s32.totalorder %s194, 31
        %s198 = scalar_select %p197, %s194, 31
        %s199 = smul.addr %s196, 32
        %s200 = sadd.s32 %s198, %s199
        %s201 = smul.addr %s200, 2
        %s202 = scalar_lea.vmem %s0, %s201
        %s203 = smul.u32 %s18, 2
        %s204 = ssub.s32 1, %s203
        %s205 = smul.u32 %s204, %s19
        %s206 = smul.u32 32, %s205
      $region20: #{encoder_forward.4} parent=15 // pred_fallthru
        _
      // Predicated region
      $region21: #{encoder_forward.4} parent=15 // pred_check
        %p207 = pneg %p77
      $region22: #{encoder_forward.4} parent=15 // pred_check_branch
        %209 = sbr.rel (%p207) target = $region24
      $region23: #{encoder_forward.4} parent=15 // pred_region
        %p210 = scmp.lt.s32.totalorder %s18, 1
        %s211 = scalar_select %p210, %s18, 1
        %s212 = smul.addr %s211, 8
        %s213 = smul.addr %s212, 8
        %s214 = scalar_lea.vmem %s1, %s213
      $region24: #{encoder_forward.4} parent=15 // pred_fallthru
        _
    $region16: #{encoder_forward.4} parent=5 // pred_fallthru
      _
    %p215 = scmp.le.s32.totalorder 1, %s11
    %p216 = scmp.lt.s32.totalorder %s11, 3
    %p217 = pnand %p215, %p216
    %p218 = pneg %p217
    // Predicated region
    $region25: #{encoder_forward.4} parent=5 // pred_check
      _
    $region26: #{encoder_forward.4} parent=5 // pred_check_branch
      %220 = sbr.rel (%p217) target = $region28
    $region27: #{encoder_forward.4} parent=5 // pred_region
      %s221 = ssub.s32 %s11, 1
      %s222 = smul.u32 %s20, 2
      %s223 = ssub.s32 1, %s222
      %s224 = smul.u32 %s223, %s21
      %s225 = smul.u32 32, %s224
      %p226 = scmp.lt.s32.totalorder %s20, 1
      %s227 = scalar_select %p226, %s20, 1
      %p228 = scmp.lt.s32.totalorder %s225, 31
      %s229 = scalar_select %p228, %s225, 31
      %s230 = smul.addr %s227, 32
      %s231 = sadd.s32 %s229, %s230
      %s232 = smul.addr %s231, 2
      %s233 = scalar_lea.vmem %s0, %s232
      %p234 = pneg %p57
      %p235 = pneg %p54
      %p236 = scmp.lt.s32.totalorder %s20, 1
      %s237 = scalar_select %p236, %s20, 1
      %s238 = smul.addr %s237, 8
      %s239 = smul.addr %s238, 8
      %s240 = scalar_lea.vmem %s1, %s239
      %p241 = pneg %p83
      %p242 = pneg %p80
      %p243 = pneg %p117
      %p244 = pneg %p114
      %s245 = smul.u32 %s20, 2
      %s246 = ssub.s32 1, %s245
      %s247 = smul.u32 %s246, %s21
      %s248 = smul.u32 8, %s247
      %p249 = scmp.lt.s32.totalorder %s20, 1
      %s250 = scalar_select %p249, %s20, 1
      %p251 = scmp.lt.s32.totalorder %s248, 7
      %s252 = scalar_select %p251, %s248, 7
      %s253 = smul.addr %s250, 8
      %s254 = sadd.s32 %s252, %s253
      %s255 = smul.addr %s254, 2
      %s256 = scalar_lea.vmem %s2, %s255
      %p257 = pneg %p143
      %p258 = pneg %p140
      %p259 = scmp.lt.s32.totalorder %s20, 1
      %s260 = scalar_select %p259, %s20, 1
      %s261 = smul.addr %s260, 2
      %s262 = scalar_lea.vmem %s3, %s261
      %p263 = pneg %p169
      %p264 = pneg %p166
      %p265 = scmp.lt.s32.totalorder %s20, 1
      %s266 = scalar_select %p265, %s20, 1
      %s267 = smul.addr %s266, 2
      %s268 = scalar_lea.vmem %s4, %s267
      %s269 = smul.u32 %s20, 2
      %s270 = ssub.s32 1, %s269
      %s271 = smul.u32 %s270, %s21
      %s272 = smul.u32 32, %s271
      %p273 = scmp.lt.s32.totalorder %s20, 1
      %s274 = scalar_select %p273, %s20, 1
      %p275 = scmp.lt.s32.totalorder %s272, 31
      %s276 = scalar_select %p275, %s272, 31
      %s277 = smul.addr %s274, 32
      %s278 = sadd.s32 %s276, %s277
      %s279 = smul.addr %s278, 2
      %s280 = scalar_lea.vmem %s0, %s279
      %s281 = smul.u32 %s20, 2
      %s282 = ssub.s32 1, %s281
      %s283 = smul.u32 %s282, %s21
      %s284 = smul.u32 32, %s283
      %p285 = scmp.lt.s32.totalorder %s20, 1
      %s286 = scalar_select %p285, %s20, 1
      %s287 = smul.addr %s286, 8
      %s288 = smul.addr %s287, 8
      %s289 = scalar_lea.vmem %s1, %s288
      %s290 = smul.u32 %s20, 2
      %s291 = ssub.s32 1, %s290
      %s292 = smul.u32 %s291, %s21
      %s293 = smul.u32 8, %s292
      %p294 = scmp.lt.s32.totalorder %s20, 1
      %s295 = scalar_select %p294, %s20, 1
      %p296 = scmp.lt.s32.totalorder %s293, 7
      %s297 = scalar_select %p296, %s293, 7
      %s298 = smul.addr %s295, 8
      %s299 = sadd.s32 %s297, %s298
      %s300 = smul.addr %s299, 2
      %s301 = scalar_lea.vmem %s2, %s300
      %s302 = smul.u32 %s20, 2
      %s303 = ssub.s32 1, %s302
      %s304 = smul.u32 %s303, %s21
      %s305 = smul.u32 8, %s304
      %p306 = scmp.lt.s32.totalorder %s20, 1
      %s307 = scalar_select %p306, %s20, 1
      %s308 = smul.addr %s307, 2
      %s309 = scalar_lea.vmem %s3, %s308
      %p310 = scmp.lt.s32.totalorder %s20, 1
      %s311 = scalar_select %p310, %s20, 1
      %s312 = smul.addr %s311, 2
      %s313 = scalar_lea.vmem %s4, %s312
      %p314 = scmp.eq.s32.totalorder %s21, 0
      // Predicated region
      $region29: #{encoder_forward.4} parent=27 // pred_check
        %p315 = pneg %p314
      $region30: #{encoder_forward.4} parent=27 // pred_check_branch
        %317 = sbr.rel (%p315) target = $region32
      $region31: #{encoder_forward.4} parent=27 // pred_region
        %vm318 = vcmask 123904
        %319 = vst.msk [vmem:[#allocation2] sm:$0x3] %vm318, 0.0
        %320 = vst.msk [vmem:[#allocation3] sm:$0x3] %vm318, 0.0
      $region32: #{encoder_forward.4} parent=27 // pred_fallthru
        _
      %v321 = vld [vmem:[%s289] sm:$0xff]
      %v322 = vld [vmem:[%s289 + $0x8] sm:$0xff]
      %s323 = scalar_lea.vmem %s289, 16
      %v324 = vld [vmem:[%s323] sm:$0xff]
      %v325 = vld [vmem:[%s323 + $0x8] sm:$0xff]
      %s326 = scalar_lea.vmem %s289, 32
      %v327 = vld [vmem:[%s326] sm:$0xff]
      %v328 = vld [vmem:[%s326 + $0x8] sm:$0xff]
      %s329 = scalar_lea.vmem %s289, 48
      %v330 = vld [vmem:[%s329] sm:$0xff]
      %v331 = vld [vmem:[%s329 + $0x8] sm:$0xff]
      %v332 = vld [vmem:[#allocation2] sm:$0x3]
      %v333 = vld [vmem:[#allocation3] sm:$0x3]
      %s334 = smul.u32 %s20, 7
      %s335 = smul.u32 %s20, 28
      %s336 = smul.u32 %s335, 2
      %s337 = scalar_lea.vmem %s280, %s336
      %v338 = vld [vmem:[%s337] sm:$0x3]
      %v339 = vld [vmem:[%s337 + $0x2] sm:$0x3]
      %v340 = vld [vmem:[%s337 + $0x4] sm:$0x3]
      %v341 = vld [vmem:[%s337 + $0x6] sm:$0x3]
      %vm342 = vcmask 130048
      %v344 = vsel %vm342, %v332, 0
      %346 = vmatprep.subr.mxu0 0.0
      %347 = vmatpush1.msra.mxu0 %v321
      %348 = vmatprep.subr.mxu0 0.0
      %349 = vmatpush1.msra.mxu0 %v322
      %350 = vmatprep.subr.mxu0 0.0
      %351 = vmatpush1.msra.mxu0 0.0
      %352 = vmatprep.subr.mxu0 0.0
      %353 = vmatpush1.msra.mxu0 0.0
      %354 = vmatprep.subr.mxu0 0.0
      %355 = vmatpush1.msra.mxu0 0.0
      %356 = vmatprep.subr.mxu0 0.0
      %357 = vmatpush1.msra.mxu0 0.0
      %358 = vmatprep.subr.mxu0 0.0
      %359 = vmatpush1.msra.mxu0 0.0
      %360 = vmatprep.subr.mxu0 0.0
      %361 = vmatpush1.msra.mxu0 0.0
      %362 = vmatprep.subr.mxu0 0.0
      %363 = vmatpush1.msra.mxu0 0.0
      %364 = vmatprep.subr.mxu0 0.0
      %365 = vmatpush1.msra.mxu0 0.0
      %366 = vmatprep.subr.mxu0 0.0
      %367 = vmatpush1.msra.mxu0 0.0
      %368 = vmatprep.subr.mxu0 0.0
      %369 = vmatpush1.msra.mxu0 0.0
      %370 = vmatprep.subr.mxu0 0.0
      %371 = vmatpush1.msra.mxu0 0.0
      %372 = vmatprep.subr.mxu0 0.0
      %373 = vmatpush1.msra.mxu0 0.0
      %374 = vmatprep.subr.mxu0 0.0
      %375 = vmatpush1.msra.mxu0 0.0
      %376 = vmatprep.subr.mxu0 0.0
      %377 = vmatpush1.msra.mxu0 0.0
      %378 = vmatprep.subr.mxu0 0.0
      %379 = vmatpush1.msra.mxu0 0.0
      %380 = vmatprep.subr.mxu0 0.0
      %381 = vmatpush1.msra.mxu0 0.0
      %382 = vmatprep.subr.mxu0 0.0
      %383 = vmatpush1.msra.mxu0 0.0
      %384 = vmatprep.subr.mxu0 0.0
      %385 = vmatpush1.msra.mxu0 0.0
      %386 = vmatprep.subr.mxu0 0.0
      %387 = vmatpush1.msra.mxu0 0.0
      %388 = vmatprep.subr.mxu0 0.0
      %389 = vmatpush1.msra.mxu0 0.0
      %390 = vmatprep.subr.mxu0 0.0
      %391 = vmatpush1.msra.mxu0 0.0
      %392 = vmatprep.subr.mxu0 0.0
      %393 = vmatpush1.msra.mxu0 0.0
      %394 = vmatprep.subr.mxu0 0.0
      %395 = vmatpush1.msra.mxu0 0.0
      %396 = vmatprep.subr.mxu0 0.0
      %397 = vmatpush1.msra.mxu0 0.0
      %398 = vmatprep.subr.mxu0 0.0
      %399 = vmatpush1.msra.mxu0 0.0
      %400 = vmatprep.subr.mxu0 0.0
      %401 = vmatpush1.msra.mxu0 0.0
      %402 = vmatprep.subr.mxu0 0.0
      %403 = vmatpush1.msra.mxu0 0.0
      %404 = vmatprep.subr.mxu0 0.0
      %405 = vmatpush1.msra.mxu0 0.0
      %406 = vmatprep.subr.mxu0 0.0
      %407 = vmatpush1.msra.mxu0 0.0
      %408 = vmatprep.subr.mxu0 0.0
      %409 = vmatpush1.msra.mxu0 0.0
      %410 = vmatprep.mubr.f32.mxu0 0.0
      %411 = vmatmul.mubr.f32.gmra.mrb[0].mxu0 %v344
      %v412 = vpop.f32.mrb[0].mxu0
      %v413 = vadd.f32 0.0, %v412
      %v414 = vpop.f32.mrb[0].mxu0
      %415 = vdwg.mxu0
      %v416 = vadd.f32 %v338, %v413
      %v417 = vxor.u32 %v416, 2147483648
      %v418 = vmul.f32 %v417, 1.442695
      %v419 = vpow.pop %v418
      %v420 = vadd.f32 %v419, 1.0
      %v421 = vrcp.pop %v420
      %v422 = vmul.f32 1.0, %v421
      %423 = vmatprep.subr.mxu0 0.0
      %424 = vmatpush1.msra.mxu0 %v324
      %425 = vmatprep.subr.mxu0 0.0
      %426 = vmatpush1.msra.mxu0 %v325
      %427 = vmatprep.subr.mxu0 0.0
      %428 = vmatpush1.msra.mxu0 0.0
      %429 = vmatprep.subr.mxu0 0.0
      %430 = vmatpush1.msra.mxu0 0.0
      %431 = vmatprep.subr.mxu0 0.0
      %432 = vmatpush1.msra.mxu0 0.0
      %433 = vmatprep.subr.mxu0 0.0
      %434 = vmatpush1.msra.mxu0 0.0
      %435 = vmatprep.subr.mxu0 0.0
      %436 = vmatpush1.msra.mxu0 0.0
      %437 = vmatprep.subr.mxu0 0.0
      %438 = vmatpush1.msra.mxu0 0.0
      %439 = vmatprep.subr.mxu0 0.0
      %440 = vmatpush1.msra.mxu0 0.0
      %441 = vmatprep.subr.mxu0 0.0
      %442 = vmatpush1.msra.mxu0 0.0
      %443 = vmatprep.subr.mxu0 0.0
      %444 = vmatpush1.msra.mxu0 0.0
      %445 = vmatprep.subr.mxu0 0.0
      %446 = vmatpush1.msra.mxu0 0.0
      %447 = vmatprep.subr.mxu0 0.0
      %448 = vmatpush1.msra.mxu0 0.0
      %449 = vmatprep.subr.mxu0 0.0
      %450 = vmatpush1.msra.mxu0 0.0
      %451 = vmatprep.subr.mxu0 0.0
      %452 = vmatpush1.msra.mxu0 0.0
      %453 = vmatprep.subr.mxu0 0.0
      %454 = vmatpush1.msra.mxu0 0.0
      %455 = vmatprep.subr.mxu0 0.0
      %456 = vmatpush1.msra.mxu0 0.0
      %457 = vmatprep.subr.mxu0 0.0
      %458 = vmatpush1.msra.mxu0 0.0
      %459 = vmatprep.subr.mxu0 0.0
      %460 = vmatpush1.msra.mxu0 0.0
      %461 = vmatprep.subr.mxu0 0.0
      %462 = vmatpush1.msra.mxu0 0.0
      %463 = vmatprep.subr.mxu0 0.0
      %464 = vmatpush1.msra.mxu0 0.0
      %465 = vmatprep.subr.mxu0 0.0
      %466 = vmatpush1.msra.mxu0 0.0
      %467 = vmatprep.subr.mxu0 0.0
      %468 = vmatpush1.msra.mxu0 0.0
      %469 = vmatprep.subr.mxu0 0.0
      %470 = vmatpush1.msra.mxu0 0.0
      %471 = vmatprep.subr.mxu0 0.0
      %472 = vmatpush1.msra.mxu0 0.0
      %473 = vmatprep.subr.mxu0 0.0
      %474 = vmatpush1.msra.mxu0 0.0
      %475 = vmatprep.subr.mxu0 0.0
      %476 = vmatpush1.msra.mxu0 0.0
      %477 = vmatprep.subr.mxu0 0.0
      %478 = vmatpush1.msra.mxu0 0.0
      %479 = vmatprep.subr.mxu0 0.0
      %480 = vmatpush1.msra.mxu0 0.0
      %481 = vmatprep.subr.mxu0 0.0
      %482 = vmatpush1.msra.mxu0 0.0
      %483 = vmatprep.subr.mxu0 0.0
      %484 = vmatpush1.msra.mxu0 0.0
      %485 = vmatprep.subr.mxu0 0.0
      %486 = vmatpush1.msra.mxu0 0.0
      %487 = vmatprep.mubr.f32.mxu0 0.0
      %488 = vmatmul.mubr.f32.gmra.mrb[0].mxu0 %v344
      %v489 = vpop.f32.mrb[0].mxu0
      %v490 = vadd.f32 0.0, %v489
      %v491 = vpop.f32.mrb[0].mxu0
      %492 = vdwg.mxu0
      %v493 = vadd.f32 %v339, %v490
      %v494 = vxor.u32 %v493, 2147483648
      %v495 = vmul.f32 %v494, 1.442695
      %v496 = vpow.pop %v495
      %v497 = vadd.f32 %v496, 1.0
      %v498 = vrcp.pop %v497
      %v499 = vmul.f32 1.0, %v498
      %500 = vmatprep.subr.mxu0 0.0
      %501 = vmatpush1.msra.mxu0 %v327
      %502 = vmatprep.subr.mxu0 0.0
      %503 = vmatpush1.msra.mxu0 %v328
      %504 = vmatprep.subr.mxu0 0.0
      %505 = vmatpush1.msra.mxu0 0.0
      %506 = vmatprep.subr.mxu0 0.0
      %507 = vmatpush1.msra.mxu0 0.0
      %508 = vmatprep.subr.mxu0 0.0
      %509 = vmatpush1.msra.mxu0 0.0
      %510 = vmatprep.subr.mxu0 0.0
      %511 = vmatpush1.msra.mxu0 0.0
      %512 = vmatprep.subr.mxu0 0.0
      %513 = vmatpush1.msra.mxu0 0.0
      %514 = vmatprep.subr.mxu0 0.0
      %515 = vmatpush1.msra.mxu0 0.0
      %516 = vmatprep.subr.mxu0 0.0
      %517 = vmatpush1.msra.mxu0 0.0
      %518 = vmatprep.subr.mxu0 0.0
      %519 = vmatpush1.msra.mxu0 0.0
      %520 = vmatprep.subr.mxu0 0.0
      %521 = vmatpush1.msra.mxu0 0.0
      %522 = vmatprep.subr.mxu0 0.0
      %523 = vmatpush1.msra.mxu0 0.0
      %524 = vmatprep.subr.mxu0 0.0
      %525 = vmatpush1.msra.mxu0 0.0
      %526 = vmatprep.subr.mxu0 0.0
      %527 = vmatpush1.msra.mxu0 0.0
      %528 = vmatprep.subr.mxu0 0.0
      %529 = vmatpush1.msra.mxu0 0.0
      %530 = vmatprep.subr.mxu0 0.0
      %531 = vmatpush1.msra.mxu0 0.0
      %532 = vmatprep.subr.mxu0 0.0
      %533 = vmatpush1.msra.mxu0 0.0
      %534 = vmatprep.subr.mxu0 0.0
      %535 = vmatpush1.msra.mxu0 0.0
      %536 = vmatprep.subr.mxu0 0.0
      %537 = vmatpush1.msra.mxu0 0.0
      %538 = vmatprep.subr.mxu0 0.0
      %539 = vmatpush1.msra.mxu0 0.0
      %540 = vmatprep.subr.mxu0 0.0
      %541 = vmatpush1.msra.mxu0 0.0
      %542 = vmatprep.subr.mxu0 0.0
      %543 = vmatpush1.msra.mxu0 0.0
      %544 = vmatprep.subr.mxu0 0.0
      %545 = vmatpush1.msra.mxu0 0.0
      %546 = vmatprep.subr.mxu0 0.0
      %547 = vmatpush1.msra.mxu0 0.0
      %548 = vmatprep.subr.mxu0 0.0
      %549 = vmatpush1.msra.mxu0 0.0
      %550 = vmatprep.subr.mxu0 0.0
      %551 = vmatpush1.msra.mxu0 0.0
      %552 = vmatprep.subr.mxu0 0.0
      %553 = vmatpush1.msra.mxu0 0.0
      %554 = vmatprep.subr.mxu0 0.0
      %555 = vmatpush1.msra.mxu0 0.0
      %556 = vmatprep.subr.mxu0 0.0
      %557 = vmatpush1.msra.mxu0 0.0
      %558 = vmatprep.subr.mxu0 0.0
      %559 = vmatpush1.msra.mxu0 0.0
      %560 = vmatprep.subr.mxu0 0.0
      %561 = vmatpush1.msra.mxu0 0.0
      %562 = vmatprep.subr.mxu0 0.0
      %563 = vmatpush1.msra.mxu0 0.0
      %564 = vmatprep.mubr.f32.mxu0 0.0
      %565 = vmatmul.mubr.f32.gmra.mrb[0].mxu0 %v344
      %v566 = vpop.f32.mrb[0].mxu0
      %v567 = vadd.f32 0.0, %v566
      %v568 = vpop.f32.mrb[0].mxu0
      %569 = vdwg.mxu0
      %v570 = vadd.f32 %v340, %v567
      %v571 = vtanh.pop %v570
      %572 = vmatprep.subr.mxu0 0.0
      %573 = vmatpush1.msra.mxu0 %v330
      %574 = vmatprep.subr.mxu0 0.0
      %575 = vmatpush1.msra.mxu0 %v331
      %576 = vmatprep.subr.mxu0 0.0
      %577 = vmatpush1.msra.mxu0 0.0
      %578 = vmatprep.subr.mxu0 0.0
      %579 = vmatpush1.msra.mxu0 0.0
      %580 = vmatprep.subr.mxu0 0.0
      %581 = vmatpush1.msra.mxu0 0.0
      %582 = vmatprep.subr.mxu0 0.0
      %583 = vmatpush1.msra.mxu0 0.0
      %584 = vmatprep.subr.mxu0 0.0
      %585 = vmatpush1.msra.mxu0 0.0
      %586 = vmatprep.subr.mxu0 0.0
      %587 = vmatpush1.msra.mxu0 0.0
      %588 = vmatprep.subr.mxu0 0.0
      %589 = vmatpush1.msra.mxu0 0.0
      %590 = vmatprep.subr.mxu0 0.0
      %591 = vmatpush1.msra.mxu0 0.0
      %592 = vmatprep.subr.mxu0 0.0
      %593 = vmatpush1.msra.mxu0 0.0
      %594 = vmatprep.subr.mxu0 0.0
      %595 = vmatpush1.msra.mxu0 0.0
      %596 = vmatprep.subr.mxu0 0.0
      %597 = vmatpush1.msra.mxu0 0.0
      %598 = vmatprep.subr.mxu0 0.0
      %599 = vmatpush1.msra.mxu0 0.0
      %600 = vmatprep.subr.mxu0 0.0
      %601 = vmatpush1.msra.mxu0 0.0
      %602 = vmatprep.subr.mxu0 0.0
      %603 = vmatpush1.msra.mxu0 0.0
      %604 = vmatprep.subr.mxu0 0.0
      %605 = vmatpush1.msra.mxu0 0.0
      %606 = vmatprep.subr.mxu0 0.0
      %607 = vmatpush1.msra.mxu0 0.0
      %608 = vmatprep.subr.mxu0 0.0
      %609 = vmatpush1.msra.mxu0 0.0
      %610 = vmatprep.subr.mxu0 0.0
      %611 = vmatpush1.msra.mxu0 0.0
      %612 = vmatprep.subr.mxu0 0.0
      %613 = vmatpush1.msra.mxu0 0.0
      %614 = vmatprep.subr.mxu0 0.0
      %615 = vmatpush1.msra.mxu0 0.0
      %616 = vmatprep.subr.mxu0 0.0
      %617 = vmatpush1.msra.mxu0 0.0
      %618 = vmatprep.subr.mxu0 0.0
      %619 = vmatpush1.msra.mxu0 0.0
      %620 = vmatprep.subr.mxu0 0.0
      %621 = vmatpush1.msra.mxu0 0.0
      %622 = vmatprep.subr.mxu0 0.0
      %623 = vmatpush1.msra.mxu0 0.0
      %624 = vmatprep.subr.mxu0 0.0
      %625 = vmatpush1.msra.mxu0 0.0
      %626 = vmatprep.subr.mxu0 0.0
      %627 = vmatpush1.msra.mxu0 0.0
      %628 = vmatprep.subr.mxu0 0.0
      %629 = vmatpush1.msra.mxu0 0.0
      %630 = vmatprep.subr.mxu0 0.0
      %631 = vmatpush1.msra.mxu0 0.0
      %632 = vmatprep.subr.mxu0 0.0
      %633 = vmatpush1.msra.mxu0 0.0
      %634 = vmatprep.subr.mxu0 0.0
      %635 = vmatpush1.msra.mxu0 0.0
      %636 = vmatprep.mubr.f32.mxu0 0.0
      %637 = vmatmul.mubr.f32.gmra.mrb[0].mxu0 %v344
      %v638 = vpop.f32.mrb[0].mxu0
      %v639 = vadd.f32 0.0, %v638
      %v640 = vpop.f32.mrb[0].mxu0
      %641 = vdwg.mxu0
      %v642 = vadd.f32 %v341, %v639
      %v643 = vxor.u32 %v642, 2147483648
      %v644 = vmul.f32 %v643, 1.442695
      %v645 = vpow.pop %v644
      %v646 = vadd.f32 %v645, 1.0
      %v647 = vrcp.pop %v646
      %v648 = vmul.f32 1.0, %v647
      %v649 = vmul.f32 %v499, %v333
      %v650 = vmul.f32 %v422, %v571
      %v651 = vadd.f32 %v649, %v650
      %v652 = vtanh.pop %v651
      %v653 = vmul.f32 %v648, %v652
      %s654 = smul.u32 %s334, 2
      %s655 = scalar_lea.vmem %s301, %s654
      %vm656 = vcmask 123904
      %657 = vst.msk [vmem:[%s655] sm:$0x3] %vm656, %v653
      %s658 = smul.u32 %s20, 2
      %s659 = ssub.s32 1, %s658
      %s660 = sadd.s32 %s334, %s659
      %s661 = smul.u32 %s660, 4
      %s662 = smul.u32 %s661, 2
      %s663 = scalar_lea.vmem %s280, %s662
      %v664 = vld [vmem:[%s663] sm:$0x3]
      %v665 = vld [vmem:[%s663 + $0x2] sm:$0x3]
      %v666 = vld [vmem:[%s663 + $0x4] sm:$0x3]
      %v667 = vld [vmem:[%s663 + $0x6] sm:$0x3]
      %v669 = vsel %vm342, %v653, 0
      %671 = vmatprep.subr.mxu0 0.0
      %672 = vmatpush1.msra.mxu0 %v321
      %673 = vmatprep.subr.mxu0 0.0
      %674 = vmatpush1.msra.mxu0 %v322
      %675 = vmatprep.subr.mxu0 0.0
      %676 = vmatpush1.msra.mxu0 0.0
      %677 = vmatprep.subr.mxu0 0.0
      %678 = vmatpush1.msra.mxu0 0.0
      %679 = vmatprep.subr.mxu0 0.0
      %680 = vmatpush1.msra.mxu0 0.0
      %681 = vmatprep.subr.mxu0 0.0
      %682 = vmatpush1.msra.mxu0 0.0
      %683 = vmatprep.subr.mxu0 0.0
      %684 = vmatpush1.msra.mxu0 0.0
      %685 = vmatprep.subr.mxu0 0.0
      %686 = vmatpush1.msra.mxu0 0.0
      %687 = vmatprep.subr.mxu0 0.0
      %688 = vmatpush1.msra.mxu0 0.0
      %689 = vmatprep.subr.mxu0 0.0
      %690 = vmatpush1.msra.mxu0 0.0
      %691 = vmatprep.subr.mxu0 0.0
      %692 = vmatpush1.msra.mxu0 0.0
      %693 = vmatprep.subr.mxu0 0.0
      %694 = vmatpush1.msra.mxu0 0.0
      %695 = vmatprep.subr.mxu0 0.0
      %696 = vmatpush1.msra.mxu0 0.0
      %697 = vmatprep.subr.mxu0 0.0
      %698 = vmatpush1.msra.mxu0 0.0
      %699 = vmatprep.subr.mxu0 0.0
      %700 = vmatpush1.msra.mxu0 0.0
      %701 = vmatprep.subr.mxu0 0.0
      %702 = vmatpush1.msra.mxu0 0.0
      %703 = vmatprep.subr.mxu0 0.0
      %704 = vmatpush1.msra.mxu0 0.0
      %705 = vmatprep.subr.mxu0 0.0
      %706 = vmatpush1.msra.mxu0 0.0
      %707 = vmatprep.subr.mxu0 0.0
      %708 = vmatpush1.msra.mxu0 0.0
      %709 = vmatprep.subr.mxu0 0.0
      %710 = vmatpush1.msra.mxu0 0.0
      %711 = vmatprep.subr.mxu0 0.0
      %712 = vmatpush1.msra.mxu0 0.0
      %713 = vmatprep.subr.mxu0 0.0
      %714 = vmatpush1.msra.mxu0 0.0
      %715 = vmatprep.subr.mxu0 0.0
      %716 = vmatpush1.msra.mxu0 0.0
      %717 = vmatprep.subr.mxu0 0.0
      %718 = vmatpush1.msra.mxu0 0.0
      %719 = vmatprep.subr.mxu0 0.0
      %720 = vmatpush1.msra.mxu0 0.0
      %721 = vmatprep.subr.mxu0 0.0
      %722 = vmatpush1.msra.mxu0 0.0
      %723 = vmatprep.subr.mxu0 0.0
      %724 = vmatpush1.msra.mxu0 0.0
      %725 = vmatprep.subr.mxu0 0.0
      %726 = vmatpush1.msra.mxu0 0.0
      %727 = vmatprep.subr.mxu0 0.0
      %728 = vmatpush1.msra.mxu0 0.0
      %729 = vmatprep.subr.mxu0 0.0
      %730 = vmatpush1.msra.mxu0 0.0
      %731 = vmatprep.subr.mxu0 0.0
      %732 = vmatpush1.msra.mxu0 0.0
      %733 = vmatprep.subr.mxu0 0.0
      %734 = vmatpush1.msra.mxu0 0.0
      %735 = vmatprep.mubr.f32.mxu0 0.0
      %736 = vmatmul.mubr.f32.gmra.mrb[0].mxu0 %v669
      %v737 = vpop.f32.mrb[0].mxu0
      %v738 = vadd.f32 0.0, %v737
      %v739 = vpop.f32.mrb[0].mxu0
      %740 = vdwg.mxu0
      %v741 = vadd.f32 %v664, %v738
      %v742 = vxor.u32 %v741, 2147483648
      %v743 = vmul.f32 %v742, 1.442695
      %v744 = vpow.pop %v743
      %v745 = vadd.f32 %v744, 1.0
      %v746 = vrcp.pop %v745
      %v747 = vmul.f32 1.0, %v746
      %748 = vmatprep.subr.mxu0 0.0
      %749 = vmatpush1.msra.mxu0 %v324
      %750 = vmatprep.subr.mxu0 0.0
      %751 = vmatpush1.msra.mxu0 %v325
      %752 = vmatprep.subr.mxu0 0.0
      %753 = vmatpush1.msra.mxu0 0.0
      %754 = vmatprep.subr.mxu0 0.0
      %755 = vmatpush1.msra.mxu0 0.0
      %756 = vmatprep.subr.mxu0 0.0
      %757 = vmatpush1.msra.mxu0 0.0
      %758 = vmatprep.subr.mxu0 0.0
      %759 = vmatpush1.msra.mxu0 0.0
      %760 = vmatprep.subr.mxu0 0.0
      %761 = vmatpush1.msra.mxu0 0.0
      %762 = vmatprep.subr.mxu0 0.0
      %763 = vmatpush1.msra.mxu0 0.0
      %764 = vmatprep.subr.mxu0 0.0
      %765 = vmatpush1.msra.mxu0 0.0
      %766 = vmatprep.subr.mxu0 0.0
      %767 = vmatpush1.msra.mxu0 0.0
      %768 = vmatprep.subr.mxu0 0.0
      %769 = vmatpush1.msra.mxu0 0.0
      %770 = vmatprep.subr.mxu0 0.0
      %771 = vmatpush1.msra.mxu0 0.0
      %772 = vmatprep.subr.mxu0 0.0
      %773 = vmatpush1.msra.mxu0 0.0
      %774 = vmatprep.subr.mxu0 0.0
      %775 = vmatpush1.msra.mxu0 0.0
      %776 = vmatprep.subr.mxu0 0.0
      %777 = vmatpush1.msra.mxu0 0.0
      %778 = vmatprep.subr.mxu0 0.0
      %779 = vmatpush1.msra.mxu0 0.0
      %780 = vmatprep.subr.mxu0 0.0
      %781 = vmatpush1.msra.mxu0 0.0
      %782 = vmatprep.subr.mxu0 0.0
      %783 = vmatpush1.msra.mxu0 0.0
      %784 = vmatprep.subr.mxu0 0.0
      %785 = vmatpush1.msra.mxu0 0.0
      %786 = vmatprep.subr.mxu0 0.0
      %787 = vmatpush1.msra.mxu0 0.0
      %788 = vmatprep.subr.mxu0 0.0
      %789 = vmatpush1.msra.mxu0 0.0
      %790 = vmatprep.subr.mxu0 0.0
      %791 = vmatpush1.msra.mxu0 0.0
      %792 = vmatprep.subr.mxu0 0.0
      %793 = vmatpush1.msra.mxu0 0.0
      %794 = vmatprep.subr.mxu0 0.0
      %795 = vmatpush1.msra.mxu0 0.0
      %796 = vmatprep.subr.mxu0 0.0
      %797 = vmatpush1.msra.mxu0 0.0
      %798 = vmatprep.subr.mxu0 0.0
      %799 = vmatpush1.msra.mxu0 0.0
      %800 = vmatprep.subr.mxu0 0.0
      %801 = vmatpush1.msra.mxu0 0.0
      %802 = vmatprep.subr.mxu0 0.0
      %803 = vmatpush1.msra.mxu0 0.0
      %804 = vmatprep.subr.mxu0 0.0
      %805 = vmatpush1.msra.mxu0 0.0
      %806 = vmatprep.subr.mxu0 0.0
      %807 = vmatpush1.msra.mxu0 0.0
      %808 = vmatprep.subr.mxu0 0.0
      %809 = vmatpush1.msra.mxu0 0.0
      %810 = vmatprep.subr.mxu0 0.0
      %811 = vmatpush1.msra.mxu0 0.0
      %812 = vmatprep.mubr.f32.mxu0 0.0
      %813 = vmatmul.mubr.f32.gmra.mrb[0].mxu0 %v669
      %v814 = vpop.f32.mrb[0].mxu0
      %v815 = vadd.f32 0.0, %v814
      %v816 = vpop.f32.mrb[0].mxu0
      %817 = vdwg.mxu0
      %v818 = vadd.f32 %v665, %v815
      %v819 = vxor.u32 %v818, 2147483648
      %v820 = vmul.f32 %v819, 1.442695
      %v821 = vpow.pop %v820
      %v822 = vadd.f32 %v821, 1.0
      %v823 = vrcp.pop %v822
      %v824 = vmul.f32 1.0, %v823
      %825 = vmatprep.subr.mxu0 0.0
      %826 = vmatpush1.msra.mxu0 %v327
      %827 = vmatprep.subr.mxu0 0.0
      %828 = vmatpush1.msra.mxu0 %v328
      %829 = vmatprep.subr.mxu0 0.0
      %830 = vmatpush1.msra.mxu0 0.0
      %831 = vmatprep.subr.mxu0 0.0
      %832 = vmatpush1.msra.mxu0 0.0
      %833 = vmatprep.subr.mxu0 0.0
      %834 = vmatpush1.msra.mxu0 0.0
      %835 = vmatprep.subr.mxu0 0.0
      %836 = vmatpush1.msra.mxu0 0.0
      %837 = vmatprep.subr.mxu0 0.0
      %838 = vmatpush1.msra.mxu0 0.0
      %839 = vmatprep.subr.mxu0 0.0
      %840 = vmatpush1.msra.mxu0 0.0
      %841 = vmatprep.subr.mxu0 0.0
      %842 = vmatpush1.msra.mxu0 0.0
      %843 = vmatprep.subr.mxu0 0.0
      %844 = vmatpush1.msra.mxu0 0.0
      %845 = vmatprep.subr.mxu0 0.0
      %846 = vmatpush1.msra.mxu0 0.0
      %847 = vmatprep.subr.mxu0 0.0
      %848 = vmatpush1.msra.mxu0 0.0
      %849 = vmatprep.subr.mxu0 0.0
      %850 = vmatpush1.msra.mxu0 0.0
      %851 = vmatprep.subr.mxu0 0.0
      %852 = vmatpush1.msra.mxu0 0.0
      %853 = vmatprep.subr.mxu0 0.0
      %854 = vmatpush1.msra.mxu0 0.0
      %855 = vmatprep.subr.mxu0 0.0
      %856 = vmatpush1.msra.mxu0 0.0
      %857 = vmatprep.subr.mxu0 0.0
      %858 = vmatpush1.msra.mxu0 0.0
      %859 = vmatprep.subr.mxu0 0.0
      %860 = vmatpush1.msra.mxu0 0.0
      %861 = vmatprep.subr.mxu0 0.0
      %862 = vmatpush1.msra.mxu0 0.0
      %863 = vmatprep.subr.mxu0 0.0
      %864 = vmatpush1.msra.mxu0 0.0
      %865 = vmatprep.subr.mxu0 0.0
      %866 = vmatpush1.msra.mxu0 0.0
      %867 = vmatprep.subr.mxu0 0.0
      %868 = vmatpush1.msra.mxu0 0.0
      %869 = vmatprep.subr.mxu0 0.0
      %870 = vmatpush1.msra.mxu0 0.0
      %871 = vmatprep.subr.mxu0 0.0
      %872 = vmatpush1.msra.mxu0 0.0
      %873 = vmatprep.subr.mxu0 0.0
      %874 = vmatpush1.msra.mxu0 0.0
      %875 = vmatprep.subr.mxu0 0.0
      %876 = vmatpush1.msra.mxu0 0.0
      %877 = vmatprep.subr.mxu0 0.0
      %878 = vmatpush1.msra.mxu0 0.0
      %879 = vmatprep.subr.mxu0 0.0
      %880 = vmatpush1.msra.mxu0 0.0
      %881 = vmatprep.subr.mxu0 0.0
      %882 = vmatpush1.msra.mxu0 0.0
      %883 = vmatprep.subr.mxu0 0.0
      %884 = vmatpush1.msra.mxu0 0.0
      %885 = vmatprep.subr.mxu0 0.0
      %886 = vmatpush1.msra.mxu0 0.0
      %887 = vmatprep.subr.mxu0 0.0
      %888 = vmatpush1.msra.mxu0 0.0
      %889 = vmatprep.mubr.f32.mxu0 0.0
      %890 = vmatmul.mubr.f32.gmra.mrb[0].mxu0 %v669
      %v891 = vpop.f32.mrb[0].mxu0
      %v892 = vadd.f32 0.0, %v891
      %v893 = vpop.f32.mrb[0].mxu0
      %894 = vdwg.mxu0
      %v895 = vadd.f32 %v666, %v892
      %v896 = vtanh.pop %v895
      %897 = vmatprep.subr.mxu0 0.0
      %898 = vmatpush1.msra.mxu0 %v330
      %899 = vmatprep.subr.mxu0 0.0
      %900 = vmatpush1.msra.mxu0 %v331
      %901 = vmatprep.subr.mxu0 0.0
      %902 = vmatpush1.msra.mxu0 0.0
      %903 = vmatprep.subr.mxu0 0.0
      %904 = vmatpush1.msra.mxu0 0.0
      %905 = vmatprep.subr.mxu0 0.0
      %906 = vmatpush1.msra.mxu0 0.0
      %907 = vmatprep.subr.mxu0 0.0
      %908 = vmatpush1.msra.mxu0 0.0
      %909 = vmatprep.subr.mxu0 0.0
      %910 = vmatpush1.msra.mxu0 0.0
      %911 = vmatprep.subr.mxu0 0.0
      %912 = vmatpush1.msra.mxu0 0.0
      %913 = vmatprep.subr.mxu0 0.0
      %914 = vmatpush1.msra.mxu0 0.0
      %915 = vmatprep.subr.mxu0 0.0
      %916 = vmatpush1.msra.mxu0 0.0
      %917 = vmatprep.subr.mxu0 0.0
      %918 = vmatpush1.msra.mxu0 0.0
      %919 = vmatprep.subr.mxu0 0.0
      %920 = vmatpush1.msra.mxu0 0.0
      %921 = vmatprep.subr.mxu0 0.0
      %922 = vmatpush1.msra.mxu0 0.0
      %923 = vmatprep.subr.mxu0 0.0
      %924 = vmatpush1.msra.mxu0 0.0
      %925 = vmatprep.subr.mxu0 0.0
      %926 = vmatpush1.msra.mxu0 0.0
      %927 = vmatprep.subr.mxu0 0.0
      %928 = vmatpush1.msra.mxu0 0.0
      %929 = vmatprep.subr.mxu0 0.0
      %930 = vmatpush1.msra.mxu0 0.0
      %931 = vmatprep.subr.mxu0 0.0
      %932 = vmatpush1.msra.mxu0 0.0
      %933 = vmatprep.subr.mxu0 0.0
      %934 = vmatpush1.msra.mxu0 0.0
      %935 = vmatprep.subr.mxu0 0.0
      %936 = vmatpush1.msra.mxu0 0.0
      %937 = vmatprep.subr.mxu0 0.0
      %938 = vmatpush1.msra.mxu0 0.0
      %939 = vmatprep.subr.mxu0 0.0
      %940 = vmatpush1.msra.mxu0 0.0
      %941 = vmatprep.subr.mxu0 0.0
      %942 = vmatpush1.msra.mxu0 0.0
      %943 = vmatprep.subr.mxu0 0.0
      %944 = vmatpush1.msra.mxu0 0.0
      %945 = vmatprep.subr.mxu0 0.0
      %946 = vmatpush1.msra.mxu0 0.0
      %947 = vmatprep.subr.mxu0 0.0
      %948 = vmatpush1.msra.mxu0 0.0
      %949 = vmatprep.subr.mxu0 0.0
      %950 = vmatpush1.msra.mxu0 0.0
      %951 = vmatprep.subr.mxu0 0.0
      %952 = vmatpush1.msra.mxu0 0.0
      %953 = vmatprep.subr.mxu0 0.0
      %954 = vmatpush1.msra.mxu0 0.0
      %955 = vmatprep.subr.mxu0 0.0
      %956 = vmatpush1.msra.mxu0 0.0
      %957 = vmatprep.subr.mxu0 0.0
      %958 = vmatpush1.msra.mxu0 0.0
      %959 = vmatprep.subr.mxu0 0.0
      %960 = vmatpush1.msra.mxu0 0.0
      %961 = vmatprep.mubr.f32.mxu0 0.0
      %962 = vmatmul.mubr.f32.gmra.mrb[0].mxu0 %v669
      %v963 = vpop.f32.mrb[0].mxu0
      %v964 = vadd.f32 0.0, %v963
      %v965 = vpop.f32.mrb[0].mxu0
      %966 = vdwg.mxu0
      %v967 = vadd.f32 %v667, %v964
      %v968 = vxor.u32 %v967, 2147483648
      %v969 = vmul.f32 %v968, 1.442695
      %v970 = vpow.pop %v969
      %v971 = vadd.f32 %v970, 1.0
      %v972 = vrcp.pop %v971
      %v973 = vmul.f32 1.0, %v972
      %v974 = vmul.f32 %v824, %v651
      %v975 = vmul.f32 %v747, %v896
      %v976 = vadd.f32 %v974, %v975
      %v977 = vtanh.pop %v976
      %v978 = vmul.f32 %v973, %v977
      %s979 = smul.u32 %s660, 2
      %s980 = scalar_lea.vmem %s301, %s979
      %981 = vst.msk [vmem:[%s980] sm:$0x3] %vm656, %v978
      %s982 = smul.u32 %s659, 2
      %s983 = sadd.s32 %s334, %s982
      %s984 = smul.u32 %s983, 4
      %s985 = smul.u32 %s984, 2
      %s986 = scalar_lea.vmem %s280, %s985
      %v987 = vld [vmem:[%s986] sm:$0x3]
      %v988 = vld [vmem:[%s986 + $0x2] sm:$0x3]
      %v989 = vld [vmem:[%s986 + $0x4] sm:$0x3]
      %v990 = vld [vmem:[%s986 + $0x6] sm:$0x3]
      %v992 = vsel %vm342, %v978, 0
      %994 = vmatprep.subr.mxu0 0.0
      %995 = vmatpush1.msra.mxu0 %v321
      %996 = vmatprep.subr.mxu0 0.0
      %997 = vmatpush1.msra.mxu0 %v322
      %998 = vmatprep.subr.mxu0 0.0
      %999 = vmatpush1.msra.mxu0 0.0
      %1000 = vmatprep.subr.mxu0 0.0
      %1001 = vmatpush1.msra.mxu0 0.0
      %1002 = vmatprep.subr.mxu0 0.0
      %1003 = vmatpush1.msra.mxu0 0.0
      %1004 = vmatprep.subr.mxu0 0.0
      %1005 = vmatpush1.msra.mxu0 0.0
      %1006 = vmatprep.subr.mxu0 0.0
      %1007 = vmatpush1.msra.mxu0 0.0
      %1008 = vmatprep.subr.mxu0 0.0
      %1009 = vmatpush1.msra.mxu0 0.0
      %1010 = vmatprep.subr.mxu0 0.0
      %1011 = vmatpush1.msra.mxu0 0.0
      %1012 = vmatprep.subr.mxu0 0.0
      %1013 = vmatpush1.msra.mxu0 0.0
      %1014 = vmatprep.subr.mxu0 0.0
      %1015 = vmatpush1.msra.mxu0 0.0
      %1016 = vmatprep.subr.mxu0 0.0
      %1017 = vmatpush1.msra.mxu0 0.0
      %1018 = vmatprep.subr.mxu0 0.0
      %1019 = vmatpush1.msra.mxu0 0.0
      %1020 = vmatprep.subr.mxu0 0.0
      %1021 = vmatpush1.msra.mxu0 0.0
      %1022 = vmatprep.subr.mxu0 0.0
      %1023 = vmatpush1.msra.mxu0 0.0
      %1024 = vmatprep.subr.mxu0 0.0
      %1025 = vmatpush1.msra.mxu0 0.0
      %1026 = vmatprep.subr.mxu0 0.0
      %1027 = vmatpush1.msra.mxu0 0.0
      %1028 = vmatprep.subr.mxu0 0.0
      %1029 = vmatpush1.msra.mxu0 0.0
      %1030 = vmatprep.subr.mxu0 0.0
      %1031 = vmatpush1.msra.mxu0 0.0
      %1032 = vmatprep.subr.mxu0 0.0
      %1033 = vmatpush1.msra.mxu0 0.0
      %1034 = vmatprep.subr.mxu0 0.0
      %1035 = vmatpush1.msra.mxu0 0.0
      %1036 = vmatprep.subr.mxu0 0.0
      %1037 = vmatpush1.msra.mxu0 0.0
      %1038 = vmatprep.subr.mxu0 0.0
      %1039 = vmatpush1.msra.mxu0 0.0
      %1040 = vmatprep.subr.mxu0 0.0
      %1041 = vmatpush1.msra.mxu0 0.0
      %1042 = vmatprep.subr.mxu0 0.0
      %1043 = vmatpush1.msra.mxu0 0.0
      %1044 = vmatprep.subr.mxu0 0.0
      %1045 = vmatpush1.msra.mxu0 0.0
      %1046 = vmatprep.subr.mxu0 0.0
      %1047 = vmatpush1.msra.mxu0 0.0
      %1048 = vmatprep.subr.mxu0 0.0
      %1049 = vmatpush1.msra.mxu0 0.0
      %1050 = vmatprep.subr.mxu0 0.0
      %1051 = vmatpush1.msra.mxu0 0.0
      %1052 = vmatprep.subr.mxu0 0.0
      %1053 = vmatpush1.msra.mxu0 0.0
      %1054 = vmatprep.subr.mxu0 0.0
      %1055 = vmatpush1.msra.mxu0 0.0
      %1056 = vmatprep.subr.mxu0 0.0
      %1057 = vmatpush1.msra.mxu0 0.0
      %1058 = vmatprep.mubr.f32.mxu0 0.0
      %1059 = vmatmul.mubr.f32.gmra.mrb[0].mxu0 %v992
      %v1060 = vpop.f32.mrb[0].mxu0
      %v1061 = vadd.f32 0.0, %v1060
      %v1062 = vpop.f32.mrb[0].mxu0
      %1063 = vdwg.mxu0
      %v1064 = vadd.f32 %v987, %v1061
      %v1065 = vxor.u32 %v1064, 2147483648
      %v1066 = vmul.f32 %v1065, 1.442695
      %v1067 = vpow.pop %v1066
      %v1068 = vadd.f32 %v1067, 1.0
      %v1069 = vrcp.pop %v1068
      %v1070 = vmul.f32 1.0, %v1069
      %1071 = vmatprep.subr.mxu0 0.0
      %1072 = vmatpush1.msra.mxu0 %v324
      %1073 = vmatprep.subr.mxu0 0.0
      %1074 = vmatpush1.msra.mxu0 %v325
      %1075 = vmatprep.subr.mxu0 0.0
      %1076 = vmatpush1.msra.mxu0 0.0
      %1077 = vmatprep.subr.mxu0 0.0
      %1078 = vmatpush1.msra.mxu0 0.0
      %1079 = vmatprep.subr.mxu0 0.0
      %1080 = vmatpush1.msra.mxu0 0.0
      %1081 = vmatprep.subr.mxu0 0.0
      %1082 = vmatpush1.msra.mxu0 0.0
      %1083 = vmatprep.subr.mxu0 0.0
      %1084 = vmatpush1.msra.mxu0 0.0
      %1085 = vmatprep.subr.mxu0 0.0
      %1086 = vmatpush1.msra.mxu0 0.0
      %1087 = vmatprep.subr.mxu0 0.0
      %1088 = vmatpush1.msra.mxu0 0.0
      %1089 = vmatprep.subr.mxu0 0.0
      %1090 = vmatpush1.msra.mxu0 0.0
      %1091 = vmatprep.subr.mxu0 0.0
      %1092 = vmatpush1.msra.mxu0 0.0
      %1093 = vmatprep.subr.mxu0 0.0
      %1094 = vmatpush1.msra.mxu0 0.0
      %1095 = vmatprep.subr.mxu0 0.0
      %1096 = vmatpush1.msra.mxu0 0.0
      %1097 = vmatprep.subr.mxu0 0.0
      %1098 = vmatpush1.msra.mxu0 0.0
      %1099 = vmatprep.subr.mxu0 0.0
      %1100 = vmatpush1.msra.mxu0 0.0
      %1101 = vmatprep.subr.mxu0 0.0
      %1102 = vmatpush1.msra.mxu0 0.0
      %1103 = vmatprep.subr.mxu0 0.0
      %1104 = vmatpush1.msra.mxu0 0.0
      %1105 = vmatprep.subr.mxu0 0.0
      %1106 = vmatpush1.msra.mxu0 0.0
      %1107 = vmatprep.subr.mxu0 0.0
      %1108 = vmatpush1.msra.mxu0 0.0
      %1109 = vmatprep.subr.mxu0 0.0
      %1110 = vmatpush1.msra.mxu0 0.0
      %1111 = vmatprep.subr.mxu0 0.0
      %1112 = vmatpush1.msra.mxu0 0.0
      %1113 = vmatprep.subr.mxu0 0.0
      %1114 = vmatpush1.msra.mxu0 0.0
      %1115 = vmatprep.subr.mxu0 0.0
      %1116 = vmatpush1.msra.mxu0 0.0
      %1117 = vmatprep.subr.mxu0 0.0
      %1118 = vmatpush1.msra.mxu0 0.0
      %1119 = vmatprep.subr.mxu0 0.0
      %1120 = vmatpush1.msra.mxu0 0.0
      %1121 = vmatprep.subr.mxu0 0.0
      %1122 = vmatpush1.msra.mxu0 0.0
      %1123 = vmatprep.subr.mxu0 0.0
      %1124 = vmatpush1.msra.mxu0 0.0
      %1125 = vmatprep.subr.mxu0 0.0
      %1126 = vmatpush1.msra.mxu0 0.0
      %1127 = vmatprep.subr.mxu0 0.0
      %1128 = vmatpush1.msra.mxu0 0.0
      %1129 = vmatprep.subr.mxu0 0.0
      %1130 = vmatpush1.msra.mxu0 0.0
      %1131 = vmatprep.subr.mxu0 0.0
      %1132 = vmatpush1.msra.mxu0 0.0
      %1133 = vmatprep.subr.mxu0 0.0
      %1134 = vmatpush1.msra.mxu0 0.0
      %1135 = vmatprep.mubr.f32.mxu0 0.0
      %1136 = vmatmul.mubr.f32.gmra.mrb[0].mxu0 %v992
      %v1137 = vpop.f32.mrb[0].mxu0
      %v1138 = vadd.f32 0.0, %v1137
      %v1139 = vpop.f32.mrb[0].mxu0
      %1140 = vdwg.mxu0
      %v1141 = vadd.f32 %v988, %v1138
      %v1142 = vxor.u32 %v1141, 2147483648
      %v1143 = vmul.f32 %v1142, 1.442695
      %v1144 = vpow.pop %v1143
      %v1145 = vadd.f32 %v1144, 1.0
      %v1146 = vrcp.pop %v1145
      %v1147 = vmul.f32 1.0, %v1146
      %1148 = vmatprep.subr.mxu0 0.0
      %1149 = vmatpush1.msra.mxu0 %v327
      %1150 = vmatprep.subr.mxu0 0.0
      %1151 = vmatpush1.msra.mxu0 %v328
      %1152 = vmatprep.subr.mxu0 0.0
      %1153 = vmatpush1.msra.mxu0 0.0
      %1154 = vmatprep.subr.mxu0 0.0
      %1155 = vmatpush1.msra.mxu0 0.0
      %1156 = vmatprep.subr.mxu0 0.0
      %1157 = vmatpush1.msra.mxu0 0.0
      %1158 = vmatprep.subr.mxu0 0.0
      %1159 = vmatpush1.msra.mxu0 0.0
      %1160 = vmatprep.subr.mxu0 0.0
      %1161 = vmatpush1.msra.mxu0 0.0
      %1162 = vmatprep.subr.mxu0 0.0
      %1163 = vmatpush1.msra.mxu0 0.0
      %1164 = vmatprep.subr.mxu0 0.0
      %1165 = vmatpush1.msra.mxu0 0.0
      %1166 = vmatprep.subr.mxu0 0.0
      %1167 = vmatpush1.msra.mxu0 0.0
      %1168 = vmatprep.subr.mxu0 0.0
      %1169 = vmatpush1.msra.mxu0 0.0
      %1170 = vmatprep.subr.mxu0 0.0
      %1171 = vmatpush1.msra.mxu0 0.0
      %1172 = vmatprep.subr.mxu0 0.0
      %1173 = vmatpush1.msra.mxu0 0.0
      %1174 = vmatprep.subr.mxu0 0.0
      %1175 = vmatpush1.msra.mxu0 0.0
      %1176 = vmatprep.subr.mxu0 0.0
      %1177 = vmatpush1.msra.mxu0 0.0
      %1178 = vmatprep.subr.mxu0 0.0
      %1179 = vmatpush1.msra.mxu0 0.0
      %1180 = vmatprep.subr.mxu0 0.0
      %1181 = vmatpush1.msra.mxu0 0.0
      %1182 = vmatprep.subr.mxu0 0.0
      %1183 = vmatpush1.msra.mxu0 0.0
      %1184 = vmatprep.subr.mxu0 0.0
      %1185 = vmatpush1.msra.mxu0 0.0
      %1186 = vmatprep.subr.mxu0 0.0
      %1187 = vmatpush1.msra.mxu0 0.0
      %1188 = vmatprep.subr.mxu0 0.0
      %1189 = vmatpush1.msra.mxu0 0.0
      %1190 = vmatprep.subr.mxu0 0.0
      %1191 = vmatpush1.msra.mxu0 0.0
      %1192 = vmatprep.subr.mxu0 0.0
      %1193 = vmatpush1.msra.mxu0 0.0
      %1194 = vmatprep.subr.mxu0 0.0
      %1195 = vmatpush1.msra.mxu0 0.0
      %1196 = vmatprep.subr.mxu0 0.0
      %1197 = vmatpush1.msra.mxu0 0.0
      %1198 = vmatprep.subr.mxu0 0.0
      %1199 = vmatpush1.msra.mxu0 0.0
      %1200 = vmatprep.subr.mxu0 0.0
      %1201 = vmatpush1.msra.mxu0 0.0
      %1202 = vmatprep.subr.mxu0 0.0
      %1203 = vmatpush1.msra.mxu0 0.0
      %1204 = vmatprep.subr.mxu0 0.0
      %1205 = vmatpush1.msra.mxu0 0.0
      %1206 = vmatprep.subr.mxu0 0.0
      %1207 = vmatpush1.msra.mxu0 0.0
      %1208 = vmatprep.subr.mxu0 0.0
      %1209 = vmatpush1.msra.mxu0 0.0
      %1210 = vmatprep.subr.mxu0 0.0
      %1211 = vmatpush1.msra.mxu0 0.0
      %1212 = vmatprep.mubr.f32.mxu0 0.0
      %1213 = vmatmul.mubr.f32.gmra.mrb[0].mxu0 %v992
      %v1214 = vpop.f32.mrb[0].mxu0
      %v1215 = vadd.f32 0.0, %v1214
      %v1216 = vpop.f32.mrb[0].mxu0
      %1217 = vdwg.mxu0
      %v1218 = vadd.f32 %v989, %v1215
      %v1219 = vtanh.pop %v1218
      %1220 = vmatprep.subr.mxu0 0.0
      %1221 = vmatpush1.msra.mxu0 %v330
      %1222 = vmatprep.subr.mxu0 0.0
      %1223 = vmatpush1.msra.mxu0 %v331
      %1224 = vmatprep.subr.mxu0 0.0
      %1225 = vmatpush1.msra.mxu0 0.0
      %1226 = vmatprep.subr.mxu0 0.0
      %1227 = vmatpush1.msra.mxu0 0.0
      %1228 = vmatprep.subr.mxu0 0.0
      %1229 = vmatpush1.msra.mxu0 0.0
      %1230 = vmatprep.subr.mxu0 0.0
      %1231 = vmatpush1.msra.mxu0 0.0
      %1232 = vmatprep.subr.mxu0 0.0
      %1233 = vmatpush1.msra.mxu0 0.0
      %1234 = vmatprep.subr.mxu0 0.0
      %1235 = vmatpush1.msra.mxu0 0.0
      %1236 = vmatprep.subr.mxu0 0.0
      %1237 = vmatpush1.msra.mxu0 0.0
      %1238 = vmatprep.subr.mxu0 0.0
      %1239 = vmatpush1.msra.mxu0 0.0
      %1240 = vmatprep.subr.mxu0 0.0
      %1241 = vmatpush1.msra.mxu0 0.0
      %1242 = vmatprep.subr.mxu0 0.0
      %1243 = vmatpush1.msra.mxu0 0.0
      %1244 = vmatprep.subr.mxu0 0.0
      %1245 = vmatpush1.msra.mxu0 0.0
      %1246 = vmatprep.subr.mxu0 0.0
      %1247 = vmatpush1.msra.mxu0 0.0
      %1248 = vmatprep.subr.mxu0 0.0
      %1249 = vmatpush1.msra.mxu0 0.0
      %1250 = vmatprep.subr.mxu0 0.0
      %1251 = vmatpush1.msra.mxu0 0.0
      %1252 = vmatprep.subr.mxu0 0.0
      %1253 = vmatpush1.msra.mxu0 0.0
      %1254 = vmatprep.subr.mxu0 0.0
      %1255 = vmatpush1.msra.mxu0 0.0
      %1256 = vmatprep.subr.mxu0 0.0
      %1257 = vmatpush1.msra.mxu0 0.0
      %1258 = vmatprep.subr.mxu0 0.0
      %1259 = vmatpush1.msra.mxu0 0.0
      %1260 = vmatprep.subr.mxu0 0.0
      %1261 = vmatpush1.msra.mxu0 0.0
      %1262 = vmatprep.subr.mxu0 0.0
      %1263 = vmatpush1.msra.mxu0 0.0
      %1264 = vmatprep.subr.mxu0 0.0
      %1265 = vmatpush1.msra.mxu0 0.0
      %1266 = vmatprep.subr.mxu0 0.0
      %1267 = vmatpush1.msra.mxu0 0.0
      %1268 = vmatprep.subr.mxu0 0.0
      %1269 = vmatpush1.msra.mxu0 0.0
      %1270 = vmatprep.subr.mxu0 0.0
      %1271 = vmatpush1.msra.mxu0 0.0
      %1272 = vmatprep.subr.mxu0 0.0
      %1273 = vmatpush1.msra.mxu0 0.0
      %1274 = vmatprep.subr.mxu0 0.0
      %1275 = vmatpush1.msra.mxu0 0.0
      %1276 = vmatprep.subr.mxu0 0.0
      %1277 = vmatpush1.msra.mxu0 0.0
      %1278 = vmatprep.subr.mxu0 0.0
      %1279 = vmatpush1.msra.mxu0 0.0
      %1280 = vmatprep.subr.mxu0 0.0
      %1281 = vmatpush1.msra.mxu0 0.0
      %1282 = vmatprep.subr.mxu0 0.0
      %1283 = vmatpush1.msra.mxu0 0.0
      %1284 = vmatprep.mubr.f32.mxu0 0.0
      %1285 = vmatmul.mubr.f32.gmra.mrb[0].mxu0 %v992
      %v1286 = vpop.f32.mrb[0].mxu0
      %v1287 = vadd.f32 0.0, %v1286
      %v1288 = vpop.f32.mrb[0].mxu0
      %1289 = vdwg.mxu0
      %v1290 = vadd.f32 %v990, %v1287
      %v1291 = vxor.u32 %v1290, 2147483648
      %v1292 = vmul.f32 %v1291, 1.442695
      %v1293 = vpow.pop %v1292
      %v1294 = vadd.f32 %v1293, 1.0
      %v1295 = vrcp.pop %v1294
      %v1296 = vmul.f32 1.0, %v1295
      %v1297 = vmul.f32 %v1147, %v976
      %v1298 = vmul.f32 %v1070, %v1219
      %v1299 = vadd.f32 %v1297, %v1298
      %v1300 = vtanh.pop %v1299
      %v1301 = vmul.f32 %v1296, %v1300
      %s1302 = smul.u32 %s983, 2
      %s1303 = scalar_lea.vmem %s301, %s1302
      %1304 = vst.msk [vmem:[%s1303] sm:$0x3] %vm656, %v1301
      %s1305 = smul.u32 %s659, 3
      %s1306 = sadd.s32 %s334, %s1305
      %s1307 = smul.u32 %s1306, 4
      %s1308 = smul.u32 %s1307, 2
      %s1309 = scalar_lea.vmem %s280, %s1308
      %v1310 = vld [vmem:[%s1309] sm:$0x3]
      %v1311 = vld [vmem:[%s1309 + $0x2] sm:$0x3]
      %v1312 = vld [vmem:[%s1309 + $0x4] sm:$0x3]
      %v1313 = vld [vmem:[%s1309 + $0x6] sm:$0x3]
      %v1315 = vsel %vm342, %v1301, 0
      %1317 = vmatprep.subr.mxu0 0.0
      %1318 = vmatpush1.msra.mxu0 %v321
      %1319 = vmatprep.subr.mxu0 0.0
      %1320 = vmatpush1.msra.mxu0 %v322
      %1321 = vmatprep.subr.mxu0 0.0
      %1322 = vmatpush1.msra.mxu0 0.0
      %1323 = vmatprep.subr.mxu0 0.0
      %1324 = vmatpush1.msra.mxu0 0.0
      %1325 = vmatprep.subr.mxu0 0.0
      %1326 = vmatpush1.msra.mxu0 0.0
      %1327 = vmatprep.subr.mxu0 0.0
      %1328 = vmatpush1.msra.mxu0 0.0
      %1329 = vmatprep.subr.mxu0 0.0
      %1330 = vmatpush1.msra.mxu0 0.0
      %1331 = vmatprep.subr.mxu0 0.0
      %1332 = vmatpush1.msra.mxu0 0.0
      %1333 = vmatprep.subr.mxu0 0.0
      %1334 = vmatpush1.msra.mxu0 0.0
      %1335 = vmatprep.subr.mxu0 0.0
      %1336 = vmatpush1.msra.mxu0 0.0
      %1337 = vmatprep.subr.mxu0 0.0
      %1338 = vmatpush1.msra.mxu0 0.0
      %1339 = vmatprep.subr.mxu0 0.0
      %1340 = vmatpush1.msra.mxu0 0.0
      %1341 = vmatprep.subr.mxu0 0.0
      %1342 = vmatpush1.msra.mxu0 0.0
      %1343 = vmatprep.subr.mxu0 0.0
      %1344 = vmatpush1.msra.mxu0 0.0
      %1345 = vmatprep.subr.mxu0 0.0
      %1346 = vmatpush1.msra.mxu0 0.0
      %1347 = vmatprep.subr.mxu0 0.0
      %1348 = vmatpush1.msra.mxu0 0.0
      %1349 = vmatprep.subr.mxu0 0.0
      %1350 = vmatpush1.msra.mxu0 0.0
      %1351 = vmatprep.subr.mxu0 0.0
      %1352 = vmatpush1.msra.mxu0 0.0
      %1353 = vmatprep.subr.mxu0 0.0
      %1354 = vmatpush1.msra.mxu0 0.0
      %1355 = vmatprep.subr.mxu0 0.0
      %1356 = vmatpush1.msra.mxu0 0.0
      %1357 = vmatprep.subr.mxu0 0.0
      %1358 = vmatpush1.msra.mxu0 0.0
      %1359 = vmatprep.subr.mxu0 0.0
      %1360 = vmatpush1.msra.mxu0 0.0
      %1361 = vmatprep.subr.mxu0 0.0
      %1362 = vmatpush1.msra.mxu0 0.0
      %1363 = vmatprep.subr.mxu0 0.0
      %1364 = vmatpush1.msra.mxu0 0.0
      %1365 = vmatprep.subr.mxu0 0.0
      %1366 = vmatpush1.msra.mxu0 0.0
      %1367 = vmatprep.subr.mxu0 0.0
      %1368 = vmatpush1.msra.mxu0 0.0
      %1369 = vmatprep.subr.mxu0 0.0
      %1370 = vmatpush1.msra.mxu0 0.0
      %1371 = vmatprep.subr.mxu0 0.0
      %1372 = vmatpush1.msra.mxu0 0.0
      %1373 = vmatprep.subr.mxu0 0.0
      %1374 = vmatpush1.msra.mxu0 0.0
      %1375 = vmatprep.subr.mxu0 0.0
      %1376 = vmatpush1.msra.mxu0 0.0
      %1377 = vmatprep.subr.mxu0 0.0
      %1378 = vmatpush1.msra.mxu0 0.0
      %1379 = vmatprep.subr.mxu0 0.0
      %1380 = vmatpush1.msra.mxu0 0.0
      %1381 = vmatprep.mubr.f32.mxu0 0.0
      %1382 = vmatmul.mubr.f32.gmra.mrb[0].mxu0 %v1315
      %v1383 = vpop.f32.mrb[0].mxu0
      %v1384 = vadd.f32 0.0, %v1383
      %v1385 = vpop.f32.mrb[0].mxu0
      %1386 = vdwg.mxu0
      %v1387 = vadd.f32 %v1310, %v1384
      %v1388 = vxor.u32 %v1387, 2147483648
      %v1389 = vmul.f32 %v1388, 1.442695
      %v1390 = vpow.pop %v1389
      %v1391 = vadd.f32 %v1390, 1.0
      %v1392 = vrcp.pop %v1391
      %v1393 = vmul.f32 1.0, %v1392
      %1394 = vmatprep.subr.mxu0 0.0
      %1395 = vmatpush1.msra.mxu0 %v324
      %1396 = vmatprep.subr.mxu0 0.0
      %1397 = vmatpush1.msra.mxu0 %v325
      %1398 = vmatprep.subr.mxu0 0.0
      %1399 = vmatpush1.msra.mxu0 0.0
      %1400 = vmatprep.subr.mxu0 0.0
      %1401 = vmatpush1.msra.mxu0 0.0
      %1402 = vmatprep.subr.mxu0 0.0
      %1403 = vmatpush1.msra.mxu0 0.0
      %1404 = vmatprep.subr.mxu0 0.0
      %1405 = vmatpush1.msra.mxu0 0.0
      %1406 = vmatprep.subr.mxu0 0.0
      %1407 = vmatpush1.msra.mxu0 0.0
      %1408 = vmatprep.subr.mxu0 0.0
      %1409 = vmatpush1.msra.mxu0 0.0
      %1410 = vmatprep.subr.mxu0 0.0
      %1411 = vmatpush1.msra.mxu0 0.0
      %1412 = vmatprep.subr.mxu0 0.0
      %1413 = vmatpush1.msra.mxu0 0.0
      %1414 = vmatprep.subr.mxu0 0.0
      %1415 = vmatpush1.msra.mxu0 0.0
      %1416 = vmatprep.subr.mxu0 0.0
      %1417 = vmatpush1.msra.mxu0 0.0
      %1418 = vmatprep.subr.mxu0 0.0
      %1419 = vmatpush1.msra.mxu0 0.0
      %1420 = vmatprep.subr.mxu0 0.0
      %1421 = vmatpush1.msra.mxu0 0.0
      %1422 = vmatprep.subr.mxu0 0.0
      %1423 = vmatpush1.msra.mxu0 0.0
      %1424 = vmatprep.subr.mxu0 0.0
      %1425 = vmatpush1.msra.mxu0 0.0
      %1426 = vmatprep.subr.mxu0 0.0
      %1427 = vmatpush1.msra.mxu0 0.0
      %1428 = vmatprep.subr.mxu0 0.0
      %1429 = vmatpush1.msra.mxu0 0.0
      %1430 = vmatprep.subr.mxu0 0.0
      %1431 = vmatpush1.msra.mxu0 0.0
      %1432 = vmatprep.subr.mxu0 0.0
      %1433 = vmatpush1.msra.mxu0 0.0
      %1434 = vmatprep.subr.mxu0 0.0
      %1435 = vmatpush1.msra.mxu0 0.0
      %1436 = vmatprep.subr.mxu0 0.0
      %1437 = vmatpush1.msra.mxu0 0.0
      %1438 = vmatprep.subr.mxu0 0.0
      %1439 = vmatpush1.msra.mxu0 0.0
      %1440 = vmatprep.subr.mxu0 0.0
      %1441 = vmatpush1.msra.mxu0 0.0
      %1442 = vmatprep.subr.mxu0 0.0
      %1443 = vmatpush1.msra.mxu0 0.0
      %1444 = vmatprep.subr.mxu0 0.0
      %1445 = vmatpush1.msra.mxu0 0.0
      %1446 = vmatprep.subr.mxu0 0.0
      %1447 = vmatpush1.msra.mxu0 0.0
      %1448 = vmatprep.subr.mxu0 0.0
      %1449 = vmatpush1.msra.mxu0 0.0
      %1450 = vmatprep.subr.mxu0 0.0
      %1451 = vmatpush1.msra.mxu0 0.0
      %1452 = vmatprep.subr.mxu0 0.0
      %1453 = vmatpush1.msra.mxu0 0.0
      %1454 = vmatprep.subr.mxu0 0.0
      %1455 = vmatpush1.msra.mxu0 0.0
      %1456 = vmatprep.subr.mxu0 0.0
      %1457 = vmatpush1.msra.mxu0 0.0
      %1458 = vmatprep.mubr.f32.mxu0 0.0
      %1459 = vmatmul.mubr.f32.gmra.mrb[0].mxu0 %v1315
      %v1460 = vpop.f32.mrb[0].mxu0
      %v1461 = vadd.f32 0.0, %v1460
      %v1462 = vpop.f32.mrb[0].mxu0
      %1463 = vdwg.mxu0
      %v1464 = vadd.f32 %v1311, %v1461
      %v1465 = vxor.u32 %v1464, 2147483648
      %v1466 = vmul.f32 %v1465, 1.442695
      %v1467 = vpow.pop %v1466
      %v1468 = vadd.f32 %v1467, 1.0
      %v1469 = vrcp.pop %v1468
      %v1470 = vmul.f32 1.0, %v1469
      %1471 = vmatprep.subr.mxu0 0.0
      %1472 = vmatpush1.msra.mxu0 %v327
      %1473 = vmatprep.subr.mxu0 0.0
      %1474 = vmatpush1.msra.mxu0 %v328
      %1475 = vmatprep.subr.mxu0 0.0
      %1476 = vmatpush1.msra.mxu0 0.0
      %1477 = vmatprep.subr.mxu0 0.0
      %1478 = vmatpush1.msra.mxu0 0.0
      %1479 = vmatprep.subr.mxu0 0.0
      %1480 = vmatpush1.msra.mxu0 0.0
      %1481 = vmatprep.subr.mxu0 0.0
      %1482 = vmatpush1.msra.mxu0 0.0
      %1483 = vmatprep.subr.mxu0 0.0
      %1484 = vmatpush1.msra.mxu0 0.0
      %1485 = vmatprep.subr.mxu0 0.0
      %1486 = vmatpush1.msra.mxu0 0.0
      %1487 = vmatprep.subr.mxu0 0.0
      %1488 = vmatpush1.msra.mxu0 0.0
      %1489 = vmatprep.subr.mxu0 0.0
      %1490 = vmatpush1.msra.mxu0 0.0
      %1491 = vmatprep.subr.mxu0 0.0
      %1492 = vmatpush1.msra.mxu0 0.0
      %1493 = vmatprep.subr.mxu0 0.0
      %1494 = vmatpush1.msra.mxu0 0.0
      %1495 = vmatprep.subr.mxu0 0.0
      %1496 = vmatpush1.msra.mxu0 0.0
      %1497 = vmatprep.subr.mxu0 0.0
      %1498 = vmatpush1.msra.mxu0 0.0
      %1499 = vmatprep.subr.mxu0 0.0
      %1500 = vmatpush1.msra.mxu0 0.0
      %1501 = vmatprep.subr.mxu0 0.0
      %1502 = vmatpush1.msra.mxu0 0.0
      %1503 = vmatprep.subr.mxu0 0.0
      %1504 = vmatpush1.msra.mxu0 0.0
      %1505 = vmatprep.subr.mxu0 0.0
      %1506 = vmatpush1.msra.mxu0 0.0
      %1507 = vmatprep.subr.mxu0 0.0
      %1508 = vmatpush1.msra.mxu0 0.0
      %1509 = vmatprep.subr.mxu0 0.0
      %1510 = vmatpush1.msra.mxu0 0.0
      %1511 = vmatprep.subr.mxu0 0.0
      %1512 = vmatpush1.msra.mxu0 0.0
      %1513 = vmatprep.subr.mxu0 0.0
      %1514 = vmatpush1.msra.mxu0 0.0
      %1515 = vmatprep.subr.mxu0 0.0
      %1516 = vmatpush1.msra.mxu0 0.0
      %1517 = vmatprep.subr.mxu0 0.0
      %1518 = vmatpush1.msra.mxu0 0.0
      %1519 = vmatprep.subr.mxu0 0.0
      %1520 = vmatpush1.msra.mxu0 0.0
      %1521 = vmatprep.subr.mxu0 0.0
      %1522 = vmatpush1.msra.mxu0 0.0
      %1523 = vmatprep.subr.mxu0 0.0
      %1524 = vmatpush1.msra.mxu0 0.0
      %1525 = vmatprep.subr.mxu0 0.0
      %1526 = vmatpush1.msra.mxu0 0.0
      %1527 = vmatprep.subr.mxu0 0.0
      %1528 = vmatpush1.msra.mxu0 0.0
      %1529 = vmatprep.subr.mxu0 0.0
      %1530 = vmatpush1.msra.mxu0 0.0
      %1531 = vmatprep.subr.mxu0 0.0
      %1532 = vmatpush1.msra.mxu0 0.0
      %1533 = vmatprep.subr.mxu0 0.0
      %1534 = vmatpush1.msra.mxu0 0.0
      %1535 = vmatprep.mubr.f32.mxu0 0.0
      %1536 = vmatmul.mubr.f32.gmra.mrb[0].mxu0 %v1315
      %v1537 = vpop.f32.mrb[0].mxu0
      %v1538 = vadd.f32 0.0, %v1537
      %v1539 = vpop.f32.mrb[0].mxu0
      %1540 = vdwg.mxu0
      %v1541 = vadd.f32 %v1312, %v1538
      %v1542 = vtanh.pop %v1541
      %1543 = vmatprep.subr.mxu0 0.0
      %1544 = vmatpush1.msra.mxu0 %v330
      %1545 = vmatprep.subr.mxu0 0.0
      %1546 = vmatpush1.msra.mxu0 %v331
      %1547 = vmatprep.subr.mxu0 0.0
      %1548 = vmatpush1.msra.mxu0 0.0
      %1549 = vmatprep.subr.mxu0 0.0
      %1550 = vmatpush1.msra.mxu0 0.0
      %1551 = vmatprep.subr.mxu0 0.0
      %1552 = vmatpush1.msra.mxu0 0.0
      %1553 = vmatprep.subr.mxu0 0.0
      %1554 = vmatpush1.msra.mxu0 0.0
      %1555 = vmatprep.subr.mxu0 0.0
      %1556 = vmatpush1.msra.mxu0 0.0
      %1557 = vmatprep.subr.mxu0 0.0
      %1558 = vmatpush1.msra.mxu0 0.0
      %1559 = vmatprep.subr.mxu0 0.0
      %1560 = vmatpush1.msra.mxu0 0.0
      %1561 = vmatprep.subr.mxu0 0.0
      %1562 = vmatpush1.msra.mxu0 0.0
      %1563 = vmatprep.subr.mxu0 0.0
      %1564 = vmatpush1.msra.mxu0 0.0
      %1565 = vmatprep.subr.mxu0 0.0
      %1566 = vmatpush1.msra.mxu0 0.0
      %1567 = vmatprep.subr.mxu0 0.0
      %1568 = vmatpush1.msra.mxu0 0.0
      %1569 = vmatprep.subr.mxu0 0.0
      %1570 = vmatpush1.msra.mxu0 0.0
      %1571 = vmatprep.subr.mxu0 0.0
      %1572 = vmatpush1.msra.mxu0 0.0
      %1573 = vmatprep.subr.mxu0 0.0
      %1574 = vmatpush1.msra.mxu0 0.0
      %1575 = vmatprep.subr.mxu0 0.0
      %1576 = vmatpush1.msra.mxu0 0.0
      %1577 = vmatprep.subr.mxu0 0.0
      %1578 = vmatpush1.msra.mxu0 0.0
      %1579 = vmatprep.subr.mxu0 0.0
      %1580 = vmatpush1.msra.mxu0 0.0
      %1581 = vmatprep.subr.mxu0 0.0
      %1582 = vmatpush1.msra.mxu0 0.0
      %1583 = vmatprep.subr.mxu0 0.0
      %1584 = vmatpush1.msra.mxu0 0.0
      %1585 = vmatprep.subr.mxu0 0.0
      %1586 = vmatpush1.msra.mxu0 0.0
      %1587 = vmatprep.subr.mxu0 0.0
      %1588 = vmatpush1.msra.mxu0 0.0
      %1589 = vmatprep.subr.mxu0 0.0
      %1590 = vmatpush1.msra.mxu0 0.0
      %1591 = vmatprep.subr.mxu0 0.0
      %1592 = vmatpush1.msra.mxu0 0.0
      %1593 = vmatprep.subr.mxu0 0.0
      %1594 = vmatpush1.msra.mxu0 0.0
      %1595 = vmatprep.subr.mxu0 0.0
      %1596 = vmatpush1.msra.mxu0 0.0
      %1597 = vmatprep.subr.mxu0 0.0
      %1598 = vmatpush1.msra.mxu0 0.0
      %1599 = vmatprep.subr.mxu0 0.0
      %1600 = vmatpush1.msra.mxu0 0.0
      %1601 = vmatprep.subr.mxu0 0.0
      %1602 = vmatpush1.msra.mxu0 0.0
      %1603 = vmatprep.subr.mxu0 0.0
      %1604 = vmatpush1.msra.mxu0 0.0
      %1605 = vmatprep.subr.mxu0 0.0
      %1606 = vmatpush1.msra.mxu0 0.0
      %1607 = vmatprep.mubr.f32.mxu0 0.0
      %1608 = vmatmul.mubr.f32.gmra.mrb[0].mxu0 %v1315
      %v1609 = vpop.f32.mrb[0].mxu0
      %v1610 = vadd.f32 0.0, %v1609
      %v1611 = vpop.f32.mrb[0].mxu0
      %1612 = vdwg.mxu0
      %v1613 = vadd.f32 %v1313, %v1610
      %v1614 = vxor.u32 %v1613, 2147483648
      %v1615 = vmul.f32 %v1614, 1.442695
      %v1616 = vpow.pop %v1615
      %v1617 = vadd.f32 %v1616, 1.0
      %v1618 = vrcp.pop %v1617
      %v1619 = vmul.f32 1.0, %v1618
      %v1620 = vmul.f32 %v1470, %v1299
      %v1621 = vmul.f32 %v1393, %v1542
      %v1622 = vadd.f32 %v1620, %v1621
      %v1623 = vtanh.pop %v1622
      %v1624 = vmul.f32 %v1619, %v1623
      %s1625 = smul.u32 %s1306, 2
      %s1626 = scalar_lea.vmem %s301, %s1625
      %1627 = vst.msk [vmem:[%s1626] sm:$0x3] %vm656, %v1624
      %s1628 = smul.u32 %s659, 4
      %s1629 = sadd.s32 %s334, %s1628
      %s1630 = smul.u32 %s1629, 4
      %s1631 = smul.u32 %s1630, 2
      %s1632 = scalar_lea.vmem %s280, %s1631
      %v1633 = vld [vmem:[%s1632] sm:$0x3]
      %v1634 = vld [vmem:[%s1632 + $0x2] sm:$0x3]
      %v1635 = vld [vmem:[%s1632 + $0x4] sm:$0x3]
      %v1636 = vld [vmem:[%s1632 + $0x6] sm:$0x3]
      %v1638 = vsel %vm342, %v1624, 0
      %1640 = vmatprep.subr.mxu0 0.0
      %1641 = vmatpush1.msra.mxu0 %v321
      %1642 = vmatprep.subr.mxu0 0.0
      %1643 = vmatpush1.msra.mxu0 %v322
      %1644 = vmatprep.subr.mxu0 0.0
      %1645 = vmatpush1.msra.mxu0 0.0
      %1646 = vmatprep.subr.mxu0 0.0
      %1647 = vmatpush1.msra.mxu0 0.0
      %1648 = vmatprep.subr.mxu0 0.0
      %1649 = vmatpush1.msra.mxu0 0.0
      %1650 = vmatprep.subr.mxu0 0.0
      %1651 = vmatpush1.msra.mxu0 0.0
      %1652 = vmatprep.subr.mxu0 0.0
      %1653 = vmatpush1.msra.mxu0 0.0
      %1654 = vmatprep.subr.mxu0 0.0
      %1655 = vmatpush1.msra.mxu0 0.0
      %1656 = vmatprep.subr.mxu0 0.0
      %1657 = vmatpush1.msra.mxu0 0.0
      %1658 = vmatprep.subr.mxu0 0.0
      %1659 = vmatpush1.msra.mxu0 0.0
      %1660 = vmatprep.subr.mxu0 0.0
      %1661 = vmatpush1.msra.mxu0 0.0
      %1662 = vmatprep.subr.mxu0 0.0
      %1663 = vmatpush1.msra.mxu0 0.0
      %1664 = vmatprep.subr.mxu0 0.0
      %1665 = vmatpush1.msra.mxu0 0.0
      %1666 = vmatprep.subr.mxu0 0.0
      %1667 = vmatpush1.msra.mxu0 0.0
      %1668 = vmatprep.subr.mxu0 0.0
      %1669 = vmatpush1.msra.mxu0 0.0
      %1670 = vmatprep.subr.mxu0 0.0
      %1671 = vmatpush1.msra.mxu0 0.0
      %1672 = vmatprep.subr.mxu0 0.0
      %1673 = vmatpush1.msra.mxu0 0.0
      %1674 = vmatprep.subr.mxu0 0.0
      %1675 = vmatpush1.msra.mxu0 0.0
      %1676 = vmatprep.subr.mxu0 0.0
      %1677 = vmatpush1.msra.mxu0 0.0
      %1678 = vmatprep.subr.mxu0 0.0
      %1679 = vmatpush1.msra.mxu0 0.0
      %1680 = vmatprep.subr.mxu0 0.0
      %1681 = vmatpush1.msra.mxu0 0.0
      %1682 = vmatprep.subr.mxu0 0.0
      %1683 = vmatpush1.msra.mxu0 0.0
      %1684 = vmatprep.subr.mxu0 0.0
      %1685 = vmatpush1.msra.mxu0 0.0
      %1686 = vmatprep.subr.mxu0 0.0
      %1687 = vmatpush1.msra.mxu0 0.0
      %1688 = vmatprep.subr.mxu0 0.0
      %1689 = vmatpush1.msra.mxu0 0.0
      %1690 = vmatprep.subr.mxu0 0.0
      %1691 = vmatpush1.msra.mxu0 0.0
      %1692 = vmatprep.subr.mxu0 0.0
      %1693 = vmatpush1.msra.mxu0 0.0
      %1694 = vmatprep.subr.mxu0 0.0
      %1695 = vmatpush1.msra.mxu0 0.0
      %1696 = vmatprep.subr.mxu0 0.0
      %1697 = vmatpush1.msra.mxu0 0.0
      %1698 = vmatprep.subr.mxu0 0.0
      %1699 = vmatpush1.msra.mxu0 0.0
      %1700 = vmatprep.subr.mxu0 0.0
      %1701 = vmatpush1.msra.mxu0 0.0
      %1702 = vmatprep.subr.mxu0 0.0
      %1703 = vmatpush1.msra.mxu0 0.0
      %1704 = vmatprep.mubr.f32.mxu0 0.0
      %1705 = vmatmul.mubr.f32.gmra.mrb[0].mxu0 %v1638
      %v1706 = vpop.f32.mrb[0].mxu0
      %v1707 = vadd.f32 0.0, %v1706
      %v1708 = vpop.f32.mrb[0].mxu0
      %1709 = vdwg.mxu0
      %v1710 = vadd.f32 %v1633, %v1707
      %v1711 = vxor.u32 %v1710, 2147483648
      %v1712 = vmul.f32 %v1711, 1.442695
      %v1713 = vpow.pop %v1712
      %v1714 = vadd.f32 %v1713, 1.0
      %v1715 = vrcp.pop %v1714
      %v1716 = vmul.f32 1.0, %v1715
      %1717 = vmatprep.subr.mxu0 0.0
      %1718 = vmatpush1.msra.mxu0 %v324
      %1719 = vmatprep.subr.mxu0 0.0
      %1720 = vmatpush1.msra.mxu0 %v325
      %1721 = vmatprep.subr.mxu0 0.0
      %1722 = vmatpush1.msra.mxu0 0.0
      %1723 = vmatprep.subr.mxu0 0.0
      %1724 = vmatpush1.msra.mxu0 0.0
      %1725 = vmatprep.subr.mxu0 0.0
      %1726 = vmatpush1.msra.mxu0 0.0
      %1727 = vmatprep.subr.mxu0 0.0
      %1728 = vmatpush1.msra.mxu0 0.0
      %1729 = vmatprep.subr.mxu0 0.0
      %1730 = vmatpush1.msra.mxu0 0.0
      %1731 = vmatprep.subr.mxu0 0.0
      %1732 = vmatpush1.msra.mxu0 0.0
      %1733 = vmatprep.subr.mxu0 0.0
      %1734 = vmatpush1.msra.mxu0 0.0
      %1735 = vmatprep.subr.mxu0 0.0
      %1736 = vmatpush1.msra.mxu0 0.0
      %1737 = vmatprep.subr.mxu0 0.0
      %1738 = vmatpush1.msra.mxu0 0.0
      %1739 = vmatprep.subr.mxu0 0.0
      %1740 = vmatpush1.msra.mxu0 0.0
      %1741 = vmatprep.subr.mxu0 0.0
      %1742 = vmatpush1.msra.mxu0 0.0
      %1743 = vmatprep.subr.mxu0 0.0
      %1744 = vmatpush1.msra.mxu0 0.0
      %1745 = vmatprep.subr.mxu0 0.0
      %1746 = vmatpush1.msra.mxu0 0.0
      %1747 = vmatprep.subr.mxu0 0.0
      %1748 = vmatpush1.msra.mxu0 0.0
      %1749 = vmatprep.subr.mxu0 0.0
      %1750 = vmatpush1.msra.mxu0 0.0
      %1751 = vmatprep.subr.mxu0 0.0
      %1752 = vmatpush1.msra.mxu0 0.0
      %1753 = vmatprep.subr.mxu0 0.0
      %1754 = vmatpush1.msra.mxu0 0.0
      %1755 = vmatprep.subr.mxu0 0.0
      %1756 = vmatpush1.msra.mxu0 0.0
      %1757 = vmatprep.subr.mxu0 0.0
      %1758 = vmatpush1.msra.mxu0 0.0
      %1759 = vmatprep.subr.mxu0 0.0
      %1760 = vmatpush1.msra.mxu0 0.0
      %1761 = vmatprep.subr.mxu0 0.0
      %1762 = vmatpush1.msra.mxu0 0.0
      %1763 = vmatprep.subr.mxu0 0.0
      %1764 = vmatpush1.msra.mxu0 0.0
      %1765 = vmatprep.subr.mxu0 0.0
      %1766 = vmatpush1.msra.mxu0 0.0
      %1767 = vmatprep.subr.mxu0 0.0
      %1768 = vmatpush1.msra.mxu0 0.0
      %1769 = vmatprep.subr.mxu0 0.0
      %1770 = vmatpush1.msra.mxu0 0.0
      %1771 = vmatprep.subr.mxu0 0.0
      %1772 = vmatpush1.msra.mxu0 0.0
      %1773 = vmatprep.subr.mxu0 0.0
      %1774 = vmatpush1.msra.mxu0 0.0
      %1775 = vmatprep.subr.mxu0 0.0
      %1776 = vmatpush1.msra.mxu0 0.0
      %1777 = vmatprep.subr.mxu0 0.0
      %1778 = vmatpush1.msra.mxu0 0.0
      %1779 = vmatprep.subr.mxu0 0.0
      %1780 = vmatpush1.msra.mxu0 0.0
      %1781 = vmatprep.mubr.f32.mxu0 0.0
      %1782 = vmatmul.mubr.f32.gmra.mrb[0].mxu0 %v1638
      %v1783 = vpop.f32.mrb[0].mxu0
      %v1784 = vadd.f32 0.0, %v1783
      %v1785 = vpop.f32.mrb[0].mxu0
      %1786 = vdwg.mxu0
      %v1787 = vadd.f32 %v1634, %v1784
      %v1788 = vxor.u32 %v1787, 2147483648
      %v1789 = vmul.f32 %v1788, 1.442695
      %v1790 = vpow.pop %v1789
      %v1791 = vadd.f32 %v1790, 1.0
      %v1792 = vrcp.pop %v1791
      %v1793 = vmul.f32 1.0, %v1792
      %1794 = vmatprep.subr.mxu0 0.0
      %1795 = vmatpush1.msra.mxu0 %v327
      %1796 = vmatprep.subr.mxu0 0.0
      %1797 = vmatpush1.msra.mxu0 %v328
      %1798 = vmatprep.subr.mxu0 0.0
      %1799 = vmatpush1.msra.mxu0 0.0
      %1800 = vmatprep.subr.mxu0 0.0
      %1801 = vmatpush1.msra.mxu0 0.0
      %1802 = vmatprep.subr.mxu0 0.0
      %1803 = vmatpush1.msra.mxu0 0.0
      %1804 = vmatprep.subr.mxu0 0.0
      %1805 = vmatpush1.msra.mxu0 0.0
      %1806 = vmatprep.subr.mxu0 0.0
      %1807 = vmatpush1.msra.mxu0 0.0
      %1808 = vmatprep.subr.mxu0 0.0
      %1809 = vmatpush1.msra.mxu0 0.0
      %1810 = vmatprep.subr.mxu0 0.0
      %1811 = vmatpush1.msra.mxu0 0.0
      %1812 = vmatprep.subr.mxu0 0.0
      %1813 = vmatpush1.msra.mxu0 0.0
      %1814 = vmatprep.subr.mxu0 0.0
      %1815 = vmatpush1.msra.mxu0 0.0
      %1816 = vmatprep.subr.mxu0 0.0
      %1817 = vmatpush1.msra.mxu0 0.0
      %1818 = vmatprep.subr.mxu0 0.0
      %1819 = vmatpush1.msra.mxu0 0.0
      %1820 = vmatprep.subr.mxu0 0.0
      %1821 = vmatpush1.msra.mxu0 0.0
      %1822 = vmatprep.subr.mxu0 0.0
      %1823 = vmatpush1.msra.mxu0 0.0
      %1824 = vmatprep.subr.mxu0 0.0
      %1825 = vmatpush1.msra.mxu0 0.0
      %1826 = vmatprep.subr.mxu0 0.0
      %1827 = vmatpush1.msra.mxu0 0.0
      %1828 = vmatprep.subr.mxu0 0.0
      %1829 = vmatpush1.msra.mxu0 0.0
      %1830 = vmatprep.subr.mxu0 0.0
      %1831 = vmatpush1.msra.mxu0 0.0
      %1832 = vmatprep.subr.mxu0 0.0
      %1833 = vmatpush1.msra.mxu0 0.0
      %1834 = vmatprep.subr.mxu0 0.0
      %1835 = vmatpush1.msra.mxu0 0.0
      %1836 = vmatprep.subr.mxu0 0.0
      %1837 = vmatpush1.msra.mxu0 0.0
      %1838 = vmatprep.subr.mxu0 0.0
      %1839 = vmatpush1.msra.mxu0 0.0
      %1840 = vmatprep.subr.mxu0 0.0
      %1841 = vmatpush1.msra.mxu0 0.0
      %1842 = vmatprep.subr.mxu0 0.0
      %1843 = vmatpush1.msra.mxu0 0.0
      %1844 = vmatprep.subr.mxu0 0.0
      %1845 = vmatpush1.msra.mxu0 0.0
      %1846 = vmatprep.subr.mxu0 0.0
      %1847 = vmatpush1.msra.mxu0 0.0
      %1848 = vmatprep.subr.mxu0 0.0
      %1849 = vmatpush1.msra.mxu0 0.0
      %1850 = vmatprep.subr.mxu0 0.0
      %1851 = vmatpush1.msra.mxu0 0.0
      %1852 = vmatprep.subr.mxu0 0.0
      %1853 = vmatpush1.msra.mxu0 0.0
      %1854 = vmatprep.subr.mxu0 0.0
      %1855 = vmatpush1.msra.mxu0 0.0
      %1856 = vmatprep.subr.mxu0 0.0
      %1857 = vmatpush1.msra.mxu0 0.0
      %1858 = vmatprep.mubr.f32.mxu0 0.0
      %1859 = vmatmul.mubr.f32.gmra.mrb[0].mxu0 %v1638
      %v1860 = vpop.f32.mrb[0].mxu0
      %v1861 = vadd.f32 0.0, %v1860
      %v1862 = vpop.f32.mrb[0].mxu0
      %1863 = vdwg.mxu0
      %v1864 = vadd.f32 %v1635, %v1861
      %v1865 = vtanh.pop %v1864
      %1866 = vmatprep.subr.mxu0 0.0
      %1867 = vmatpush1.msra.mxu0 %v330
      %1868 = vmatprep.subr.mxu0 0.0
      %1869 = vmatpush1.msra.mxu0 %v331
      %1870 = vmatprep.subr.mxu0 0.0
      %1871 = vmatpush1.msra.mxu0 0.0
      %1872 = vmatprep.subr.mxu0 0.0
      %1873 = vmatpush1.msra.mxu0 0.0
      %1874 = vmatprep.subr.mxu0 0.0
      %1875 = vmatpush1.msra.mxu0 0.0
      %1876 = vmatprep.subr.mxu0 0.0
      %1877 = vmatpush1.msra.mxu0 0.0
      %1878 = vmatprep.subr.mxu0 0.0
      %1879 = vmatpush1.msra.mxu0 0.0
      %1880 = vmatprep.subr.mxu0 0.0
      %1881 = vmatpush1.msra.mxu0 0.0
      %1882 = vmatprep.subr.mxu0 0.0
      %1883 = vmatpush1.msra.mxu0 0.0
      %1884 = vmatprep.subr.mxu0 0.0
      %1885 = vmatpush1.msra.mxu0 0.0
      %1886 = vmatprep.subr.mxu0 0.0
      %1887 = vmatpush1.msra.mxu0 0.0
      %1888 = vmatprep.subr.mxu0 0.0
      %1889 = vmatpush1.msra.mxu0 0.0
      %1890 = vmatprep.subr.mxu0 0.0
      %1891 = vmatpush1.msra.mxu0 0.0
      %1892 = vmatprep.subr.mxu0 0.0
      %1893 = vmatpush1.msra.mxu0 0.0
      %1894 = vmatprep.subr.mxu0 0.0
      %1895 = vmatpush1.msra.mxu0 0.0
      %1896 = vmatprep.subr.mxu0 0.0
      %1897 = vmatpush1.msra.mxu0 0.0
      %1898 = vmatprep.subr.mxu0 0.0
      %1899 = vmatpush1.msra.mxu0 0.0
      %1900 = vmatprep.subr.mxu0 0.0
      %1901 = vmatpush1.msra.mxu0 0.0
      %1902 = vmatprep.subr.mxu0 0.0
      %1903 = vmatpush1.msra.mxu0 0.0
      %1904 = vmatprep.subr.mxu0 0.0
      %1905 = vmatpush1.msra.mxu0 0.0
      %1906 = vmatprep.subr.mxu0 0.0
      %1907 = vmatpush1.msra.mxu0 0.0
      %1908 = vmatprep.subr.mxu0 0.0
      %1909 = vmatpush1.msra.mxu0 0.0
      %1910 = vmatprep.subr.mxu0 0.0
      %1911 = vmatpush1.msra.mxu0 0.0
      %1912 = vmatprep.subr.mxu0 0.0
      %1913 = vmatpush1.msra.mxu0 0.0
      %1914 = vmatprep.subr.mxu0 0.0
      %1915 = vmatpush1.msra.mxu0 0.0
      %1916 = vmatprep.subr.mxu0 0.0
      %1917 = vmatpush1.msra.mxu0 0.0
      %1918 = vmatprep.subr.mxu0 0.0
      %1919 = vmatpush1.msra.mxu0 0.0
      %1920 = vmatprep.subr.mxu0 0.0
      %1921 = vmatpush1.msra.mxu0 0.0
      %1922 = vmatprep.subr.mxu0 0.0
      %1923 = vmatpush1.msra.mxu0 0.0
      %1924 = vmatprep.subr.mxu0 0.0
      %1925 = vmatpush1.msra.mxu0 0.0
      %1926 = vmatprep.subr.mxu0 0.0
      %1927 = vmatpush1.msra.mxu0 0.0
      %1928 = vmatprep.subr.mxu0 0.0
      %1929 = vmatpush1.msra.mxu0 0.0
      %1930 = vmatprep.mubr.f32.mxu0 0.0
      %1931 = vmatmul.mubr.f32.gmra.mrb[0].mxu0 %v1638
      %v1932 = vpop.f32.mrb[0].mxu0
      %v1933 = vadd.f32 0.0, %v1932
      %v1934 = vpop.f32.mrb[0].mxu0
      %1935 = vdwg.mxu0
      %v1936 = vadd.f32 %v1636, %v1933
      %v1937 = vxor.u32 %v1936, 2147483648
      %v1938 = vmul.f32 %v1937, 1.442695
      %v1939 = vpow.pop %v1938
      %v1940 = vadd.f32 %v1939, 1.0
      %v1941 = vrcp.pop %v1940
      %v1942 = vmul.f32 1.0, %v1941
      %v1943 = vmul.f32 %v1793, %v1622
      %v1944 = vmul.f32 %v1716, %v1865
      %v1945 = vadd.f32 %v1943, %v1944
      %v1946 = vtanh.pop %v1945
      %v1947 = vmul.f32 %v1942, %v1946
      %s1948 = smul.u32 %s1629, 2
      %s1949 = scalar_lea.vmem %s301, %s1948
      %1950 = vst.msk [vmem:[%s1949] sm:$0x3] %vm656, %v1947
      %s1951 = smul.u32 %s659, 5
      %s1952 = sadd.s32 %s334, %s1951
      %s1953 = smul.u32 %s1952, 4
      %s1954 = smul.u32 %s1953, 2
      %s1955 = scalar_lea.vmem %s280, %s1954
      %v1956 = vld [vmem:[%s1955] sm:$0x3]
      %v1957 = vld [vmem:[%s1955 + $0x2] sm:$0x3]
      %v1958 = vld [vmem:[%s1955 + $0x4] sm:$0x3]
      %v1959 = vld [vmem:[%s1955 + $0x6] sm:$0x3]
      %v1961 = vsel %vm342, %v1947, 0
      %1963 = vmatprep.subr.mxu0 0.0
      %1964 = vmatpush1.msra.mxu0 %v321
      %1965 = vmatprep.subr.mxu0 0.0
      %1966 = vmatpush1.msra.mxu0 %v322
      %1967 = vmatprep.subr.mxu0 0.0
      %1968 = vmatpush1.msra.mxu0 0.0
      %1969 = vmatprep.subr.mxu0 0.0
      %1970 = vmatpush1.msra.mxu0 0.0
      %1971 = vmatprep.subr.mxu0 0.0
      %1972 = vmatpush1.msra.mxu0 0.0
      %1973 = vmatprep.subr.mxu0 0.0
      %1974 = vmatpush1.msra.mxu0 0.0
      %1975 = vmatprep.subr.mxu0 0.0
      %1976 = vmatpush1.msra.mxu0 0.0
      %1977 = vmatprep.subr.mxu0 0.0
      %1978 = vmatpush1.msra.mxu0 0.0
      %1979 = vmatprep.subr.mxu0 0.0
      %1980 = vmatpush1.msra.mxu0 0.0
      %1981 = vmatprep.subr.mxu0 0.0
      %1982 = vmatpush1.msra.mxu0 0.0
      %1983 = vmatprep.subr.mxu0 0.0
      %1984 = vmatpush1.msra.mxu0 0.0
      %1985 = vmatprep.subr.mxu0 0.0
      %1986 = vmatpush1.msra.mxu0 0.0
      %1987 = vmatprep.subr.mxu0 0.0
      %1988 = vmatpush1.msra.mxu0 0.0
      %1989 = vmatprep.subr.mxu0 0.0
      %1990 = vmatpush1.msra.mxu0 0.0
      %1991 = vmatprep.subr.mxu0 0.0
      %1992 = vmatpush1.msra.mxu0 0.0
      %1993 = vmatprep.subr.mxu0 0.0
      %1994 = vmatpush1.msra.mxu0 0.0
      %1995 = vmatprep.subr.mxu0 0.0
      %1996 = vmatpush1.msra.mxu0 0.0
      %1997 = vmatprep.subr.mxu0 0.0
      %1998 = vmatpush1.msra.mxu0 0.0
      %1999 = vmatprep.subr.mxu0 0.0
      %2000 = vmatpush1.msra.mxu0 0.0
      %2001 = vmatprep.subr.mxu0 0.0
      %2002 = vmatpush1.msra.mxu0 0.0
      %2003 = vmatprep.subr.mxu0 0.0
      %2004 = vmatpush1.msra.mxu0 0.0
      %2005 = vmatprep.subr.mxu0 0.0
      %2006 = vmatpush1.msra.mxu0 0.0
      %2007 = vmatprep.subr.mxu0 0.0
      %2008 = vmatpush1.msra.mxu0 0.0
      %2009 = vmatprep.subr.mxu0 0.0
      %2010 = vmatpush1.msra.mxu0 0.0
      %2011 = vmatprep.subr.mxu0 0.0
      %2012 = vmatpush1.msra.mxu0 0.0
      %2013 = vmatprep.subr.mxu0 0.0
      %2014 = vmatpush1.msra.mxu0 0.0
      %2015 = vmatprep.subr.mxu0 0.0
      %2016 = vmatpush1.msra.mxu0 0.0
      %2017 = vmatprep.subr.mxu0 0.0
      %2018 = vmatpush1.msra.mxu0 0.0
      %2019 = vmatprep.subr.mxu0 0.0
      %2020 = vmatpush1.msra.mxu0 0.0
      %2021 = vmatprep.subr.mxu0 0.0
      %2022 = vmatpush1.msra.mxu0 0.0
      %2023 = vmatprep.subr.mxu0 0.0
      %2024 = vmatpush1.msra.mxu0 0.0
      %2025 = vmatprep.subr.mxu0 0.0
      %2026 = vmatpush1.msra.mxu0 0.0
      %2027 = vmatprep.mubr.f32.mxu0 0.0
      %2028 = vmatmul.mubr.f32.gmra.mrb[0].mxu0 %v1961
      %v2029 = vpop.f32.mrb[0].mxu0
      %v2030 = vadd.f32 0.0, %v2029
      %v2031 = vpop.f32.mrb[0].mxu0
      %2032 = vdwg.mxu0
      %v2033 = vadd.f32 %v1956, %v2030
      %v2034 = vxor.u32 %v2033, 2147483648
      %v2035 = vmul.f32 %v2034, 1.442695
      %v2036 = vpow.pop %v2035
      %v2037 = vadd.f32 %v2036, 1.0
      %v2038 = vrcp.pop %v2037
      %v2039 = vmul.f32 1.0, %v2038
      %2040 = vmatprep.subr.mxu0 0.0
      %2041 = vmatpush1.msra.mxu0 %v324
      %2042 = vmatprep.subr.mxu0 0.0
      %2043 = vmatpush1.msra.mxu0 %v325
      %2044 = vmatprep.subr.mxu0 0.0
      %2045 = vmatpush1.msra.mxu0 0.0
      %2046 = vmatprep.subr.mxu0 0.0
      %2047 = vmatpush1.msra.mxu0 0.0
      %2048 = vmatprep.subr.mxu0 0.0
      %2049 = vmatpush1.msra.mxu0 0.0
      %2050 = vmatprep.subr.mxu0 0.0
      %2051 = vmatpush1.msra.mxu0 0.0
      %2052 = vmatprep.subr.mxu0 0.0
      %2053 = vmatpush1.msra.mxu0 0.0
      %2054 = vmatprep.subr.mxu0 0.0
      %2055 = vmatpush1.msra.mxu0 0.0
      %2056 = vmatprep.subr.mxu0 0.0
      %2057 = vmatpush1.msra.mxu0 0.0
      %2058 = vmatprep.subr.mxu0 0.0
      %2059 = vmatpush1.msra.mxu0 0.0
      %2060 = vmatprep.subr.mxu0 0.0
      %2061 = vmatpush1.msra.mxu0 0.0
      %2062 = vmatprep.subr.mxu0 0.0
      %2063 = vmatpush1.msra.mxu0 0.0
      %2064 = vmatprep.subr.mxu0 0.0
      %2065 = vmatpush1.msra.mxu0 0.0
      %2066 = vmatprep.subr.mxu0 0.0
      %2067 = vmatpush1.msra.mxu0 0.0
      %2068 = vmatprep.subr.mxu0 0.0
      %2069 = vmatpush1.msra.mxu0 0.0
      %2070 = vmatprep.subr.mxu0 0.0
      %2071 = vmatpush1.msra.mxu0 0.0
      %2072 = vmatprep.subr.mxu0 0.0
      %2073 = vmatpush1.msra.mxu0 0.0
      %2074 = vmatprep.subr.mxu0 0.0
      %2075 = vmatpush1.msra.mxu0 0.0
      %2076 = vmatprep.subr.mxu0 0.0
      %2077 = vmatpush1.msra.mxu0 0.0
      %2078 = vmatprep.subr.mxu0 0.0
      %2079 = vmatpush1.msra.mxu0 0.0
      %2080 = vmatprep.subr.mxu0 0.0
      %2081 = vmatpush1.msra.mxu0 0.0
      %2082 = vmatprep.subr.mxu0 0.0
      %2083 = vmatpush1.msra.mxu0 0.0
      %2084 = vmatprep.subr.mxu0 0.0
      %2085 = vmatpush1.msra.mxu0 0.0
      %2086 = vmatprep.subr.mxu0 0.0
      %2087 = vmatpush1.msra.mxu0 0.0
      %2088 = vmatprep.subr.mxu0 0.0
      %2089 = vmatpush1.msra.mxu0 0.0
      %2090 = vmatprep.subr.mxu0 0.0
      %2091 = vmatpush1.msra.mxu0 0.0
      %2092 = vmatprep.subr.mxu0 0.0
      %2093 = vmatpush1.msra.mxu0 0.0
      %2094 = vmatprep.subr.mxu0 0.0
      %2095 = vmatpush1.msra.mxu0 0.0
      %2096 = vmatprep.subr.mxu0 0.0
      %2097 = vmatpush1.msra.mxu0 0.0
      %2098 = vmatprep.subr.mxu0 0.0
      %2099 = vmatpush1.msra.mxu0 0.0
      %2100 = vmatprep.subr.mxu0 0.0
      %2101 = vmatpush1.msra.mxu0 0.0
      %2102 = vmatprep.subr.mxu0 0.0
      %2103 = vmatpush1.msra.mxu0 0.0
      %2104 = vmatprep.mubr.f32.mxu0 0.0
      %2105 = vmatmul.mubr.f32.gmra.mrb[0].mxu0 %v1961
      %v2106 = vpop.f32.mrb[0].mxu0
      %v2107 = vadd.f32 0.0, %v2106
      %v2108 = vpop.f32.mrb[0].mxu0
      %2109 = vdwg.mxu0
      %v2110 = vadd.f32 %v1957, %v2107
      %v2111 = vxor.u32 %v2110, 2147483648
      %v2112 = vmul.f32 %v2111, 1.442695
      %v2113 = vpow.pop %v2112
      %v2114 = vadd.f32 %v2113, 1.0
      %v2115 = vrcp.pop %v2114
      %v2116 = vmul.f32 1.0, %v2115
      %2117 = vmatprep.subr.mxu0 0.0
      %2118 = vmatpush1.msra.mxu0 %v327
      %2119 = vmatprep.subr.mxu0 0.0
      %2120 = vmatpush1.msra.mxu0 %v328
      %2121 = vmatprep.subr.mxu0 0.0
      %2122 = vmatpush1.msra.mxu0 0.0
      %2123 = vmatprep.subr.mxu0 0.0
      %2124 = vmatpush1.msra.mxu0 0.0
      %2125 = vmatprep.subr.mxu0 0.0
      %2126 = vmatpush1.msra.mxu0 0.0
      %2127 = vmatprep.subr.mxu0 0.0
      %2128 = vmatpush1.msra.mxu0 0.0
      %2129 = vmatprep.subr.mxu0 0.0
      %2130 = vmatpush1.msra.mxu0 0.0
      %2131 = vmatprep.subr.mxu0 0.0
      %2132 = vmatpush1.msra.mxu0 0.0
      %2133 = vmatprep.subr.mxu0 0.0
      %2134 = vmatpush1.msra.mxu0 0.0
      %2135 = vmatprep.subr.mxu0 0.0
      %2136 = vmatpush1.msra.mxu0 0.0
      %2137 = vmatprep.subr.mxu0 0.0
      %2138 = vmatpush1.msra.mxu0 0.0
      %2139 = vmatprep.subr.mxu0 0.0
      %2140 = vmatpush1.msra.mxu0 0.0
      %2141 = vmatprep.subr.mxu0 0.0
      %2142 = vmatpush1.msra.mxu0 0.0
      %2143 = vmatprep.subr.mxu0 0.0
      %2144 = vmatpush1.msra.mxu0 0.0
      %2145 = vmatprep.subr.mxu0 0.0
      %2146 = vmatpush1.msra.mxu0 0.0
      %2147 = vmatprep.subr.mxu0 0.0
      %2148 = vmatpush1.msra.mxu0 0.0
      %2149 = vmatprep.subr.mxu0 0.0
      %2150 = vmatpush1.msra.mxu0 0.0
      %2151 = vmatprep.subr.mxu0 0.0
      %2152 = vmatpush1.msra.mxu0 0.0
      %2153 = vmatprep.subr.mxu0 0.0
      %2154 = vmatpush1.msra.mxu0 0.0
      %2155 = vmatprep.subr.mxu0 0.0
      %2156 = vmatpush1.msra.mxu0 0.0
      %2157 = vmatprep.subr.mxu0 0.0
      %2158 = vmatpush1.msra.mxu0 0.0
      %2159 = vmatprep.subr.mxu0 0.0
      %2160 = vmatpush1.msra.mxu0 0.0
      %2161 = vmatprep.subr.mxu0 0.0
      %2162 = vmatpush1.msra.mxu0 0.0
      %2163 = vmatprep.subr.mxu0 0.0
      %2164 = vmatpush1.msra.mxu0 0.0
      %2165 = vmatprep.subr.mxu0 0.0
      %2166 = vmatpush1.msra.mxu0 0.0
      %2167 = vmatprep.subr.mxu0 0.0
      %2168 = vmatpush1.msra.mxu0 0.0
      %2169 = vmatprep.subr.mxu0 0.0
      %2170 = vmatpush1.msra.mxu0 0.0
      %2171 = vmatprep.subr.mxu0 0.0
      %2172 = vmatpush1.msra.mxu0 0.0
      %2173 = vmatprep.subr.mxu0 0.0
      %2174 = vmatpush1.msra.mxu0 0.0
      %2175 = vmatprep.subr.mxu0 0.0
      %2176 = vmatpush1.msra.mxu0 0.0
      %2177 = vmatprep.subr.mxu0 0.0
      %2178 = vmatpush1.msra.mxu0 0.0
      %2179 = vmatprep.subr.mxu0 0.0
      %2180 = vmatpush1.msra.mxu0 0.0
      %2181 = vmatprep.mubr.f32.mxu0 0.0
      %2182 = vmatmul.mubr.f32.gmra.mrb[0].mxu0 %v1961
      %v2183 = vpop.f32.mrb[0].mxu0
      %v2184 = vadd.f32 0.0, %v2183
      %v2185 = vpop.f32.mrb[0].mxu0
      %2186 = vdwg.mxu0
      %v2187 = vadd.f32 %v1958, %v2184
      %v2188 = vtanh.pop %v2187
      %2189 = vmatprep.subr.mxu0 0.0
      %2190 = vmatpush1.msra.mxu0 %v330
      %2191 = vmatprep.subr.mxu0 0.0
      %2192 = vmatpush1.msra.mxu0 %v331
      %2193 = vmatprep.subr.mxu0 0.0
      %2194 = vmatpush1.msra.mxu0 0.0
      %2195 = vmatprep.subr.mxu0 0.0
      %2196 = vmatpush1.msra.mxu0 0.0
      %2197 = vmatprep.subr.mxu0 0.0
      %2198 = vmatpush1.msra.mxu0 0.0
      %2199 = vmatprep.subr.mxu0 0.0
      %2200 = vmatpush1.msra.mxu0 0.0
      %2201 = vmatprep.subr.mxu0 0.0
      %2202 = vmatpush1.msra.mxu0 0.0
      %2203 = vmatprep.subr.mxu0 0.0
      %2204 = vmatpush1.msra.mxu0 0.0
      %2205 = vmatprep.subr.mxu0 0.0
      %2206 = vmatpush1.msra.mxu0 0.0
      %2207 = vmatprep.subr.mxu0 0.0
      %2208 = vmatpush1.msra.mxu0 0.0
      %2209 = vmatprep.subr.mxu0 0.0
      %2210 = vmatpush1.msra.mxu0 0.0
      %2211 = vmatprep.subr.mxu0 0.0
      %2212 = vmatpush1.msra.mxu0 0.0
      %2213 = vmatprep.subr.mxu0 0.0
      %2214 = vmatpush1.msra.mxu0 0.0
      %2215 = vmatprep.subr.mxu0 0.0
      %2216 = vmatpush1.msra.mxu0 0.0
      %2217 = vmatprep.subr.mxu0 0.0
      %2218 = vmatpush1.msra.mxu0 0.0
      %2219 = vmatprep.subr.mxu0 0.0
      %2220 = vmatpush1.msra.mxu0 0.0
      %2221 = vmatprep.subr.mxu0 0.0
      %2222 = vmatpush1.msra.mxu0 0.0
      %2223 = vmatprep.subr.mxu0 0.0
      %2224 = vmatpush1.msra.mxu0 0.0
      %2225 = vmatprep.subr.mxu0 0.0
      %2226 = vmatpush1.msra.mxu0 0.0
      %2227 = vmatprep.subr.mxu0 0.0
      %2228 = vmatpush1.msra.mxu0 0.0
      %2229 = vmatprep.subr.mxu0 0.0
      %2230 = vmatpush1.msra.mxu0 0.0
      %2231 = vmatprep.subr.mxu0 0.0
      %2232 = vmatpush1.msra.mxu0 0.0
      %2233 = vmatprep.subr.mxu0 0.0
      %2234 = vmatpush1.msra.mxu0 0.0
      %2235 = vmatprep.subr.mxu0 0.0
      %2236 = vmatpush1.msra.mxu0 0.0
      %2237 = vmatprep.subr.mxu0 0.0
      %2238 = vmatpush1.msra.mxu0 0.0
      %2239 = vmatprep.subr.mxu0 0.0
      %2240 = vmatpush1.msra.mxu0 0.0
      %2241 = vmatprep.subr.mxu0 0.0
      %2242 = vmatpush1.msra.mxu0 0.0
      %2243 = vmatprep.subr.mxu0 0.0
      %2244 = vmatpush1.msra.mxu0 0.0
      %2245 = vmatprep.subr.mxu0 0.0
      %2246 = vmatpush1.msra.mxu0 0.0
      %2247 = vmatprep.subr.mxu0 0.0
      %2248 = vmatpush1.msra.mxu0 0.0
      %2249 = vmatprep.subr.mxu0 0.0
      %2250 = vmatpush1.msra.mxu0 0.0
      %2251 = vmatprep.subr.mxu0 0.0
      %2252 = vmatpush1.msra.mxu0 0.0
      %2253 = vmatprep.mubr.f32.mxu0 0.0
      %2254 = vmatmul.mubr.f32.gmra.mrb[0].mxu0 %v1961
      %v2255 = vpop.f32.mrb[0].mxu0
      %v2256 = vadd.f32 0.0, %v2255
      %v2257 = vpop.f32.mrb[0].mxu0
      %2258 = vdwg.mxu0
      %v2259 = vadd.f32 %v1959, %v2256
      %v2260 = vxor.u32 %v2259, 2147483648
      %v2261 = vmul.f32 %v2260, 1.442695
      %v2262 = vpow.pop %v2261
      %v2263 = vadd.f32 %v2262, 1.0
      %v2264 = vrcp.pop %v2263
      %v2265 = vmul.f32 1.0, %v2264
      %v2266 = vmul.f32 %v2116, %v1945
      %v2267 = vmul.f32 %v2039, %v2188
      %v2268 = vadd.f32 %v2266, %v2267
      %v2269 = vtanh.pop %v2268
      %v2270 = vmul.f32 %v2265, %v2269
      %s2271 = smul.u32 %s1952, 2
      %s2272 = scalar_lea.vmem %s301, %s2271
      %2273 = vst.msk [vmem:[%s2272] sm:$0x3] %vm656, %v2270
      %s2274 = smul.u32 %s659, 6
      %s2275 = sadd.s32 %s334, %s2274
      %s2276 = smul.u32 %s2275, 4
      %s2277 = smul.u32 %s2276, 2
      %s2278 = scalar_lea.vmem %s280, %s2277
      %v2279 = vld [vmem:[%s2278] sm:$0x3]
      %v2280 = vld [vmem:[%s2278 + $0x2] sm:$0x3]
      %v2281 = vld [vmem:[%s2278 + $0x4] sm:$0x3]
      %v2282 = vld [vmem:[%s2278 + $0x6] sm:$0x3]
      %v2284 = vsel %vm342, %v2270, 0
      %2286 = vmatprep.subr.mxu0 0.0
      %2287 = vmatpush1.msra.mxu0 %v321
      %2288 = vmatprep.subr.mxu0 0.0
      %2289 = vmatpush1.msra.mxu0 %v322
      %2290 = vmatprep.subr.mxu0 0.0
      %2291 = vmatpush1.msra.mxu0 0.0
      %2292 = vmatprep.subr.mxu0 0.0
      %2293 = vmatpush1.msra.mxu0 0.0
      %2294 = vmatprep.subr.mxu0 0.0
      %2295 = vmatpush1.msra.mxu0 0.0
      %2296 = vmatprep.subr.mxu0 0.0
      %2297 = vmatpush1.msra.mxu0 0.0
      %2298 = vmatprep.subr.mxu0 0.0
      %2299 = vmatpush1.msra.mxu0 0.0
      %2300 = vmatprep.subr.mxu0 0.0
      %2301 = vmatpush1.msra.mxu0 0.0
      %2302 = vmatprep.subr.mxu0 0.0
      %2303 = vmatpush1.msra.mxu0 0.0
      %2304 = vmatprep.subr.mxu0 0.0
      %2305 = vmatpush1.msra.mxu0 0.0
      %2306 = vmatprep.subr.mxu0 0.0
      %2307 = vmatpush1.msra.mxu0 0.0
      %2308 = vmatprep.subr.mxu0 0.0
      %2309 = vmatpush1.msra.mxu0 0.0
      %2310 = vmatprep.subr.mxu0 0.0
      %2311 = vmatpush1.msra.mxu0 0.0
      %2312 = vmatprep.subr.mxu0 0.0
      %2313 = vmatpush1.msra.mxu0 0.0
      %2314 = vmatprep.subr.mxu0 0.0
      %2315 = vmatpush1.msra.mxu0 0.0
      %2316 = vmatprep.subr.mxu0 0.0
      %2317 = vmatpush1.msra.mxu0 0.0
      %2318 = vmatprep.subr.mxu0 0.0
      %2319 = vmatpush1.msra.mxu0 0.0
      %2320 = vmatprep.subr.mxu0 0.0
      %2321 = vmatpush1.msra.mxu0 0.0
      %2322 = vmatprep.subr.mxu0 0.0
      %2323 = vmatpush1.msra.mxu0 0.0
      %2324 = vmatprep.subr.mxu0 0.0
      %2325 = vmatpush1.msra.mxu0 0.0
      %2326 = vmatprep.subr.mxu0 0.0
      %2327 = vmatpush1.msra.mxu0 0.0
      %2328 = vmatprep.subr.mxu0 0.0
      %2329 = vmatpush1.msra.mxu0 0.0
      %2330 = vmatprep.subr.mxu0 0.0
      %2331 = vmatpush1.msra.mxu0 0.0
      %2332 = vmatprep.subr.mxu0 0.0
      %2333 = vmatpush1.msra.mxu0 0.0
      %2334 = vmatprep.subr.mxu0 0.0
      %2335 = vmatpush1.msra.mxu0 0.0
      %2336 = vmatprep.subr.mxu0 0.0
      %2337 = vmatpush1.msra.mxu0 0.0
      %2338 = vmatprep.subr.mxu0 0.0
      %2339 = vmatpush1.msra.mxu0 0.0
      %2340 = vmatprep.subr.mxu0 0.0
      %2341 = vmatpush1.msra.mxu0 0.0
      %2342 = vmatprep.subr.mxu0 0.0
      %2343 = vmatpush1.msra.mxu0 0.0
      %2344 = vmatprep.subr.mxu0 0.0
      %2345 = vmatpush1.msra.mxu0 0.0
      %2346 = vmatprep.subr.mxu0 0.0
      %2347 = vmatpush1.msra.mxu0 0.0
      %2348 = vmatprep.subr.mxu0 0.0
      %2349 = vmatpush1.msra.mxu0 0.0
      %2350 = vmatprep.mubr.f32.mxu0 0.0
      %2351 = vmatmul.mubr.f32.gmra.mrb[0].mxu0 %v2284
      %v2352 = vpop.f32.mrb[0].mxu0
      %v2353 = vadd.f32 0.0, %v2352
      %v2354 = vpop.f32.mrb[0].mxu0
      %2355 = vdwg.mxu0
      %v2356 = vadd.f32 %v2279, %v2353
      %v2357 = vxor.u32 %v2356, 2147483648
      %v2358 = vmul.f32 %v2357, 1.442695
      %v2359 = vpow.pop %v2358
      %v2360 = vadd.f32 %v2359, 1.0
      %v2361 = vrcp.pop %v2360
      %v2362 = vmul.f32 1.0, %v2361
      %2363 = vmatprep.subr.mxu0 0.0
      %2364 = vmatpush1.msra.mxu0 %v324
      %2365 = vmatprep.subr.mxu0 0.0
      %2366 = vmatpush1.msra.mxu0 %v325
      %2367 = vmatprep.subr.mxu0 0.0
      %2368 = vmatpush1.msra.mxu0 0.0
      %2369 = vmatprep.subr.mxu0 0.0
      %2370 = vmatpush1.msra.mxu0 0.0
      %2371 = vmatprep.subr.mxu0 0.0
      %2372 = vmatpush1.msra.mxu0 0.0
      %2373 = vmatprep.subr.mxu0 0.0
      %2374 = vmatpush1.msra.mxu0 0.0
      %2375 = vmatprep.subr.mxu0 0.0
      %2376 = vmatpush1.msra.mxu0 0.0
      %2377 = vmatprep.subr.mxu0 0.0
      %2378 = vmatpush1.msra.mxu0 0.0
      %2379 = vmatprep.subr.mxu0 0.0
      %2380 = vmatpush1.msra.mxu0 0.0
      %2381 = vmatprep.subr.mxu0 0.0
      %2382 = vmatpush1.msra.mxu0 0.0
      %2383 = vmatprep.subr.mxu0 0.0
      %2384 = vmatpush1.msra.mxu0 0.0
      %2385 = vmatprep.subr.mxu0 0.0
      %2386 = vmatpush1.msra.mxu0 0.0
      %2387 = vmatprep.subr.mxu0 0.0
      %2388 = vmatpush1.msra.mxu0 0.0
      %2389 = vmatprep.subr.mxu0 0.0
      %2390 = vmatpush1.msra.mxu0 0.0
      %2391 = vmatprep.subr.mxu0 0.0
      %2392 = vmatpush1.msra.mxu0 0.0
      %2393 = vmatprep.subr.mxu0 0.0
      %2394 = vmatpush1.msra.mxu0 0.0
      %2395 = vmatprep.subr.mxu0 0.0
      %2396 = vmatpush1.msra.mxu0 0.0
      %2397 = vmatprep.subr.mxu0 0.0
      %2398 = vmatpush1.msra.mxu0 0.0
      %2399 = vmatprep.subr.mxu0 0.0
      %2400 = vmatpush1.msra.mxu0 0.0
      %2401 = vmatprep.subr.mxu0 0.0
      %2402 = vmatpush1.msra.mxu0 0.0
      %2403 = vmatprep.subr.mxu0 0.0
      %2404 = vmatpush1.msra.mxu0 0.0
      %2405 = vmatprep.subr.mxu0 0.0
      %2406 = vmatpush1.msra.mxu0 0.0
      %2407 = vmatprep.subr.mxu0 0.0
      %2408 = vmatpush1.msra.mxu0 0.0
      %2409 = vmatprep.subr.mxu0 0.0
      %2410 = vmatpush1.msra.mxu0 0.0
      %2411 = vmatprep.subr.mxu0 0.0
      %2412 = vmatpush1.msra.mxu0 0.0
      %2413 = vmatprep.subr.mxu0 0.0
      %2414 = vmatpush1.msra.mxu0 0.0
      %2415 = vmatprep.subr.mxu0 0.0
      %2416 = vmatpush1.msra.mxu0 0.0
      %2417 = vmatprep.subr.mxu0 0.0
      %2418 = vmatpush1.msra.mxu0 0.0
      %2419 = vmatprep.subr.mxu0 0.0
      %2420 = vmatpush1.msra.mxu0 0.0
      %2421 = vmatprep.subr.mxu0 0.0
      %2422 = vmatpush1.msra.mxu0 0.0
      %2423 = vmatprep.subr.mxu0 0.0
      %2424 = vmatpush1.msra.mxu0 0.0
      %2425 = vmatprep.subr.mxu0 0.0
      %2426 = vmatpush1.msra.mxu0 0.0
      %2427 = vmatprep.mubr.f32.mxu0 0.0
      %2428 = vmatmul.mubr.f32.gmra.mrb[0].mxu0 %v2284
      %v2429 = vpop.f32.mrb[0].mxu0
      %v2430 = vadd.f32 0.0, %v2429
      %v2431 = vpop.f32.mrb[0].mxu0
      %2432 = vdwg.mxu0
      %v2433 = vadd.f32 %v2280, %v2430
      %v2434 = vxor.u32 %v2433, 2147483648
      %v2435 = vmul.f32 %v2434, 1.442695
      %v2436 = vpow.pop %v2435
      %v2437 = vadd.f32 %v2436, 1.0
      %v2438 = vrcp.pop %v2437
      %v2439 = vmul.f32 1.0, %v2438
      %2440 = vmatprep.subr.mxu0 0.0
      %2441 = vmatpush1.msra.mxu0 %v327
      %2442 = vmatprep.subr.mxu0 0.0
      %2443 = vmatpush1.msra.mxu0 %v328
      %2444 = vmatprep.subr.mxu0 0.0
      %2445 = vmatpush1.msra.mxu0 0.0
      %2446 = vmatprep.subr.mxu0 0.0
      %2447 = vmatpush1.msra.mxu0 0.0
      %2448 = vmatprep.subr.mxu0 0.0
      %2449 = vmatpush1.msra.mxu0 0.0
      %2450 = vmatprep.subr.mxu0 0.0
      %2451 = vmatpush1.msra.mxu0 0.0
      %2452 = vmatprep.subr.mxu0 0.0
      %2453 = vmatpush1.msra.mxu0 0.0
      %2454 = vmatprep.subr.mxu0 0.0
      %2455 = vmatpush1.msra.mxu0 0.0
      %2456 = vmatprep.subr.mxu0 0.0
      %2457 = vmatpush1.msra.mxu0 0.0
      %2458 = vmatprep.subr.mxu0 0.0
      %2459 = vmatpush1.msra.mxu0 0.0
      %2460 = vmatprep.subr.mxu0 0.0
      %2461 = vmatpush1.msra.mxu0 0.0
      %2462 = vmatprep.subr.mxu0 0.0
      %2463 = vmatpush1.msra.mxu0 0.0
      %2464 = vmatprep.subr.mxu0 0.0
      %2465 = vmatpush1.msra.mxu0 0.0
      %2466 = vmatprep.subr.mxu0 0.0
      %2467 = vmatpush1.msra.mxu0 0.0
      %2468 = vmatprep.subr.mxu0 0.0
      %2469 = vmatpush1.msra.mxu0 0.0
      %2470 = vmatprep.subr.mxu0 0.0
      %2471 = vmatpush1.msra.mxu0 0.0
      %2472 = vmatprep.subr.mxu0 0.0
      %2473 = vmatpush1.msra.mxu0 0.0
      %2474 = vmatprep.subr.mxu0 0.0
      %2475 = vmatpush1.msra.mxu0 0.0
      %2476 = vmatprep.subr.mxu0 0.0
      %2477 = vmatpush1.msra.mxu0 0.0
      %2478 = vmatprep.subr.mxu0 0.0
      %2479 = vmatpush1.msra.mxu0 0.0
      %2480 = vmatprep.subr.mxu0 0.0
      %2481 = vmatpush1.msra.mxu0 0.0
      %2482 = vmatprep.subr.mxu0 0.0
      %2483 = vmatpush1.msra.mxu0 0.0
      %2484 = vmatprep.subr.mxu0 0.0
      %2485 = vmatpush1.msra.mxu0 0.0
      %2486 = vmatprep.subr.mxu0 0.0
      %2487 = vmatpush1.msra.mxu0 0.0
      %2488 = vmatprep.subr.mxu0 0.0
      %2489 = vmatpush1.msra.mxu0 0.0
      %2490 = vmatprep.subr.mxu0 0.0
      %2491 = vmatpush1.msra.mxu0 0.0
      %2492 = vmatprep.subr.mxu0 0.0
      %2493 = vmatpush1.msra.mxu0 0.0
      %2494 = vmatprep.subr.mxu0 0.0
      %2495 = vmatpush1.msra.mxu0 0.0
      %2496 = vmatprep.subr.mxu0 0.0
      %2497 = vmatpush1.msra.mxu0 0.0
      %2498 = vmatprep.subr.mxu0 0.0
      %2499 = vmatpush1.msra.mxu0 0.0
      %2500 = vmatprep.subr.mxu0 0.0
      %2501 = vmatpush1.msra.mxu0 0.0
      %2502 = vmatprep.subr.mxu0 0.0
      %2503 = vmatpush1.msra.mxu0 0.0
      %2504 = vmatprep.mubr.f32.mxu0 0.0
      %2505 = vmatmul.mubr.f32.gmra.mrb[0].mxu0 %v2284
      %v2506 = vpop.f32.mrb[0].mxu0
      %v2507 = vadd.f32 0.0, %v2506
      %v2508 = vpop.f32.mrb[0].mxu0
      %2509 = vdwg.mxu0
      %v2510 = vadd.f32 %v2281, %v2507
      %v2511 = vtanh.pop %v2510
      %2512 = vmatprep.subr.mxu0 0.0
      %2513 = vmatpush1.msra.mxu0 %v330
      %2514 = vmatprep.subr.mxu0 0.0
      %2515 = vmatpush1.msra.mxu0 %v331
      %2516 = vmatprep.subr.mxu0 0.0
      %2517 = vmatpush1.msra.mxu0 0.0
      %2518 = vmatprep.subr.mxu0 0.0
      %2519 = vmatpush1.msra.mxu0 0.0
      %2520 = vmatprep.subr.mxu0 0.0
      %2521 = vmatpush1.msra.mxu0 0.0
      %2522 = vmatprep.subr.mxu0 0.0
      %2523 = vmatpush1.msra.mxu0 0.0
      %2524 = vmatprep.subr.mxu0 0.0
      %2525 = vmatpush1.msra.mxu0 0.0
      %2526 = vmatprep.subr.mxu0 0.0
      %2527 = vmatpush1.msra.mxu0 0.0
      %2528 = vmatprep.subr.mxu0 0.0
      %2529 = vmatpush1.msra.mxu0 0.0
      %2530 = vmatprep.subr.mxu0 0.0
      %2531 = vmatpush1.msra.mxu0 0.0
      %2532 = vmatprep.subr.mxu0 0.0
      %2533 = vmatpush1.msra.mxu0 0.0
      %2534 = vmatprep.subr.mxu0 0.0
      %2535 = vmatpush1.msra.mxu0 0.0
      %2536 = vmatprep.subr.mxu0 0.0
      %2537 = vmatpush1.msra.mxu0 0.0
      %2538 = vmatprep.subr.mxu0 0.0
      %2539 = vmatpush1.msra.mxu0 0.0
      %2540 = vmatprep.subr.mxu0 0.0
      %2541 = vmatpush1.msra.mxu0 0.0
      %2542 = vmatprep.subr.mxu0 0.0
      %2543 = vmatpush1.msra.mxu0 0.0
      %2544 = vmatprep.subr.mxu0 0.0
      %2545 = vmatpush1.msra.mxu0 0.0
      %2546 = vmatprep.subr.mxu0 0.0
      %2547 = vmatpush1.msra.mxu0 0.0
      %2548 = vmatprep.subr.mxu0 0.0
      %2549 = vmatpush1.msra.mxu0 0.0
      %2550 = vmatprep.subr.mxu0 0.0
      %2551 = vmatpush1.msra.mxu0 0.0
      %2552 = vmatprep.subr.mxu0 0.0
      %2553 = vmatpush1.msra.mxu0 0.0
      %2554 = vmatprep.subr.mxu0 0.0
      %2555 = vmatpush1.msra.mxu0 0.0
      %2556 = vmatprep.subr.mxu0 0.0
      %2557 = vmatpush1.msra.mxu0 0.0
      %2558 = vmatprep.subr.mxu0 0.0
      %2559 = vmatpush1.msra.mxu0 0.0
      %2560 = vmatprep.subr.mxu0 0.0
      %2561 = vmatpush1.msra.mxu0 0.0
      %2562 = vmatprep.subr.mxu0 0.0
      %2563 = vmatpush1.msra.mxu0 0.0
      %2564 = vmatprep.subr.mxu0 0.0
      %2565 = vmatpush1.msra.mxu0 0.0
      %2566 = vmatprep.subr.mxu0 0.0
      %2567 = vmatpush1.msra.mxu0 0.0
      %2568 = vmatprep.subr.mxu0 0.0
      %2569 = vmatpush1.msra.mxu0 0.0
      %2570 = vmatprep.subr.mxu0 0.0
      %2571 = vmatpush1.msra.mxu0 0.0
      %2572 = vmatprep.subr.mxu0 0.0
      %2573 = vmatpush1.msra.mxu0 0.0
      %2574 = vmatprep.subr.mxu0 0.0
      %2575 = vmatpush1.msra.mxu0 0.0
      %2576 = vmatprep.mubr.f32.mxu0 0.0
      %2577 = vmatmul.mubr.f32.gmra.mrb[0].mxu0 %v2284
      %v2578 = vpop.f32.mrb[0].mxu0
      %v2579 = vadd.f32 0.0, %v2578
      %v2580 = vpop.f32.mrb[0].mxu0
      %2581 = vdwg.mxu0
      %v2582 = vadd.f32 %v2282, %v2579
      %v2583 = vxor.u32 %v2582, 2147483648
      %v2584 = vmul.f32 %v2583, 1.442695
      %v2585 = vpow.pop %v2584
      %v2586 = vadd.f32 %v2585, 1.0
      %v2587 = vrcp.pop %v2586
      %v2588 = vmul.f32 1.0, %v2587
      %v2589 = vmul.f32 %v2439, %v2268
      %v2590 = vmul.f32 %v2362, %v2511
      %v2591 = vadd.f32 %v2589, %v2590
      %v2592 = vtanh.pop %v2591
      %v2593 = vmul.f32 %v2588, %v2592
      %s2594 = smul.u32 %s2275, 2
      %s2595 = scalar_lea.vmem %s301, %s2594
      %2596 = vst.msk [vmem:[%s2595] sm:$0x3] %vm656, %v2593
      %s2597 = smul.u32 %s659, 7
      %s2598 = sadd.s32 %s334, %s2597
      %s2599 = smul.u32 %s2598, 4
      %s2600 = smul.u32 %s2599, 2
      %s2601 = scalar_lea.vmem %s280, %s2600
      %v2602 = vld [vmem:[%s2601] sm:$0x3]
      %v2603 = vld [vmem:[%s2601 + $0x2] sm:$0x3]
      %v2604 = vld [vmem:[%s2601 + $0x4] sm:$0x3]
      %v2605 = vld [vmem:[%s2601 + $0x6] sm:$0x3]
      %v2607 = vsel %vm342, %v2593, 0
      %2609 = vmatprep.subr.mxu0 0.0
      %2610 = vmatpush1.msra.mxu0 %v321
      %2611 = vmatprep.subr.mxu0 0.0
      %2612 = vmatpush1.msra.mxu0 %v322
      %2613 = vmatprep.subr.mxu0 0.0
      %2614 = vmatpush1.msra.mxu0 0.0
      %2615 = vmatprep.subr.mxu0 0.0
      %2616 = vmatpush1.msra.mxu0 0.0
      %2617 = vmatprep.subr.mxu0 0.0
      %2618 = vmatpush1.msra.mxu0 0.0
      %2619 = vmatprep.subr.mxu0 0.0
      %2620 = vmatpush1.msra.mxu0 0.0
      %2621 = vmatprep.subr.mxu0 0.0
      %2622 = vmatpush1.msra.mxu0 0.0
      %2623 = vmatprep.subr.mxu0 0.0
      %2624 = vmatpush1.msra.mxu0 0.0
      %2625 = vmatprep.subr.mxu0 0.0
      %2626 = vmatpush1.msra.mxu0 0.0
      %2627 = vmatprep.subr.mxu0 0.0
      %2628 = vmatpush1.msra.mxu0 0.0
      %2629 = vmatprep.subr.mxu0 0.0
      %2630 = vmatpush1.msra.mxu0 0.0
      %2631 = vmatprep.subr.mxu0 0.0
      %2632 = vmatpush1.msra.mxu0 0.0
      %2633 = vmatprep.subr.mxu0 0.0
      %2634 = vmatpush1.msra.mxu0 0.0
      %2635 = vmatprep.subr.mxu0 0.0
      %2636 = vmatpush1.msra.mxu0 0.0
      %2637 = vmatprep.subr.mxu0 0.0
      %2638 = vmatpush1.msra.mxu0 0.0
      %2639 = vmatprep.subr.mxu0 0.0
      %2640 = vmatpush1.msra.mxu0 0.0
      %2641 = vmatprep.subr.mxu0 0.0
      %2642 = vmatpush1.msra.mxu0 0.0
      %2643 = vmatprep.subr.mxu0 0.0
      %2644 = vmatpush1.msra.mxu0 0.0
      %2645 = vmatprep.subr.mxu0 0.0
      %2646 = vmatpush1.msra.mxu0 0.0
      %2647 = vmatprep.subr.mxu0 0.0
      %2648 = vmatpush1.msra.mxu0 0.0
      %2649 = vmatprep.subr.mxu0 0.0
      %2650 = vmatpush1.msra.mxu0 0.0
      %2651 = vmatprep.subr.mxu0 0.0
      %2652 = vmatpush1.msra.mxu0 0.0
      %2653 = vmatprep.subr.mxu0 0.0
      %2654 = vmatpush1.msra.mxu0 0.0
      %2655 = vmatprep.subr.mxu0 0.0
      %2656 = vmatpush1.msra.mxu0 0.0
      %2657 = vmatprep.subr.mxu0 0.0
      %2658 = vmatpush1.msra.mxu0 0.0
      %2659 = vmatprep.subr.mxu0 0.0
      %2660 = vmatpush1.msra.mxu0 0.0
      %2661 = vmatprep.subr.mxu0 0.0
      %2662 = vmatpush1.msra.mxu0 0.0
      %2663 = vmatprep.subr.mxu0 0.0
      %2664 = vmatpush1.msra.mxu0 0.0
      %2665 = vmatprep.subr.mxu0 0.0
      %2666 = vmatpush1.msra.mxu0 0.0
      %2667 = vmatprep.subr.mxu0 0.0
      %2668 = vmatpush1.msra.mxu0 0.0
      %2669 = vmatprep.subr.mxu0 0.0
      %2670 = vmatpush1.msra.mxu0 0.0
      %2671 = vmatprep.subr.mxu0 0.0
      %2672 = vmatpush1.msra.mxu0 0.0
      %2673 = vmatprep.mubr.f32.mxu0 0.0
      %2674 = vmatmul.mubr.f32.gmra.mrb[0].mxu0 %v2607
      %v2675 = vpop.f32.mrb[0].mxu0
      %v2676 = vadd.f32 0.0, %v2675
      %v2677 = vpop.f32.mrb[0].mxu0
      %2678 = vdwg.mxu0
      %v2679 = vadd.f32 %v2602, %v2676
      %v2680 = vxor.u32 %v2679, 2147483648
      %v2681 = vmul.f32 %v2680, 1.442695
      %v2682 = vpow.pop %v2681
      %v2683 = vadd.f32 %v2682, 1.0
      %v2684 = vrcp.pop %v2683
      %v2685 = vmul.f32 1.0, %v2684
      %2686 = vmatprep.subr.mxu0 0.0
      %2687 = vmatpush1.msra.mxu0 %v324
      %2688 = vmatprep.subr.mxu0 0.0
      %2689 = vmatpush1.msra.mxu0 %v325
      %2690 = vmatprep.subr.mxu0 0.0
      %2691 = vmatpush1.msra.mxu0 0.0
      %2692 = vmatprep.subr.mxu0 0.0
      %2693 = vmatpush1.msra.mxu0 0.0
      %2694 = vmatprep.subr.mxu0 0.0
      %2695 = vmatpush1.msra.mxu0 0.0
      %2696 = vmatprep.subr.mxu0 0.0
      %2697 = vmatpush1.msra.mxu0 0.0
      %2698 = vmatprep.subr.mxu0 0.0
      %2699 = vmatpush1.msra.mxu0 0.0
      %2700 = vmatprep.subr.mxu0 0.0
      %2701 = vmatpush1.msra.mxu0 0.0
      %2702 = vmatprep.subr.mxu0 0.0
      %2703 = vmatpush1.msra.mxu0 0.0
      %2704 = vmatprep.subr.mxu0 0.0
      %2705 = vmatpush1.msra.mxu0 0.0
      %2706 = vmatprep.subr.mxu0 0.0
      %2707 = vmatpush1.msra.mxu0 0.0
      %2708 = vmatprep.subr.mxu0 0.0
      %2709 = vmatpush1.msra.mxu0 0.0
      %2710 = vmatprep.subr.mxu0 0.0
      %2711 = vmatpush1.msra.mxu0 0.0
      %2712 = vmatprep.subr.mxu0 0.0
      %2713 = vmatpush1.msra.mxu0 0.0
      %2714 = vmatprep.subr.mxu0 0.0
      %2715 = vmatpush1.msra.mxu0 0.0
      %2716 = vmatprep.subr.mxu0 0.0
      %2717 = vmatpush1.msra.mxu0 0.0
      %2718 = vmatprep.subr.mxu0 0.0
      %2719 = vmatpush1.msra.mxu0 0.0
      %2720 = vmatprep.subr.mxu0 0.0
      %2721 = vmatpush1.msra.mxu0 0.0
      %2722 = vmatprep.subr.mxu0 0.0
      %2723 = vmatpush1.msra.mxu0 0.0
      %2724 = vmatprep.subr.mxu0 0.0
      %2725 = vmatpush1.msra.mxu0 0.0
      %2726 = vmatprep.subr.mxu0 0.0
      %2727 = vmatpush1.msra.mxu0 0.0
      %2728 = vmatprep.subr.mxu0 0.0
      %2729 = vmatpush1.msra.mxu0 0.0
      %2730 = vmatprep.subr.mxu0 0.0
      %2731 = vmatpush1.msra.mxu0 0.0
      %2732 = vmatprep.subr.mxu0 0.0
      %2733 = vmatpush1.msra.mxu0 0.0
      %2734 = vmatprep.subr.mxu0 0.0
      %2735 = vmatpush1.msra.mxu0 0.0
      %2736 = vmatprep.subr.mxu0 0.0
      %2737 = vmatpush1.msra.mxu0 0.0
      %2738 = vmatprep.subr.mxu0 0.0
      %2739 = vmatpush1.msra.mxu0 0.0
      %2740 = vmatprep.subr.mxu0 0.0
      %2741 = vmatpush1.msra.mxu0 0.0
      %2742 = vmatprep.subr.mxu0 0.0
      %2743 = vmatpush1.msra.mxu0 0.0
      %2744 = vmatprep.subr.mxu0 0.0
      %2745 = vmatpush1.msra.mxu0 0.0
      %2746 = vmatprep.subr.mxu0 0.0
      %2747 = vmatpush1.msra.mxu0 0.0
      %2748 = vmatprep.subr.mxu0 0.0
      %2749 = vmatpush1.msra.mxu0 0.0
      %2750 = vmatprep.mubr.f32.mxu0 0.0
      %2751 = vmatmul.mubr.f32.gmra.mrb[0].mxu0 %v2607
      %v2752 = vpop.f32.mrb[0].mxu0
      %v2753 = vadd.f32 0.0, %v2752
      %v2754 = vpop.f32.mrb[0].mxu0
      %2755 = vdwg.mxu0
      %v2756 = vadd.f32 %v2603, %v2753
      %v2757 = vxor.u32 %v2756, 2147483648
      %v2758 = vmul.f32 %v2757, 1.442695
      %v2759 = vpow.pop %v2758
      %v2760 = vadd.f32 %v2759, 1.0
      %v2761 = vrcp.pop %v2760
      %v2762 = vmul.f32 1.0, %v2761
      %2763 = vmatprep.subr.mxu0 0.0
      %2764 = vmatpush1.msra.mxu0 %v327
      %2765 = vmatprep.subr.mxu0 0.0
      %2766 = vmatpush1.msra.mxu0 %v328
      %2767 = vmatprep.subr.mxu0 0.0
      %2768 = vmatpush1.msra.mxu0 0.0
      %2769 = vmatprep.subr.mxu0 0.0
      %2770 = vmatpush1.msra.mxu0 0.0
      %2771 = vmatprep.subr.mxu0 0.0
      %2772 = vmatpush1.msra.mxu0 0.0
      %2773 = vmatprep.subr.mxu0 0.0
      %2774 = vmatpush1.msra.mxu0 0.0
      %2775 = vmatprep.subr.mxu0 0.0
      %2776 = vmatpush1.msra.mxu0 0.0
      %2777 = vmatprep.subr.mxu0 0.0
      %2778 = vmatpush1.msra.mxu0 0.0
      %2779 = vmatprep.subr.mxu0 0.0
      %2780 = vmatpush1.msra.mxu0 0.0
      %2781 = vmatprep.subr.mxu0 0.0
      %2782 = vmatpush1.msra.mxu0 0.0
      %2783 = vmatprep.subr.mxu0 0.0
      %2784 = vmatpush1.msra.mxu0 0.0
      %2785 = vmatprep.subr.mxu0 0.0
      %2786 = vmatpush1.msra.mxu0 0.0
      %2787 = vmatprep.subr.mxu0 0.0
      %2788 = vmatpush1.msra.mxu0 0.0
      %2789 = vmatprep.subr.mxu0 0.0
      %2790 = vmatpush1.msra.mxu0 0.0
      %2791 = vmatprep.subr.mxu0 0.0
      %2792 = vmatpush1.msra.mxu0 0.0
      %2793 = vmatprep.subr.mxu0 0.0
      %2794 = vmatpush1.msra.mxu0 0.0
      %2795 = vmatprep.subr.mxu0 0.0
      %2796 = vmatpush1.msra.mxu0 0.0
      %2797 = vmatprep.subr.mxu0 0.0
      %2798 = vmatpush1.msra.mxu0 0.0
      %2799 = vmatprep.subr.mxu0 0.0
      %2800 = vmatpush1.msra.mxu0 0.0
      %2801 = vmatprep.subr.mxu0 0.0
      %2802 = vmatpush1.msra.mxu0 0.0
      %2803 = vmatprep.subr.mxu0 0.0
      %2804 = vmatpush1.msra.mxu0 0.0
      %2805 = vmatprep.subr.mxu0 0.0
      %2806 = vmatpush1.msra.mxu0 0.0
      %2807 = vmatprep.subr.mxu0 0.0
      %2808 = vmatpush1.msra.mxu0 0.0
      %2809 = vmatprep.subr.mxu0 0.0
      %2810 = vmatpush1.msra.mxu0 0.0
      %2811 = vmatprep.subr.mxu0 0.0
      %2812 = vmatpush1.msra.mxu0 0.0
      %2813 = vmatprep.subr.mxu0 0.0
      %2814 = vmatpush1.msra.mxu0 0.0
      %2815 = vmatprep.subr.mxu0 0.0
      %2816 = vmatpush1.msra.mxu0 0.0
      %2817 = vmatprep.subr.mxu0 0.0
      %2818 = vmatpush1.msra.mxu0 0.0
      %2819 = vmatprep.subr.mxu0 0.0
      %2820 = vmatpush1.msra.mxu0 0.0
      %2821 = vmatprep.subr.mxu0 0.0
      %2822 = vmatpush1.msra.mxu0 0.0
      %2823 = vmatprep.subr.mxu0 0.0
      %2824 = vmatpush1.msra.mxu0 0.0
      %2825 = vmatprep.subr.mxu0 0.0
      %2826 = vmatpush1.msra.mxu0 0.0
      %2827 = vmatprep.mubr.f32.mxu0 0.0
      %2828 = vmatmul.mubr.f32.gmra.mrb[0].mxu0 %v2607
      %v2829 = vpop.f32.mrb[0].mxu0
      %v2830 = vadd.f32 0.0, %v2829
      %v2831 = vpop.f32.mrb[0].mxu0
      %2832 = vdwg.mxu0
      %v2833 = vadd.f32 %v2604, %v2830
      %v2834 = vtanh.pop %v2833
      %2835 = vmatprep.subr.mxu0 0.0
      %2836 = vmatpush1.msra.mxu0 %v330
      %2837 = vmatprep.subr.mxu0 0.0
      %2838 = vmatpush1.msra.mxu0 %v331
      %2839 = vmatprep.subr.mxu0 0.0
      %2840 = vmatpush1.msra.mxu0 0.0
      %2841 = vmatprep.subr.mxu0 0.0
      %2842 = vmatpush1.msra.mxu0 0.0
      %2843 = vmatprep.subr.mxu0 0.0
      %2844 = vmatpush1.msra.mxu0 0.0
      %2845 = vmatprep.subr.mxu0 0.0
      %2846 = vmatpush1.msra.mxu0 0.0
      %2847 = vmatprep.subr.mxu0 0.0
      %2848 = vmatpush1.msra.mxu0 0.0
      %2849 = vmatprep.subr.mxu0 0.0
      %2850 = vmatpush1.msra.mxu0 0.0
      %2851 = vmatprep.subr.mxu0 0.0
      %2852 = vmatpush1.msra.mxu0 0.0
      %2853 = vmatprep.subr.mxu0 0.0
      %2854 = vmatpush1.msra.mxu0 0.0
      %2855 = vmatprep.subr.mxu0 0.0
      %2856 = vmatpush1.msra.mxu0 0.0
      %2857 = vmatprep.subr.mxu0 0.0
      %2858 = vmatpush1.msra.mxu0 0.0
      %2859 = vmatprep.subr.mxu0 0.0
      %2860 = vmatpush1.msra.mxu0 0.0
      %2861 = vmatprep.subr.mxu0 0.0
      %2862 = vmatpush1.msra.mxu0 0.0
      %2863 = vmatprep.subr.mxu0 0.0
      %2864 = vmatpush1.msra.mxu0 0.0
      %2865 = vmatprep.subr.mxu0 0.0
      %2866 = vmatpush1.msra.mxu0 0.0
      %2867 = vmatprep.subr.mxu0 0.0
      %2868 = vmatpush1.msra.mxu0 0.0
      %2869 = vmatprep.subr.mxu0 0.0
      %2870 = vmatpush1.msra.mxu0 0.0
      %2871 = vmatprep.subr.mxu0 0.0
      %2872 = vmatpush1.msra.mxu0 0.0
      %2873 = vmatprep.subr.mxu0 0.0
      %2874 = vmatpush1.msra.mxu0 0.0
      %2875 = vmatprep.subr.mxu0 0.0
      %2876 = vmatpush1.msra.mxu0 0.0
      %2877 = vmatprep.subr.mxu0 0.0
      %2878 = vmatpush1.msra.mxu0 0.0
      %2879 = vmatprep.subr.mxu0 0.0
      %2880 = vmatpush1.msra.mxu0 0.0
      %2881 = vmatprep.subr.mxu0 0.0
      %2882 = vmatpush1.msra.mxu0 0.0
      %2883 = vmatprep.subr.mxu0 0.0
      %2884 = vmatpush1.msra.mxu0 0.0
      %2885 = vmatprep.subr.mxu0 0.0
      %2886 = vmatpush1.msra.mxu0 0.0
      %2887 = vmatprep.subr.mxu0 0.0
      %2888 = vmatpush1.msra.mxu0 0.0
      %2889 = vmatprep.subr.mxu0 0.0
      %2890 = vmatpush1.msra.mxu0 0.0
      %2891 = vmatprep.subr.mxu0 0.0
      %2892 = vmatpush1.msra.mxu0 0.0
      %2893 = vmatprep.subr.mxu0 0.0
      %2894 = vmatpush1.msra.mxu0 0.0
      %2895 = vmatprep.subr.mxu0 0.0
      %2896 = vmatpush1.msra.mxu0 0.0
      %2897 = vmatprep.subr.mxu0 0.0
      %2898 = vmatpush1.msra.mxu0 0.0
      %2899 = vmatprep.mubr.f32.mxu0 0.0
      %2900 = vmatmul.mubr.f32.gmra.mrb[0].mxu0 %v2607
      %v2901 = vpop.f32.mrb[0].mxu0
      %v2902 = vadd.f32 0.0, %v2901
      %v2903 = vpop.f32.mrb[0].mxu0
      %2904 = vdwg.mxu0
      %v2905 = vadd.f32 %v2605, %v2902
      %v2906 = vxor.u32 %v2905, 2147483648
      %v2907 = vmul.f32 %v2906, 1.442695
      %v2908 = vpow.pop %v2907
      %v2909 = vadd.f32 %v2908, 1.0
      %v2910 = vrcp.pop %v2909
      %v2911 = vmul.f32 1.0, %v2910
      %v2912 = vmul.f32 %v2762, %v2591
      %v2913 = vmul.f32 %v2685, %v2834
      %v2914 = vadd.f32 %v2912, %v2913
      %v2915 = vtanh.pop %v2914
      %v2916 = vmul.f32 %v2911, %v2915
      %s2917 = smul.u32 %s2598, 2
      %s2918 = scalar_lea.vmem %s301, %s2917
      %2919 = vst.msk [vmem:[%s2918] sm:$0x3] %vm656, %v2916
      %2920 = vst.msk [vmem:[#allocation2] sm:$0x3] %vm656, %v2916
      %2921 = vst.msk [vmem:[#allocation3] sm:$0x3] %vm656, %v2914
      // Predicated region
      $region33: #{encoder_forward.4} parent=27 // pred_check
        %p2922 = pneg %p314
      $region34: #{encoder_forward.4} parent=27 // pred_check_branch
        %2924 = sbr.rel (%p2922) target = $region36
      $region35: #{encoder_forward.4} parent=27 // pred_region
        %2925 = vst.msk [vmem:[%s309] sm:$0x3] %vm656, %v2916
        %2926 = vst.msk [vmem:[%s313] sm:$0x3] %vm656, %v2914
      $region36: #{encoder_forward.4} parent=27 // pred_fallthru
        _
      %s2927 = smul.u32 %s20, 2
      %s2928 = ssub.s32 1, %s2927
      %s2929 = smul.u32 %s2928, %s21
      %s2930 = smul.u32 8, %s2929
      %p2931 = scmp.lt.s32.totalorder %s20, 1
      %s2932 = scalar_select %p2931, %s20, 1
      %p2933 = scmp.lt.s32.totalorder %s2930, 7
      %s2934 = scalar_select %p2933, %s2930, 7
      %s2935 = smul.addr %s2932, 8
      %s2936 = sadd.s32 %s2934, %s2935
      %s2937 = smul.addr %s2936, 2
      %s2938 = scalar_lea.vmem %s2, %s2937
      %p2939 = scmp.lt.s32.totalorder %s20, 1
      %s2940 = scalar_select %p2939, %s20, 1
      %s2941 = smul.addr %s2940, 2
      %s2942 = scalar_lea.vmem %s3, %s2941
      %p2943 = scmp.lt.s32.totalorder %s20, 1
      %s2944 = scalar_select %p2943, %s20, 1
      %s2945 = smul.addr %s2944, 2
      %s2946 = scalar_lea.vmem %s4, %s2945
      // Predicated region
      $region37: #{encoder_forward.4} parent=27 // pred_check
        %p2947 = pneg %p114
      $region38: #{encoder_forward.4} parent=27 // pred_check_branch
        %2949 = sbr.rel (%p2947) target = $region40
      $region39: #{encoder_forward.4} parent=27 // pred_region
        %s2950 = smul.u32 %s20, 2
        %s2951 = ssub.s32 1, %s2950
        %s2952 = smul.u32 %s2951, %s21
        %s2953 = smul.u32 8, %s2952
      $region40: #{encoder_forward.4} parent=27 // pred_fallthru
        _
      // Predicated region
      $region41: #{encoder_forward.4} parent=27 // pred_check
        %p2954 = pneg %p140
      $region42: #{encoder_forward.4} parent=27 // pred_check_branch
        %2956 = sbr.rel (%p2954) target = $region44
      $region43: #{encoder_forward.4} parent=27 // pred_region
        _
      $region44: #{encoder_forward.4} parent=27 // pred_fallthru
        _
      // Predicated region
      $region45: #{encoder_forward.4} parent=27 // pred_check
        %p2957 = pneg %p166
      $region46: #{encoder_forward.4} parent=27 // pred_check_branch
        %2959 = sbr.rel (%p2957) target = $region48
      $region47: #{encoder_forward.4} parent=27 // pred_region
        _
      $region48: #{encoder_forward.4} parent=27 // pred_fallthru
        _
    $region28: #{encoder_forward.4} parent=5 // pred_fallthru
      _
    %p2960 = scmp.le.s32.totalorder 2, %s11
    // Predicated region
    $region49: #{encoder_forward.4} parent=5 // pred_check
      %p2961 = pneg %p2960
    $region50: #{encoder_forward.4} parent=5 // pred_check_branch
      %2963 = sbr.rel (%p2961) target = $region52
    $region51: #{encoder_forward.4} parent=5 // pred_region
      %s2964 = ssub.s32 %s11, 2
      // Predicated region
      $region53: #{encoder_forward.4} parent=51 // pred_check
        %p2965 = pneg %p120
      $region54: #{encoder_forward.4} parent=51 // pred_check_branch
        %2967 = sbr.rel (%p2965) target = $region56
      $region55: #{encoder_forward.4} parent=51 // pred_region
        %s2968 = smul.u32 %s22, 2
        %s2969 = ssub.s32 1, %s2968
        %s2970 = smul.u32 %s2969, %s23
        %s2971 = smul.u32 8, %s2970
        %p2972 = scmp.lt.s32.totalorder %s22, 1
        %s2973 = scalar_select %p2972, %s22, 1
        %p2974 = scmp.lt.s32.totalorder %s2971, 7
        %s2975 = scalar_select %p2974, %s2971, 7
        %s2976 = smul.addr %s2973, 8
        %s2977 = sadd.s32 %s2975, %s2976
        %s2978 = smul.addr %s2977, 2
        %s2979 = scalar_lea.vmem %s2, %s2978
      $region56: #{encoder_forward.4} parent=51 // pred_fallthru
        _
      // Predicated region
      $region57: #{encoder_forward.4} parent=51 // pred_check
        %p2980 = pneg %p146
      $region58: #{encoder_forward.4} parent=51 // pred_check_branch
        %2982 = sbr.rel (%p2980) target = $region60
      $region59: #{encoder_forward.4} parent=51 // pred_region
        %p2983 = scmp.lt.s32.totalorder %s22, 1
        %s2984 = scalar_select %p2983, %s22, 1
        %s2985 = smul.addr %s2984, 2
        %s2986 = scalar_lea.vmem %s3, %s2985
      $region60: #{encoder_forward.4} parent=51 // pred_fallthru
        _
      // Predicated region
      $region61: #{encoder_forward.4} parent=51 // pred_check
        %p2987 = pneg %p172
      $region62: #{encoder_forward.4} parent=51 // pred_check_branch
        %2989 = sbr.rel (%p2987) target = $region64
      $region63: #{encoder_forward.4} parent=51 // pred_region
        %p2990 = scmp.lt.s32.totalorder %s22, 1
        %s2991 = scalar_select %p2990, %s22, 1
        %s2992 = smul.addr %s2991, 2
        %s2993 = scalar_lea.vmem %s4, %s2992
      $region64: #{encoder_forward.4} parent=51 // pred_fallthru
        _
    $region52: #{encoder_forward.4} parent=5 // pred_fallthru
      _
  $region6: #{encoder_forward.4} parent=0 // loop_footer
    %s15 = sadd.s32 1, %s11
  $region7: #{encoder_forward.4} parent=0 // loop_footer_branch
    %10 = sbr.rel target = $region3
  $region8: #{encoder_forward.4} parent=0 // loop_exit
    _

</llo_original>
